<compile_context>
chip_gen: v7x
topology: tpu7x:2x2x1
jax: 0.10.0
libtpu: 0.0.40
codegen_flags: <defaults>
</compile_context>

<pallas_src>
import jax
import jax.numpy as jnp
from jax.experimental import pallas as pl
from jax.experimental.pallas import tpu as pltpu


def _deep_attention_kernel(inp_ref, ctx_ref, w_in_ref, w_v_ref, w_out_ref,
                           h_ref, wc_ref, attn_ref,
                           uw_sc, m_sc, l_sc, acc_sc):
    j = pl.program_id(1)                     # context (source-length) tile index
    last_j = pl.num_programs(1) - 1
    cdt = ctx_ref.dtype                      # compute dtype (pre-cast in wrapper)
    tb, tile_s, d = ctx_ref.shape

    @pl.when(j == 0)
    def _init():
        # u = ReLU(W_in x) for this batch tile; fold the linear_v row into it
        # once so each logit is a single MXU contraction later.
        u = jnp.maximum(
            jnp.dot(inp_ref[...], w_in_ref[...],
                    preferred_element_type=jnp.float32), 0.0)          # (TB, D) f32
        uw_sc[...] = (u * w_v_ref[...].astype(jnp.float32)).astype(uw_sc.dtype)
        m_sc[...] = jnp.full(m_sc.shape, -jnp.inf, jnp.float32)
        l_sc[...] = jnp.zeros(l_sc.shape, jnp.float32)
        acc_sc[...] = jnp.zeros(acc_sc.shape, jnp.float32)

    ctx_t = ctx_ref[...]                                               # (TB, TS, D)

    # v = ReLU(W_in y): one MXU matmul with TB*TS rows (lane-aligned D).
    v = jnp.maximum(
        jnp.dot(ctx_t.reshape(tb * tile_s, d), w_in_ref[...],
                preferred_element_type=jnp.float32), 0.0)
    v = v.reshape(tb, tile_s, d).astype(cdt)

    # logits = V . (u o v): batched (q=1) MXU contraction over D — keeps the
    # D-length reduce off the XLU and avoids a (TB, TS, D) f32 temporary.
    logits_t = jnp.einsum('bqd,bsd->bqs', uw_sc[...][:, None, :], v,
                          preferred_element_type=jnp.float32)[:, 0, :]  # (TB, TS)

    # Stash raw logits directly in the VMEM-resident attn output block
    # (its block index is (i, 0) across j); finalized in place on the last step.
    attn_ref[:, pl.ds(pl.multiple_of(j * tile_s, tile_s), tile_s)] = logits_t

    # Online (flash-style) softmax statistics + weighted-context accumulation,
    # so ctx streams through VMEM exactly once.
    m_prev = m_sc[...]
    m_new = jnp.maximum(m_prev, jnp.max(logits_t, axis=-1, keepdims=True))
    alpha = jnp.exp(m_prev - m_new)                                    # (TB, 1)
    p = jnp.exp(logits_t - m_new)                                      # (TB, TS)
    l_sc[...] = alpha * l_sc[...] + jnp.sum(p, axis=-1, keepdims=True)
    pc = jnp.einsum('bqs,bsd->bqd', p[:, None, :].astype(cdt), ctx_t,
                    preferred_element_type=jnp.float32)[:, 0, :]       # (TB, D)
    acc_sc[...] = alpha * acc_sc[...] + pc
    m_sc[...] = m_new

    @pl.when(j == last_j)
    def _finalize():
        # Exact divide (runs once per batch tile): attn rows sum to 1.
        inv_l = 1.0 / l_sc[...]
        attn = jnp.exp(attn_ref[...] - m_sc[...]) * inv_l              # (TB, S)
        attn_ref[...] = attn.astype(attn_ref.dtype)

        wc = acc_sc[...] * inv_l                                       # (TB, D)
        wc_ref[...] = wc.astype(wc_ref.dtype)

        # h = tanh([wc, x] @ W_out^T): single K = 2D MXU matmul.
        cat = jnp.concatenate([wc.astype(cdt), inp_ref[...]], axis=1)  # (TB, 2D)
        h = jnp.dot(cat, w_out_ref[...], preferred_element_type=jnp.float32)
        h_ref[...] = jnp.tanh(h).astype(h_ref.dtype)


def _pick_block(total, cap, quantum):
    """Largest divisor of `total` <= cap that is a multiple of `quantum`
    (falling back to coarser alignment, then any divisor)."""
    cap = max(1, min(cap, total))
    for q in (quantum, 8, 1):
        for t in range(cap, 0, -1):
            if total % t == 0 and (t % q == 0 or t == total):
                return t
    return total


def deep_attention(inp, ctx, w_in_t, w_v_row, w_out_t, *,
                   block_b=None, block_s=None, compute_dtype=jnp.bfloat16):
    """inp: (B, D), ctx: (B, S, D); weights pre-transposed (y = x @ W)."""
    B, S, D = ctx.shape
    assert inp.shape == (B, D)
    assert w_in_t.shape == (D, D) and w_v_row.shape == (1, D)
    assert w_out_t.shape == (2 * D, D)

    cdt = jnp.dtype(compute_dtype)
    itemsize = cdt.itemsize

    # Pre-cast the streamed / MXU operands in HBM (halves the ctx DMA at bf16
    # and removes per-step VPU casts inside the kernel).
    inp_c = inp.astype(cdt)
    ctx_c = ctx.astype(cdt)
    w_in_c = w_in_t.astype(cdt)
    w_out_c = w_out_t.astype(cdt)
    w_v_f32 = w_v_row.astype(jnp.float32)

    # Batch tile: up to 64 rows, but keep >= 2 batch tiles when B allows so the
    # "parallel" axis can feed both v7x TensorCores.
    if block_b is None:
        cap_b = B if B <= 8 else min(64, B // 2)
        tb = _pick_block(B, cap_b, 8)
    else:
        tb = block_b

    # Context tile: target ~4 MiB per (tb, ts, D) ctx tile, ts a multiple of 128
    # (lane-aligned logits stores), sized against the scoped-VMEM budget below.
    if block_s is None:
        tile_budget = 4 << 20
        max_ts = max(1, tile_budget // max(1, tb * D * itemsize))
        ts = _pick_block(S, max_ts, 128)
    else:
        ts = block_s

    assert B % tb == 0 and S % ts == 0
    nb, ns = B // tb, S // ts

    # Scoped-VMEM request: double-buffered ctx stream + f32 projection temps +
    # resident weights + in/out blocks + scratch (+ slack). Clamped so it stays
    # inside v7x's 64 MiB physical VMEM; well under v5e/v6e's 128 MiB.
    vmem_need = (
        2 * tb * ts * D * itemsize          # ctx (double-buffered)
        + 2 * tb * ts * D * 4               # f32 v / p temporaries
        + (3 * D * D) * itemsize + D * 4    # W_in + W_out + w_v (resident)
        + 2 * tb * D * itemsize             # input block
        + 2 * (2 * tb * D + tb * S) * 4     # h, wc, attn output blocks
        + (2 * tb * D + 4 * tb) * 4         # scratch
        + (4 << 20)                         # slack
    )
    vmem_limit = int(min(max(vmem_need, 32 << 20), 48 << 20))

    cost = pl.CostEstimate(
        flops=int(2 * B * S * D * D + 2 * B * D * D + 2 * B * (2 * D) * D
                  + 4 * B * S * D),
        transcendentals=int(2 * B * S + B * D),
        bytes_accessed=int((B * S * D + B * D + 3 * D * D + D) * itemsize
                           + (B * S + 2 * B * D) * 4),
    )

    grid_spec = pltpu.PrefetchScalarGridSpec(
        num_scalar_prefetch=0,
        grid=(nb, ns),
        in_specs=[
            pl.BlockSpec((tb, D), lambda i, j: (i, 0)),         # input (per batch tile)
            pl.BlockSpec((tb, ts, D), lambda i, j: (i, j, 0)),  # context (streamed)
            pl.BlockSpec((D, D), lambda i, j: (0, 0)),          # W_in^T   (resident)
            pl.BlockSpec((1, D), lambda i, j: (0, 0)),          # w_v row  (resident)
            pl.BlockSpec((2 * D, D), lambda i, j: (0, 0)),      # W_out^T  (resident)
        ],
        out_specs=(
            pl.BlockSpec((tb, D), lambda i, j: (i, 0)),         # h_tilde
            pl.BlockSpec((tb, D), lambda i, j: (i, 0)),         # weighted_context
            pl.BlockSpec((tb, S), lambda i, j: (i, 0)),         # attn (lane-dense, resident over j)
        ),
        scratch_shapes=[
            pltpu.VMEM((tb, D), cdt),           # uw = ReLU(W_in x) * w_v
            pltpu.VMEM((tb, 1), jnp.float32),   # running max m
            pltpu.VMEM((tb, 1), jnp.float32),   # running sum l
            pltpu.VMEM((tb, D), jnp.float32),   # weighted-context accumulator
        ],
    )

    return pl.pallas_call(
        _deep_attention_kernel,
        grid_spec=grid_spec,
        out_shape=(
            jax.ShapeDtypeStruct((B, D), jnp.float32),   # h_tilde
            jax.ShapeDtypeStruct((B, D), jnp.float32),   # weighted_context
            jax.ShapeDtypeStruct((B, S), jnp.float32),   # attn
        ),
        compiler_params=pltpu.CompilerParams(
            dimension_semantics=("parallel", "arbitrary"),
            vmem_limit_bytes=vmem_limit),
        cost_estimate=cost,
    )(inp_c, ctx_c, w_in_c, w_v_f32, w_out_c)


def deep_attention_ref(inp, ctx, w_in_t, w_v_row, w_out_t):
    """Pure-JAX reference mirroring the PyTorch forward (mask=None path)."""
    B, S, D = ctx.shape
    u = jax.nn.relu(inp @ w_in_t)                                    # (B, D)
    v = jax.nn.relu(ctx.reshape(B * S, D) @ w_in_t).reshape(B, S, D)
    logits = jnp.einsum('bsd,d->bs', u[:, None, :] * v, w_v_row[0])
    attn = jax.nn.softmax(logits, axis=1)
    wc = jnp.einsum('bs,bsd->bd', attn, ctx)
    h = jnp.tanh(jnp.concatenate([wc, inp], axis=1) @ w_out_t)
    return h, wc, attn


def _make_inputs(B, S, D, key):
    k_inp, k_ctx, k_win, k_wv, k_wout = jax.random.split(key, 5)
    inp = jax.random.normal(k_inp, (B, D), jnp.float32)
    ctx = jax.random.normal(k_ctx, (B, S, D), jnp.float32)
    # PyTorch Linear weights are (out, in); store transposes so y = x @ W.
    b_in = 1.0 / (D ** 0.5)
    b_out = 1.0 / ((2 * D) ** 0.5)
    w_in_t = jax.random.uniform(k_win, (D, D), jnp.float32, -b_in, b_in)
    w_v_row = jax.random.uniform(k_wv, (1, D), jnp.float32, -b_in, b_in)
    w_out_t = jax.random.uniform(k_wout, (2 * D, D), jnp.float32, -b_out, b_out)
    return inp, ctx, w_in_t, w_v_row, w_out_t


if __name__ == "__main__":
    key = jax.random.PRNGKey(0)
    k1, k2 = jax.random.split(key)

    # Case 1: f32 parity on a multi-tile grid: 2 batch tiles ("parallel") and
    # 2 streamed context tiles (online-softmax accumulator + in-place attn finalize).
    args = _make_inputs(16, 256, 128, k1)
    out = jax.block_until_ready(
        deep_attention(*args, block_s=128, compute_dtype=jnp.float32))
    ref = deep_attention_ref(*args)
    for got, want in zip(out, ref):
        assert jnp.allclose(got, want, atol=5e-4, rtol=5e-4)
    assert jnp.allclose(jnp.sum(out[2], axis=1), 1.0, atol=1e-3)

    # Case 2: the module's "natural" tiny shapes (full-array blocks, 1x1 grid).
    args2 = _make_inputs(2, 8, 32, k2)
    out2 = jax.block_until_ready(
        deep_attention(*args2, compute_dtype=jnp.float32))
    ref2 = deep_attention_ref(*args2)
    for got, want in zip(out2, ref2):
        assert jnp.allclose(got, want, atol=5e-4, rtol=5e-4)

    # Case 3: default bf16 compute (ctx/weights pre-cast in HBM) — looser parity.
    out3 = jax.block_until_ready(deep_attention(*args))
    for got, want in zip(out3, ref):
        assert jnp.allclose(got, want, atol=5e-2, rtol=5e-2)
    assert jnp.allclose(jnp.sum(out3[2], axis=1), 1.0, atol=1e-3)

    print("KERNEL_OK")
</pallas_src>

<mosaic_0001>
module attributes {stable_mosaic.version = 11 : i64} {
  func.func @_deep_attention_kernel(%arg0: i32, %arg1: i32, %arg2: memref<8x128xf32, #tpu.memory_space<vmem>>, %arg3: memref<8x128x128xf32, #tpu.memory_space<vmem>>, %arg4: memref<128x128xf32, #tpu.memory_space<vmem>>, %arg5: memref<1x128xf32, #tpu.memory_space<vmem>>, %arg6: memref<256x128xf32, #tpu.memory_space<vmem>>, %arg7: memref<8x128xf32, #tpu.memory_space<vmem>>, %arg8: memref<8x128xf32, #tpu.memory_space<vmem>>, %arg9: memref<8x256xf32, #tpu.memory_space<vmem>>, %arg10: memref<8x128xf32, #tpu.memory_space<vmem>>, %arg11: memref<8x1xf32, #tpu.memory_space<vmem>>, %arg12: memref<8x1xf32, #tpu.memory_space<vmem>>, %arg13: memref<8x128xf32, #tpu.memory_space<vmem>>) attributes {dimension_semantics = [#tpu.dimension_semantics<parallel>, #tpu.dimension_semantics<arbitrary>], iteration_bounds = array<i64: 2, 2>, scalar_prefetch = 0 : i64, scratch_operands = 4 : i64, tpu.core_type = #tpu.core_type<tc>, window_params = [{transform_indices = @transform_0, window_bounds = array<i64: 8, 128>}, {transform_indices = @transform_1, window_bounds = array<i64: 8, 128, 128>}, {pipeline_mode = #tpu.pipeline_mode<synchronous>, transform_indices = @transform_2, window_bounds = array<i64: 128, 128>}, {pipeline_mode = #tpu.pipeline_mode<synchronous>, transform_indices = @transform_3, window_bounds = array<i64: 1, 128>}, {pipeline_mode = #tpu.pipeline_mode<synchronous>, transform_indices = @transform_4, window_bounds = array<i64: 256, 128>}, {transform_indices = @transform_5, window_bounds = array<i64: 8, 128>}, {transform_indices = @transform_6, window_bounds = array<i64: 8, 128>}, {transform_indices = @transform_7, window_bounds = array<i64: 8, 256>}]} {
    %c0_i32 = arith.constant 0 : i32
    %0 = arith.cmpi eq, %arg1, %c0_i32 : i32
    %1 = arith.extui %0 : i1 to i32
    %c0_i32_0 = arith.constant 0 : i32
    %2 = arith.cmpi ne, %1, %c0_i32_0 : i32
    scf.if %2 {
      %c0_26 = arith.constant 0 : index
      %c0_27 = arith.constant 0 : index
      %45 = vector.load %arg2[%c0_26, %c0_27] : memref<8x128xf32, #tpu.memory_space<vmem>>, vector<8x128xf32>
      %c0_28 = arith.constant 0 : index
      %c0_29 = arith.constant 0 : index
      %46 = vector.load %arg4[%c0_28, %c0_29] : memref<128x128xf32, #tpu.memory_space<vmem>>, vector<128x128xf32>
      %cst_30 = arith.constant dense<0.000000e+00> : vector<8x128xf32>
      %47 = tpu.matmul %45, %46, %cst_30 {dimension_numbers = #tpu.dot_dimension_numbers<[1], [0], [0], [1], [0, 0, 1, 1], [], []>} : vector<8x128xf32>, vector<128x128xf32>, vector<8x128xf32> -> vector<8x128xf32>
      %cst_31 = arith.constant 0.000000e+00 : f32
      %48 = vector.broadcast %cst_31 : f32 to vector<8x128xf32>
      %49 = arith.maximumf %47, %48 : vector<8x128xf32>
      %c0_32 = arith.constant 0 : index
      %c0_33 = arith.constant 0 : index
      %50 = vector.load %arg5[%c0_32, %c0_33] : memref<1x128xf32, #tpu.memory_space<vmem>>, vector<1x128xf32>
      %51 = vector.broadcast %50 : vector<1x128xf32> to vector<8x128xf32>
      %52 = arith.mulf %49, %51 : vector<8x128xf32>
      %c0_34 = arith.constant 0 : index
      %c0_35 = arith.constant 0 : index
      %53 = vector.load %arg10[%c0_34, %c0_35] : memref<8x128xf32, #tpu.memory_space<vmem>>, vector<8x128xf32>
      tpu.vector_store %arg10[%c0_34, %c0_35], %52 {strides = array<i32>} : memref<8x128xf32, #tpu.memory_space<vmem>>, vector<8x128xf32>,
      %cst_36 = arith.constant 0xFF800000 : f32
      %54 = vector.broadcast %cst_36 : f32 to vector<8x1xf32>
      %c0_37 = arith.constant 0 : index
      %c0_38 = arith.constant 0 : index
      %55 = vector.load %arg11[%c0_37, %c0_38] : memref<8x1xf32, #tpu.memory_space<vmem>>, vector<8x1xf32>
      tpu.vector_store %arg11[%c0_37, %c0_38], %54 {strides = array<i32>} : memref<8x1xf32, #tpu.memory_space<vmem>>, vector<8x1xf32>,
      %cst_39 = arith.constant 0.000000e+00 : f32
      %56 = vector.broadcast %cst_39 : f32 to vector<8x1xf32>
      %c0_40 = arith.constant 0 : index
      %c0_41 = arith.constant 0 : index
      %57 = vector.load %arg12[%c0_40, %c0_41] : memref<8x1xf32, #tpu.memory_space<vmem>>, vector<8x1xf32>
      tpu.vector_store %arg12[%c0_40, %c0_41], %56 {strides = array<i32>} : memref<8x1xf32, #tpu.memory_space<vmem>>, vector<8x1xf32>,
      %cst_42 = arith.constant 0.000000e+00 : f32
      %58 = vector.broadcast %cst_42 : f32 to vector<8x128xf32>
      %c0_43 = arith.constant 0 : index
      %c0_44 = arith.constant 0 : index
      %59 = vector.load %arg13[%c0_43, %c0_44] : memref<8x128xf32, #tpu.memory_space<vmem>>, vector<8x128xf32>
      tpu.vector_store %arg13[%c0_43, %c0_44], %58 {strides = array<i32>} : memref<8x128xf32, #tpu.memory_space<vmem>>, vector<8x128xf32>,
    } else {
    }
    %c0 = arith.constant 0 : index
    %c0_1 = arith.constant 0 : index
    %c0_2 = arith.constant 0 : index
    %3 = vector.load %arg3[%c0, %c0_1, %c0_2] : memref<8x128x128xf32, #tpu.memory_space<vmem>>, vector<8x128x128xf32>
    %4 = vector.shape_cast %3 : vector<8x128x128xf32> to vector<1024x128xf32>
    %c0_3 = arith.constant 0 : index
    %c0_4 = arith.constant 0 : index
    %5 = vector.load %arg4[%c0_3, %c0_4] : memref<128x128xf32, #tpu.memory_space<vmem>>, vector<128x128xf32>
    %cst = arith.constant dense<0.000000e+00> : vector<1024x128xf32>
    %6 = tpu.matmul %4, %5, %cst {dimension_numbers = #tpu.dot_dimension_numbers<[1], [0], [0], [1], [0, 0, 1, 1], [], []>} : vector<1024x128xf32>, vector<128x128xf32>, vector<1024x128xf32> -> vector<1024x128xf32>
    %cst_5 = arith.constant 0.000000e+00 : f32
    %7 = vector.broadcast %cst_5 : f32 to vector<1024x128xf32>
    %8 = arith.maximumf %6, %7 : vector<1024x128xf32>
    %9 = vector.shape_cast %8 : vector<1024x128xf32> to vector<8x128x128xf32>
    %c0_6 = arith.constant 0 : index
    %c0_7 = arith.constant 0 : index
    %10 = vector.load %arg10[%c0_6, %c0_7] : memref<8x128xf32, #tpu.memory_space<vmem>>, vector<8x128xf32>
    %11 = vector.shape_cast %10 : vector<8x128xf32> to vector<8x1x128xf32>
    "tpu.trace_start"() <{level = 10 : i32, message = "bqd,bsd->bqs"}> : () -> ()
    %cst_8 = arith.constant dense<0.000000e+00> : vector<8x1x128xf32>
    %12 = tpu.matmul %11, %9, %cst_8 {dimension_numbers = #tpu.dot_dimension_numbers<[2], [2], [1], [1], [0, 0, 0, 1, 1, 1], [0], [0]>} : vector<8x1x128xf32>, vector<8x128x128xf32>, vector<8x1x128xf32> -> vector<8x1x128xf32>
    "tpu.trace_stop"() : () -> ()
    %13 = vector.shape_cast %12 : vector<8x1x128xf32> to vector<8x128xf32>
    %c128_i32 = arith.constant 128 : i32
    %14 = arith.muli %arg1, %c128_i32 : i32
    %15 = tpu.assume_multiple %14, 128 : i32
    %c0_9 = arith.constant 0 : index
    %16 = arith.index_cast %15 : i32 to index
    %17 = vector.load %arg9[%c0_9, %16] : memref<8x256xf32, #tpu.memory_space<vmem>>, vector<8x128xf32>
    tpu.vector_store %arg9[%c0_9, %16], %13 {strides = array<i32>} : memref<8x256xf32, #tpu.memory_space<vmem>>, vector<8x128xf32>,
    %c0_10 = arith.constant 0 : index
    %c0_11 = arith.constant 0 : index
    %18 = vector.load %arg11[%c0_10, %c0_11] : memref<8x1xf32, #tpu.memory_space<vmem>>, vector<8x1xf32>
    %cst_12 = arith.constant dense<0xFF800000> : vector<8xf32>
    %19 = vector.multi_reduction <maximumf>, %13, %cst_12 [1] : vector<8x128xf32> to vector<8xf32>
    %20 = vector.shape_cast %19 : vector<8xf32> to vector<8x1xf32>
    %21 = arith.maximumf %18, %20 : vector<8x1xf32>
    %22 = arith.subf %18, %21 : vector<8x1xf32>
    %23 = math.exp %22 : vector<8x1xf32>
    %24 = vector.broadcast %21 : vector<8x1xf32> to vector<8x128xf32>
    %25 = arith.subf %13, %24 : vector<8x128xf32>
    %26 = math.exp %25 : vector<8x128xf32>
    %c0_13 = arith.constant 0 : index
    %c0_14 = arith.constant 0 : index
    %27 = vector.load %arg12[%c0_13, %c0_14] : memref<8x1xf32, #tpu.memory_space<vmem>>, vector<8x1xf32>
    %28 = arith.mulf %23, %27 : vector<8x1xf32>
    %cst_15 = arith.constant dense<0.000000e+00> : vector<8xf32>
    %29 = vector.multi_reduction <add>, %26, %cst_15 [1] : vector<8x128xf32> to vector<8xf32>
    %30 = vector.shape_cast %29 : vector<8xf32> to vector<8x1xf32>
    %31 = arith.addf %28, %30 : vector<8x1xf32>
    %c0_16 = arith.constant 0 : index
    %c0_17 = arith.constant 0 : index
    %32 = vector.load %arg12[%c0_16, %c0_17] : memref<8x1xf32, #tpu.memory_space<vmem>>, vector<8x1xf32>
    tpu.vector_store %arg12[%c0_16, %c0_17], %31 {strides = array<i32>} : memref<8x1xf32, #tpu.memory_space<vmem>>, vector<8x1xf32>,
    %33 = vector.shape_cast %26 : vector<8x128xf32> to vector<8x1x128xf32>
    "tpu.trace_start"() <{level = 10 : i32, message = "bqs,bsd->bqd"}> : () -> ()
    %cst_18 = arith.constant dense<0.000000e+00> : vector<8x1x128xf32>
    %34 = tpu.matmul %33, %3, %cst_18 {dimension_numbers = #tpu.dot_dimension_numbers<[2], [1], [1], [2], [0, 0, 0, 1, 1, 2], [0], [0]>} : vector<8x1x128xf32>, vector<8x128x128xf32>, vector<8x1x128xf32> -> vector<8x1x128xf32>
    "tpu.trace_stop"() : () -> ()
    %35 = vector.shape_cast %34 : vector<8x1x128xf32> to vector<8x128xf32>
    %c0_19 = arith.constant 0 : index
    %c0_20 = arith.constant 0 : index
    %36 = vector.load %arg13[%c0_19, %c0_20] : memref<8x128xf32, #tpu.memory_space<vmem>>, vector<8x128xf32>
    %37 = vector.broadcast %23 : vector<8x1xf32> to vector<8x128xf32>
    %38 = arith.mulf %37, %36 : vector<8x128xf32>
    %39 = arith.addf %38, %35 : vector<8x128xf32>
    %c0_21 = arith.constant 0 : index
    %c0_22 = arith.constant 0 : index
    %40 = vector.load %arg13[%c0_21, %c0_22] : memref<8x128xf32, #tpu.memory_space<vmem>>, vector<8x128xf32>
    tpu.vector_store %arg13[%c0_21, %c0_22], %39 {strides = array<i32>} : memref<8x128xf32, #tpu.memory_space<vmem>>, vector<8x128xf32>,
    %c0_23 = arith.constant 0 : index
    %c0_24 = arith.constant 0 : index
    %41 = vector.load %arg11[%c0_23, %c0_24] : memref<8x1xf32, #tpu.memory_space<vmem>>, vector<8x1xf32>
    tpu.vector_store %arg11[%c0_23, %c0_24], %21 {strides = array<i32>} : memref<8x1xf32, #tpu.memory_space<vmem>>, vector<8x1xf32>,
    %c1_i32 = arith.constant 1 : i32
    %42 = arith.cmpi eq, %arg1, %c1_i32 : i32
    %43 = arith.extui %42 : i1 to i32
    %c0_i32_25 = arith.constant 0 : i32
    %44 = arith.cmpi ne, %43, %c0_i32_25 : i32
    scf.if %44 {
      %c0_26 = arith.constant 0 : index
      %c0_27 = arith.constant 0 : index
      %45 = vector.load %arg12[%c0_26, %c0_27] : memref<8x1xf32, #tpu.memory_space<vmem>>, vector<8x1xf32>
      %cst_28 = arith.constant 1.000000e+00 : f32
      %46 = vector.broadcast %cst_28 : f32 to vector<8x1xf32>
      %47 = arith.divf %46, %45 : vector<8x1xf32>
      %c0_29 = arith.constant 0 : index
      %c0_30 = arith.constant 0 : index
      %48 = vector.load %arg9[%c0_29, %c0_30] : memref<8x256xf32, #tpu.memory_space<vmem>>, vector<8x256xf32>
      %c0_31 = arith.constant 0 : index
      %c0_32 = arith.constant 0 : index
      %49 = vector.load %arg11[%c0_31, %c0_32] : memref<8x1xf32, #tpu.memory_space<vmem>>, vector<8x1xf32>
      %50 = vector.broadcast %49 : vector<8x1xf32> to vector<8x256xf32>
      %51 = arith.subf %48, %50 : vector<8x256xf32>
      %52 = math.exp %51 : vector<8x256xf32>
      %53 = vector.broadcast %47 : vector<8x1xf32> to vector<8x256xf32>
      %54 = arith.mulf %52, %53 : vector<8x256xf32>
      %c0_33 = arith.constant 0 : index
      %c0_34 = arith.constant 0 : index
      %55 = vector.load %arg9[%c0_33, %c0_34] : memref<8x256xf32, #tpu.memory_space<vmem>>, vector<8x256xf32>
      tpu.vector_store %arg9[%c0_33, %c0_34], %54 {strides = array<i32>} : memref<8x256xf32, #tpu.memory_space<vmem>>, vector<8x256xf32>,
      %c0_35 = arith.constant 0 : index
      %c0_36 = arith.constant 0 : index
      %56 = vector.load %arg13[%c0_35, %c0_36] : memref<8x128xf32, #tpu.memory_space<vmem>>, vector<8x128xf32>
      %57 = vector.broadcast %47 : vector<8x1xf32> to vector<8x128xf32>
      %58 = arith.mulf %56, %57 : vector<8x128xf32>
      %c0_37 = arith.constant 0 : index
      %c0_38 = arith.constant 0 : index
      %59 = vector.load %arg8[%c0_37, %c0_38] : memref<8x128xf32, #tpu.memory_space<vmem>>, vector<8x128xf32>
      tpu.vector_store %arg8[%c0_37, %c0_38], %58 {strides = array<i32>} : memref<8x128xf32, #tpu.memory_space<vmem>>, vector<8x128xf32>,
      %c0_39 = arith.constant 0 : index
      %c0_40 = arith.constant 0 : index
      %60 = vector.load %arg2[%c0_39, %c0_40] : memref<8x128xf32, #tpu.memory_space<vmem>>, vector<8x128xf32>
      %61 = tpu.concatenate %58, %60 in 1 : vector<8x128xf32>, vector<8x128xf32> -> vector<8x256xf32>
      %c0_41 = arith.constant 0 : index
      %c0_42 = arith.constant 0 : index
      %62 = vector.load %arg6[%c0_41, %c0_42] : memref<256x128xf32, #tpu.memory_space<vmem>>, vector<256x128xf32>
      %cst_43 = arith.constant dense<0.000000e+00> : vector<8x128xf32>
      %63 = tpu.matmul %61, %62, %cst_43 {dimension_numbers = #tpu.dot_dimension_numbers<[1], [0], [0], [1], [0, 0, 1, 1], [], []>} : vector<8x256xf32>, vector<256x128xf32>, vector<8x128xf32> -> vector<8x128xf32>
      %64 = math.tanh %63 : vector<8x128xf32>
      %c0_44 = arith.constant 0 : index
      %c0_45 = arith.constant 0 : index
      %65 = vector.load %arg7[%c0_44, %c0_45] : memref<8x128xf32, #tpu.memory_space<vmem>>, vector<8x128xf32>
      tpu.vector_store %arg7[%c0_44, %c0_45], %64 {strides = array<i32>} : memref<8x128xf32, #tpu.memory_space<vmem>>, vector<8x128xf32>,
    } else {
    }
    return
  }
  func.func @transform_0(%arg0: i32, %arg1: i32) -> (i32, i32) {
    %c0_i32 = arith.constant 0 : i32
    %c0_i32_0 = arith.constant 0 : i32
    return %arg0, %c0_i32 : i32, i32
  }
  func.func @transform_1(%arg0: i32, %arg1: i32) -> (i32, i32, i32) {
    %c0_i32 = arith.constant 0 : i32
    %c0_i32_0 = arith.constant 0 : i32
    return %arg0, %arg1, %c0_i32 : i32, i32, i32
  }
  func.func @transform_2(%arg0: i32, %arg1: i32) -> (i32, i32) {
    %c0_i32 = arith.constant 0 : i32
    %c0_i32_0 = arith.constant 0 : i32
    %c0_i32_1 = arith.constant 0 : i32
    return %c0_i32, %c0_i32_0 : i32, i32
  }
  func.func @transform_3(%arg0: i32, %arg1: i32) -> (i32, i32) {
    %c0_i32 = arith.constant 0 : i32
    %c0_i32_0 = arith.constant 0 : i32
    %c0_i32_1 = arith.constant 0 : i32
    return %c0_i32, %c0_i32_0 : i32, i32
  }
  func.func @transform_4(%arg0: i32, %arg1: i32) -> (i32, i32) {
    %c0_i32 = arith.constant 0 : i32
    %c0_i32_0 = arith.constant 0 : i32
    %c0_i32_1 = arith.constant 0 : i32
    return %c0_i32, %c0_i32_0 : i32, i32
  }
  func.func @transform_5(%arg0: i32, %arg1: i32) -> (i32, i32) {
    %c0_i32 = arith.constant 0 : i32
    %c0_i32_0 = arith.constant 0 : i32
    return %arg0, %c0_i32 : i32, i32
  }
  func.func @transform_6(%arg0: i32, %arg1: i32) -> (i32, i32) {
    %c0_i32 = arith.constant 0 : i32
    %c0_i32_0 = arith.constant 0 : i32
    return %arg0, %c0_i32 : i32, i32
  }
  func.func @transform_7(%arg0: i32, %arg1: i32) -> (i32, i32) {
    %c0_i32 = arith.constant 0 : i32
    %c0_i32_0 = arith.constant 0 : i32
    return %arg0, %c0_i32 : i32, i32
  }
}

</mosaic_0001>

<llo_original>
// kernel: tpu_custom_call.1
$region0: #{tpu_custom_call.1}
  #allocation0 [shape = 'u32[]', space=smem, size = 0x4, offset = 0x4, fixed_abs, tag = 'smem constant byte address 0x4 - core index']
  #allocation1 [shape = 'u32[144,128]{1,0:T(1,128)}', space=vmem, size = 0x12000, scoped, tag = 'internal scratch']
  #allocation2 [shape = 'f32[8,128]{1,0:T(8,128)}', space=vmem, size = 0x1000, scoped, tag = 'scratch operand']
  #allocation3 [shape = 'f32[8,1]{1,0:T(8,128)}', space=vmem, size = 0x1000, scoped, tag = 'scratch operand']
  #allocation4 [shape = 'f32[8,1]{1,0:T(8,128)}', space=vmem, size = 0x1000, scoped, tag = 'scratch operand']
  #allocation5 [shape = 'f32[8,128]{1,0:T(8,128)}', space=vmem, size = 0x1000, scoped, tag = 'scratch operand']
  #allocation19 [shape = 's32[]', space=sflag, size = 0x4, offset = 0, fixed_abs, tag = 'sflag constant byte address 0x0 - dummy sync flag']
  %s0 = inlined_call_operand.hbm [shape: f32[16,128], index: 0, kind: input, shape index: {}]
  %s1 = inlined_call_operand.hbm [shape: f32[16,256,128], index: 1, kind: input, shape index: {}]
  %s2 = inlined_call_operand.hbm [shape: f32[128,128], index: 2, kind: input, shape index: {}]
  %s3 = inlined_call_operand.hbm [shape: f32[1,128], index: 3, kind: input, shape index: {}]
  %s4 = inlined_call_operand.hbm [shape: f32[256,128], index: 4, kind: input, shape index: {}]
  %s5 = inlined_call_operand.hbm [shape: f32[16,128], index: 5, kind: output, shape index: {0}]
  %s6 = inlined_call_operand.hbm [shape: f32[16,128], index: 6, kind: output, shape index: {1}]
  %s7 = inlined_call_operand.hbm [shape: f32[16,256], index: 7, kind: output, shape index: {2}]
  %8 = xla_tuple %s5, %s6, %s7
  %s9 = sld [smem:[#allocation0]]
  $region97: #{tpu_custom_call.1} parent=0
    _
  %s11 = ssub.s32 1, %s9
  %s12 = scalar_select 0, %s11, %s9
  $region1: #{tpu_custom_call.1} parent=0
    #allocation6 [shape = 'u8[8192]{0}', space=vmem, size = 0x2000, scoped, tag = 'input window, operand 0']
    #allocation7 [shape = 's32[2]{0}', space=sflag, size = 0x8, scoped, tag = 'scoped memory for tpu_custom_call.1']
    #allocation8 [shape = 's32[2]{0}', space=sflag, size = 0x8, scoped, tag = 'scoped memory for tpu_custom_call.1']
    #allocation9 [shape = 'u8[1048576]{0}', space=vmem, size = 0x100000, scoped, tag = 'input window, operand 1']
    #allocation10 [shape = 's32[2]{0}', space=sflag, size = 0x8, scoped, tag = 'scoped memory for tpu_custom_call.1']
    #allocation11 [shape = 'u8[65536]{0}', space=vmem, size = 0x10000, scoped, tag = 'input window, operand 2, single buffered']
    #allocation12 [shape = 'u8[512]{0}', space=vmem, size = 0x400, scoped, tag = 'input window, operand 3, single buffered']
    #allocation13 [shape = 's32[1]{0}', space=sflag, size = 0x4, scoped, tag = 'scoped memory for tpu_custom_call.1']
    #allocation14 [shape = 'u8[131072]{0}', space=vmem, size = 0x20000, scoped, tag = 'input window, operand 4, single buffered']
    #allocation15 [shape = 'u8[8192]{0}', space=vmem, size = 0x2000, scoped, tag = 'output window, operand 0']
    #allocation16 [shape = 'u8[8192]{0}', space=vmem, size = 0x2000, scoped, tag = 'output window, operand 1']
    #allocation17 [shape = 's32[2]{0}', space=sflag, size = 0x8, scoped, tag = 'scoped memory for tpu_custom_call.1']
    #allocation18 [shape = 'u8[16384]{0}', space=vmem, size = 0x4000, scoped, tag = 'output window, operand 2']
    %13 = vsyncpa [#allocation7], 0
    %s14 = scalar_lea.sflag [#allocation7], 1
    %15 = vsyncpa %s14, 0
    %16 = vsyncpa [#allocation10], 0
    %s17 = scalar_lea.sflag [#allocation10], 1
    %18 = vsyncpa %s17, 0
    %19 = vsyncpa [#allocation13], 0
    %20 = vsyncpa [#allocation8], 0
    %s21 = scalar_lea.sflag [#allocation8], 1
    %22 = vsyncpa %s21, 0
    %23 = vsyncpa [#allocation17], 0
    %s24 = scalar_lea.sflag [#allocation17], 1
    %25 = vsyncpa %s24, 0
    loop: start=0, step=1, limit=6
    $region2: #{tpu_custom_call.1} parent=1 // loop_pre_header
      _
    $region3: #{tpu_custom_call.1} parent=1 // loop_header
      %s27 = sphi 0, %s31
      %p28 = scmp.ge.s32.totalorder %s27, 6
      %s34 = sphi 0, %s46
      %s35 = sphi 0, %s42
      %s36 = sphi 0, %s34
      %s37 = sphi 0, %s35
      %s38 = sphi 0, %s36
      %s39 = sphi 0, %s37
      %s49 = sphi 0, %s51
      %s52 = sphi 0, %s49
      %s53 = sphi 0, %s52
      %s69 = sphi 0, %s53
      %s77 = sphi 0, %s79
      %s80 = sphi 0, %s77
      %s81 = sphi 0, %s80
      %s97 = sphi 0, %s81
      %s101 = sphi 0, %s101
      %s103 = sphi 0, %s101
      %s104 = sphi 0, %s103
      %s118 = sphi 0, %s104
      %s122 = sphi 0, %s122
      %s124 = sphi 0, %s122
      %s125 = sphi 0, %s124
      %s139 = sphi 0, %s125
      %s143 = sphi 0, %s143
      %s145 = sphi 0, %s143
      %s146 = sphi 0, %s145
      %s160 = sphi 0, %s146
      %s166 = sphi 0, %s168
      %s169 = sphi 0, %s166
      %s170 = sphi 0, %s169
      %s186 = sphi 0, %s170
      %s192 = sphi 0, %s194
      %s195 = sphi 0, %s192
      %s196 = sphi 0, %s195
      %s212 = sphi 0, %s196
      %s218 = sphi 0, %s220
      %s221 = sphi 0, %s218
      %s222 = sphi 0, %s221
      %s238 = sphi 0, %s222
    $region4: #{tpu_custom_call.1} parent=1 // loop_header_branch
      %30 = sbr.rel (%p28) target = $region8
    $region5: #{tpu_custom_call.1} parent=1 // loop_body
      %s32 = ssub.s32 %s27, 1
      %s33 = ssub.s32 %s27, 2
      %s40 = sadd.s32 1, %s35
      %p41 = scmp.ge.s32.totalorder %s40, 2
      %s42 = scalar_select %p41, 0, %s40
      %s43 = sadd.s32 1, %s34
      %s44 = scalar_select %p41, %s43, %s34
      %p45 = scmp.ge.s32.totalorder %s44, 2
      %s46 = scalar_select %p45, 0, %s44
      %s47 = ssub.s32 %s34, %s46
      %p48 = scmp.eq.s32.totalorder %s47, 0
      %s50 = sadd.s32 %s49, 1
      %s51 = scalar_select %p48, %s49, %s50
      %p54 = pneg %p48
      %p55 = scmp.eq.s32.totalorder %s27, 3
      %p56 = por %p54, %p55
      %p57 = scmp.ne.s32.totalorder %s49, %s52
      %p58 = scmp.eq.s32.totalorder %s27, 0
      %p59 = por %p57, %p58
      %p60 = scmp.ne.s32.totalorder %s49, %s52
      %p61 = scmp.eq.s32.totalorder %s32, 3
      %p62 = por %p60, %p61
      %p63 = scmp.ne.s32.totalorder %s52, %s53
      %p64 = scmp.eq.s32.totalorder %s32, 0
      %p65 = por %p63, %p64
      %p66 = scmp.ne.s32.totalorder %s52, %s53
      %p67 = scmp.eq.s32.totalorder %s33, 3
      %p68 = por %p66, %p67
      %p70 = scmp.ne.s32.totalorder %s53, %s69
      %p71 = scmp.eq.s32.totalorder %s33, 0
      %p72 = por %p70, %p71
      %s73 = ssub.s32 %s34, %s46
      %s74 = ssub.s32 %s35, %s42
      %s75 = sor.u32 %s73, %s74
      %p76 = scmp.eq.s32.totalorder %s75, 0
      %s78 = sadd.s32 %s77, 1
      %s79 = scalar_select %p76, %s77, %s78
      %p82 = pneg %p76
      %p83 = scmp.eq.s32.totalorder %s27, 3
      %p84 = por %p82, %p83
      %p85 = scmp.ne.s32.totalorder %s77, %s80
      %p86 = scmp.eq.s32.totalorder %s27, 0
      %p87 = por %p85, %p86
      %p88 = scmp.ne.s32.totalorder %s77, %s80
      %p89 = scmp.eq.s32.totalorder %s32, 3
      %p90 = por %p88, %p89
      %p91 = scmp.ne.s32.totalorder %s80, %s81
      %p92 = scmp.eq.s32.totalorder %s32, 0
      %p93 = por %p91, %p92
      %p94 = scmp.ne.s32.totalorder %s80, %s81
      %p95 = scmp.eq.s32.totalorder %s33, 3
      %p96 = por %p94, %p95
      %p98 = scmp.ne.s32.totalorder %s81, %s97
      %p99 = scmp.eq.s32.totalorder %s33, 0
      %p100 = por %p98, %p99
      %s102 = sadd.s32 %s101, 1
      %p105 = scmp.eq.s32.totalorder %s27, 3
      %p106 = scmp.ne.s32.totalorder %s101, %s103
      %p107 = scmp.eq.s32.totalorder %s27, 0
      %p108 = por %p106, %p107
      %p109 = scmp.ne.s32.totalorder %s101, %s103
      %p110 = scmp.eq.s32.totalorder %s32, 3
      %p111 = por %p109, %p110
      %p112 = scmp.ne.s32.totalorder %s103, %s104
      %p113 = scmp.eq.s32.totalorder %s32, 0
      %p114 = por %p112, %p113
      %p115 = scmp.ne.s32.totalorder %s103, %s104
      %p116 = scmp.eq.s32.totalorder %s33, 3
      %p117 = por %p115, %p116
      %p119 = scmp.ne.s32.totalorder %s104, %s118
      %p120 = scmp.eq.s32.totalorder %s33, 0
      %p121 = por %p119, %p120
      %s123 = sadd.s32 %s122, 1
      %p126 = scmp.eq.s32.totalorder %s27, 3
      %p127 = scmp.ne.s32.totalorder %s122, %s124
      %p128 = scmp.eq.s32.totalorder %s27, 0
      %p129 = por %p127, %p128
      %p130 = scmp.ne.s32.totalorder %s122, %s124
      %p131 = scmp.eq.s32.totalorder %s32, 3
      %p132 = por %p130, %p131
      %p133 = scmp.ne.s32.totalorder %s124, %s125
      %p134 = scmp.eq.s32.totalorder %s32, 0
      %p135 = por %p133, %p134
      %p136 = scmp.ne.s32.totalorder %s124, %s125
      %p137 = scmp.eq.s32.totalorder %s33, 3
      %p138 = por %p136, %p137
      %p140 = scmp.ne.s32.totalorder %s125, %s139
      %p141 = scmp.eq.s32.totalorder %s33, 0
      %p142 = por %p140, %p141
      %s144 = sadd.s32 %s143, 1
      %p147 = scmp.eq.s32.totalorder %s27, 3
      %p148 = scmp.ne.s32.totalorder %s143, %s145
      %p149 = scmp.eq.s32.totalorder %s27, 0
      %p150 = por %p148, %p149
      %p151 = scmp.ne.s32.totalorder %s143, %s145
      %p152 = scmp.eq.s32.totalorder %s32, 3
      %p153 = por %p151, %p152
      %p154 = scmp.ne.s32.totalorder %s145, %s146
      %p155 = scmp.eq.s32.totalorder %s32, 0
      %p156 = por %p154, %p155
      %p157 = scmp.ne.s32.totalorder %s145, %s146
      %p158 = scmp.eq.s32.totalorder %s33, 3
      %p159 = por %p157, %p158
      %p161 = scmp.ne.s32.totalorder %s146, %s160
      %p162 = scmp.eq.s32.totalorder %s33, 0
      %p163 = por %p161, %p162
      %s164 = ssub.s32 %s34, %s46
      %p165 = scmp.eq.s32.totalorder %s164, 0
      %s167 = sadd.s32 %s166, 1
      %s168 = scalar_select %p165, %s166, %s167
      %p171 = pneg %p165
      %p172 = scmp.eq.s32.totalorder %s27, 3
      %p173 = por %p171, %p172
      %p174 = scmp.ne.s32.totalorder %s166, %s169
      %p175 = scmp.eq.s32.totalorder %s27, 0
      %p176 = por %p174, %p175
      %p177 = scmp.ne.s32.totalorder %s166, %s169
      %p178 = scmp.eq.s32.totalorder %s32, 3
      %p179 = por %p177, %p178
      %p180 = scmp.ne.s32.totalorder %s169, %s170
      %p181 = scmp.eq.s32.totalorder %s32, 0
      %p182 = por %p180, %p181
      %p183 = scmp.ne.s32.totalorder %s169, %s170
      %p184 = scmp.eq.s32.totalorder %s33, 3
      %p185 = por %p183, %p184
      %p187 = scmp.ne.s32.totalorder %s170, %s186
      %p188 = scmp.eq.s32.totalorder %s33, 0
      %p189 = por %p187, %p188
      %s190 = ssub.s32 %s34, %s46
      %p191 = scmp.eq.s32.totalorder %s190, 0
      %s193 = sadd.s32 %s192, 1
      %s194 = scalar_select %p191, %s192, %s193
      %p197 = pneg %p191
      %p198 = scmp.eq.s32.totalorder %s27, 3
      %p199 = por %p197, %p198
      %p200 = scmp.ne.s32.totalorder %s192, %s195
      %p201 = scmp.eq.s32.totalorder %s27, 0
      %p202 = por %p200, %p201
      %p203 = scmp.ne.s32.totalorder %s192, %s195
      %p204 = scmp.eq.s32.totalorder %s32, 3
      %p205 = por %p203, %p204
      %p206 = scmp.ne.s32.totalorder %s195, %s196
      %p207 = scmp.eq.s32.totalorder %s32, 0
      %p208 = por %p206, %p207
      %p209 = scmp.ne.s32.totalorder %s195, %s196
      %p210 = scmp.eq.s32.totalorder %s33, 3
      %p211 = por %p209, %p210
      %p213 = scmp.ne.s32.totalorder %s196, %s212
      %p214 = scmp.eq.s32.totalorder %s33, 0
      %p215 = por %p213, %p214
      %s216 = ssub.s32 %s34, %s46
      %p217 = scmp.eq.s32.totalorder %s216, 0
      %s219 = sadd.s32 %s218, 1
      %s220 = scalar_select %p217, %s218, %s219
      %p223 = pneg %p217
      %p224 = scmp.eq.s32.totalorder %s27, 3
      %p225 = por %p223, %p224
      %p226 = scmp.ne.s32.totalorder %s218, %s221
      %p227 = scmp.eq.s32.totalorder %s27, 0
      %p228 = por %p226, %p227
      %p229 = scmp.ne.s32.totalorder %s218, %s221
      %p230 = scmp.eq.s32.totalorder %s32, 3
      %p231 = por %p229, %p230
      %p232 = scmp.ne.s32.totalorder %s221, %s222
      %p233 = scmp.eq.s32.totalorder %s32, 0
      %p234 = por %p232, %p233
      %p235 = scmp.ne.s32.totalorder %s221, %s222
      %p236 = scmp.eq.s32.totalorder %s33, 3
      %p237 = por %p235, %p236
      %p239 = scmp.ne.s32.totalorder %s222, %s238
      %p240 = scmp.eq.s32.totalorder %s33, 0
      %p241 = por %p239, %p240
      %p242 = scmp.le.s32.totalorder 1, %s27
      %p243 = scmp.lt.s32.totalorder %s27, 5
      %p244 = pnand %p242, %p243
      %p245 = pneg %p244
      // Predicated region
      $region9: #{tpu_custom_call.1} parent=5 // pred_check
        _
      $region10: #{tpu_custom_call.1} parent=5 // pred_check_branch
        %247 = sbr.rel (%p244) target = $region12
      $region11: #{tpu_custom_call.1} parent=5 // pred_region
        %s248 = ssub.s32 %s27, 1
        // Predicated region
        $region13: #{tpu_custom_call.1} parent=11 // pred_check
          %p249 = pneg %p114
        $region14: #{tpu_custom_call.1} parent=11 // pred_check_branch
          %251 = sbr.rel (%p249) target = $region16
        $region15: #{tpu_custom_call.1} parent=11 // pred_region
          %s253 = ssub.s32 2048, 2048
          %254 = vsyncadd [#allocation10], %s253
          %s255 = sshll.u32 [#allocation11], 4
          %s256 = int_to_ptr.vmem [resolvable:$true] %s255
          %261 = dma.hbm_to_vmem [thread:$0]  %s2, 2048, %s256, [#allocation10], 128, 128, 8
        $region16: #{tpu_custom_call.1} parent=11 // pred_fallthru
          _
        // Predicated region
        $region17: #{tpu_custom_call.1} parent=11 // pred_check
          %p262 = pneg %p135
        $region18: #{tpu_custom_call.1} parent=11 // pred_check_branch
          %264 = sbr.rel (%p262) target = $region20
        $region19: #{tpu_custom_call.1} parent=11 // pred_region
          %s266 = ssub.s32 16, 16
          %267 = vsyncadd [#allocation13], %s266
          %s269 = sshll.u32 [#allocation12], 4
          %s270 = int_to_ptr.vmem [resolvable:$true] %s269
          %272 = dma.hbm_to_vmem [thread:$0]  %s3, 16, %s270, [#allocation13]
        $region20: #{tpu_custom_call.1} parent=11 // pred_fallthru
          _
        // Predicated region
        $region21: #{tpu_custom_call.1} parent=11 // pred_check
          %p273 = pneg %p156
        $region22: #{tpu_custom_call.1} parent=11 // pred_check_branch
          %275 = sbr.rel (%p273) target = $region24
        $region23: #{tpu_custom_call.1} parent=11 // pred_region
          %s277 = ssub.s32 4096, 4096
          %278 = vsyncadd [#allocation13], %s277
          %s279 = sshll.u32 [#allocation14], 4
          %s280 = int_to_ptr.vmem [resolvable:$true] %s279
          %285 = dma.hbm_to_vmem [thread:$0]  %s4, 4096, %s280, [#allocation13], 128, 128, 8
        $region24: #{tpu_custom_call.1} parent=11 // pred_fallthru
          _
      $region12: #{tpu_custom_call.1} parent=5 // pred_fallthru
        _
      %p286 = scmp.lt.s32.totalorder %s27, 4
      // Predicated region
      $region25: #{tpu_custom_call.1} parent=5 // pred_check
        %p287 = pneg %p286
      $region26: #{tpu_custom_call.1} parent=5 // pred_check_branch
        %289 = sbr.rel (%p287) target = $region28
      $region27: #{tpu_custom_call.1} parent=5 // pred_region
        // Predicated region
        $region29: #{tpu_custom_call.1} parent=27 // pred_check
          %p290 = pneg %p59
        $region30: #{tpu_custom_call.1} parent=27 // pred_check_branch
          %292 = sbr.rel (%p290) target = $region32
        $region31: #{tpu_custom_call.1} parent=27 // pred_region
          %s293 = sand.u32 %s49, 1
          %s294 = scalar_lea.sflag [#allocation7], %s293
          %s295 = sand.u32 %s49, 1
          %s296 = smul.addr %s295, 8
          %s297 = scalar_lea.vmem [#allocation6], %s296
          %s299 = ssub.s32 128, 128
          %300 = vsyncadd %s294, %s299
          %s301 = smul.addr %s34, 128
          %s302 = scalar_lea.hbm %s0, %s301
          %s304 = sshll.u32 %s297, 4
          %s305 = int_to_ptr.vmem [resolvable:$true] %s304
          %307 = dma.hbm_to_vmem [thread:$0]  %s302, 128, %s305, %s294
        $region32: #{tpu_custom_call.1} parent=27 // pred_fallthru
          _
        // Predicated region
        $region33: #{tpu_custom_call.1} parent=27 // pred_check
          %p308 = pneg %p87
        $region34: #{tpu_custom_call.1} parent=27 // pred_check_branch
          %310 = sbr.rel (%p308) target = $region36
        $region35: #{tpu_custom_call.1} parent=27 // pred_region
          #allocation20 [shape = 'u32[6]{0}', space=smem, size = 0x18, scoped, tag = 'DMA stride descriptor']
          %s311 = sand.u32 %s27, 1
          %s312 = scalar_lea.sflag [#allocation10], %s311
          %s313 = sand.u32 %s77, 1
          %s314 = smul.addr %s313, 1024
          %s315 = scalar_lea.vmem [#allocation9], %s314
          %s316 = smul.u32 8, %s34
          %s317 = smul.u32 16, %s35
          %s319 = ssub.s32 16384, 16384
          %320 = vsyncadd %s312, %s319
          %s321 = smul.addr %s316, 32
          %s322 = sadd.s32 %s317, %s321
          %s323 = smul.addr %s322, 128
          %s324 = scalar_lea.hbm %s1, %s323
          %s326 = sshll.u32 1, 14
          %s327 = sxor.u32 4294967295, %s326
          %s329 = sld [smem:[#allocation0]]
          %s330 = sadd.s32 2, %s329
          %s332 = sshll.u32 7, 26
          %s333 = sxor.u32 4294967295, %s332
          %s334 = sand.u32 0, %s333
          %s335 = sshll.u32 %s330, 26
          %s336 = sor.u32 %s334, %s335
          %s337 = sshll.u32 %s315, 4
          %s338 = int_to_ptr.vmem [resolvable:$true] %s337
          %344 = sst [smem:[#allocation20]] 4096
          %s345 = scalar_lea.smem [#allocation20], 1
          %346 = sst [smem:[%s345]] 2048
          %s347 = scalar_lea.smem [#allocation20], 2
          %348 = sst [smem:[%s347]] 16
          %s349 = scalar_lea.smem [#allocation20], 3
          %350 = sst [smem:[%s349]] 128
          %s351 = scalar_lea.smem [#allocation20], 4
          %352 = sst [smem:[%s351]] 128
          %s353 = scalar_lea.smem [#allocation20], 5
          %354 = sst [smem:[%s353]] 8
          %356 = dma.general %s324, 16384, %s338, %s312, [#allocation19], [#allocation20], %s336, 0
        $region36: #{tpu_custom_call.1} parent=27 // pred_fallthru
          _
      $region28: #{tpu_custom_call.1} parent=5 // pred_fallthru
        _
      %p357 = scmp.le.s32.totalorder 1, %s27
      %p358 = scmp.lt.s32.totalorder %s27, 5
      %p359 = pnand %p357, %p358
      %p360 = pneg %p359
      // Predicated region
      $region37: #{tpu_custom_call.1} parent=5 // pred_check
        _
      $region38: #{tpu_custom_call.1} parent=5 // pred_check_branch
        %362 = sbr.rel (%p359) target = $region40
      $region39: #{tpu_custom_call.1} parent=5 // pred_region
        %s363 = ssub.s32 %s27, 1
        %s364 = sand.u32 %s52, 1
        %s365 = scalar_lea.sflag [#allocation7], %s364
        %s366 = sand.u32 %s52, 1
        %s367 = smul.addr %s366, 8
        %s368 = scalar_lea.vmem [#allocation6], %s367
        // Predicated region
        $region41: #{tpu_custom_call.1} parent=39 // pred_check
          %p369 = pneg %p65
        $region42: #{tpu_custom_call.1} parent=39 // pred_check_branch
          %371 = sbr.rel (%p369) target = $region44
        $region43: #{tpu_custom_call.1} parent=39 // pred_region
          %372 = dma.done %s365, 128
        $region44: #{tpu_custom_call.1} parent=39 // pred_fallthru
          _
        %s373 = sand.u32 %s32, 1
        %s374 = scalar_lea.sflag [#allocation10], %s373
        %s375 = sand.u32 %s80, 1
        %s376 = smul.addr %s375, 1024
        %s377 = scalar_lea.vmem [#allocation9], %s376
        // Predicated region
        $region45: #{tpu_custom_call.1} parent=39 // pred_check
          %p378 = pneg %p93
        $region46: #{tpu_custom_call.1} parent=39 // pred_check_branch
          %380 = sbr.rel (%p378) target = $region48
        $region47: #{tpu_custom_call.1} parent=39 // pred_region
          %381 = dma.done %s374, 16384
        $region48: #{tpu_custom_call.1} parent=39 // pred_fallthru
          _
        // Predicated region
        $region49: #{tpu_custom_call.1} parent=39 // pred_check
          %p382 = pneg %p114
        $region50: #{tpu_custom_call.1} parent=39 // pred_check_branch
          %384 = sbr.rel (%p382) target = $region52
        $region51: #{tpu_custom_call.1} parent=39 // pred_region
          %385 = dma.done [#allocation10], 2048
        $region52: #{tpu_custom_call.1} parent=39 // pred_fallthru
          _
        // Predicated region
        $region53: #{tpu_custom_call.1} parent=39 // pred_check
          %p386 = pneg %p135
        $region54: #{tpu_custom_call.1} parent=39 // pred_check_branch
          %388 = sbr.rel (%p386) target = $region56
        $region55: #{tpu_custom_call.1} parent=39 // pred_region
          %389 = dma.done [#allocation13], 16
        $region56: #{tpu_custom_call.1} parent=39 // pred_fallthru
          _
        // Predicated region
        $region57: #{tpu_custom_call.1} parent=39 // pred_check
          %p390 = pneg %p156
        $region58: #{tpu_custom_call.1} parent=39 // pred_check_branch
          %392 = sbr.rel (%p390) target = $region60
        $region59: #{tpu_custom_call.1} parent=39 // pred_region
          %393 = dma.done [#allocation13], 4096
        $region60: #{tpu_custom_call.1} parent=39 // pred_fallthru
          _
        %s394 = sand.u32 %s52, 1
        %s395 = scalar_lea.sflag [#allocation7], %s394
        %s396 = sand.u32 %s52, 1
        %s397 = smul.addr %s396, 8
        %s398 = scalar_lea.vmem [#allocation6], %s397
        %p399 = pneg %p65
        %p400 = pneg %p62
        %s401 = sand.u32 %s32, 1
        %s402 = scalar_lea.sflag [#allocation10], %s401
        %s403 = sand.u32 %s80, 1
        %s404 = smul.addr %s403, 1024
        %s405 = scalar_lea.vmem [#allocation9], %s404
        %p406 = pneg %p93
        %p407 = pneg %p90
        %p408 = pneg %p114
        %p409 = pneg %p111
        %p410 = pneg %p135
        %p411 = pneg %p132
        %p412 = pneg %p156
        %p413 = pneg %p153
        %p414 = pneg %p182
        %p415 = pneg %p179
        %s416 = sand.u32 %s169, 1
        %s417 = scalar_lea.sflag [#allocation8], %s416
        %s418 = sand.u32 %s169, 1
        %s419 = smul.addr %s418, 8
        %s420 = scalar_lea.vmem [#allocation15], %s419
        %p421 = pneg %p208
        %p422 = pneg %p205
        %s423 = sand.u32 %s32, 1
        %s424 = scalar_lea.sflag [#allocation17], %s423
        %s425 = sand.u32 %s195, 1
        %s426 = smul.addr %s425, 8
        %s427 = scalar_lea.vmem [#allocation16], %s426
        %p428 = pneg %p234
        %p429 = pneg %p231
        %s430 = sand.u32 %s32, 1
        %s431 = scalar_lea.sflag [#allocation17], %s430
        %s432 = sand.u32 %s221, 1
        %s433 = smul.addr %s432, 16
        %s434 = scalar_lea.vmem [#allocation18], %s433
        %s435 = smul.u32 8, %s36
        %s436 = smul.u32 16, %s37
        %p437 = scmp.eq.s32.totalorder %s37, 0
        // Predicated region
        $region61: #{tpu_custom_call.1} parent=39 // pred_check
          %p438 = pneg %p437
        $region62: #{tpu_custom_call.1} parent=39 // pred_check_branch
          %440 = sbr.rel (%p438) target = $region64
        $region63: #{tpu_custom_call.1} parent=39 // pred_region
          %v441 = vld [vmem:[%s368] sm:$0xff]
          %v442 = vld [vmem:[#allocation11] sm:$0xff]
          %v443 = vld [vmem:[#allocation11 + $0x8] sm:$0xff]
          %v444 = vld [vmem:[#allocation11 + $0x10] sm:$0xff]
          %v445 = vld [vmem:[#allocation11 + $0x18] sm:$0xff]
          %v446 = vld [vmem:[#allocation11 + $0x20] sm:$0xff]
          %v447 = vld [vmem:[#allocation11 + $0x28] sm:$0xff]
          %v448 = vld [vmem:[#allocation11 + $0x30] sm:$0xff]
          %v449 = vld [vmem:[#allocation11 + $0x38] sm:$0xff]
          %v450 = vld [vmem:[#allocation11 + $0x40] sm:$0xff]
          %v451 = vld [vmem:[#allocation11 + $0x48] sm:$0xff]
          %v452 = vld [vmem:[#allocation11 + $0x50] sm:$0xff]
          %v453 = vld [vmem:[#allocation11 + $0x58] sm:$0xff]
          %v454 = vld [vmem:[#allocation11 + $0x60] sm:$0xff]
          %v455 = vld [vmem:[#allocation11 + $0x68] sm:$0xff]
          %v456 = vld [vmem:[#allocation11 + $0x70] sm:$0xff]
          %v457 = vld [vmem:[#allocation11 + $0x78] sm:$0xff]
          %458 = vmatprep.subr.mxu0 0.0
          %459 = vmatpush1.msra.mxu0 %v442
          %460 = vmatprep.subr.mxu0 0.0
          %461 = vmatpush1.msra.mxu0 %v443
          %462 = vmatprep.subr.mxu0 0.0
          %463 = vmatpush1.msra.mxu0 %v444
          %464 = vmatprep.subr.mxu0 0.0
          %465 = vmatpush1.msra.mxu0 %v445
          %466 = vmatprep.subr.mxu0 0.0
          %467 = vmatpush1.msra.mxu0 %v446
          %468 = vmatprep.subr.mxu0 0.0
          %469 = vmatpush1.msra.mxu0 %v447
          %470 = vmatprep.subr.mxu0 0.0
          %471 = vmatpush1.msra.mxu0 %v448
          %472 = vmatprep.subr.mxu0 0.0
          %473 = vmatpush1.msra.mxu0 %v449
          %474 = vmatprep.subr.mxu0 0.0
          %475 = vmatpush1.msra.mxu0 %v450
          %476 = vmatprep.subr.mxu0 0.0
          %477 = vmatpush1.msra.mxu0 %v451
          %478 = vmatprep.subr.mxu0 0.0
          %479 = vmatpush1.msra.mxu0 %v452
          %480 = vmatprep.subr.mxu0 0.0
          %481 = vmatpush1.msra.mxu0 %v453
          %482 = vmatprep.subr.mxu0 0.0
          %483 = vmatpush1.msra.mxu0 %v454
          %484 = vmatprep.subr.mxu0 0.0
          %485 = vmatpush1.msra.mxu0 %v455
          %486 = vmatprep.subr.mxu0 0.0
          %487 = vmatpush1.msra.mxu0 %v456
          %488 = vmatprep.subr.mxu0 0.0
          %489 = vmatpush1.msra.mxu0 %v457
          %490 = vmatprep.subr.mxu0 0.0
          %491 = vmatpush1.msra.mxu0 0.0
          %492 = vmatprep.subr.mxu0 0.0
          %493 = vmatpush1.msra.mxu0 0.0
          %494 = vmatprep.subr.mxu0 0.0
          %495 = vmatpush1.msra.mxu0 0.0
          %496 = vmatprep.subr.mxu0 0.0
          %497 = vmatpush1.msra.mxu0 0.0
          %498 = vmatprep.subr.mxu0 0.0
          %499 = vmatpush1.msra.mxu0 0.0
          %500 = vmatprep.subr.mxu0 0.0
          %501 = vmatpush1.msra.mxu0 0.0
          %502 = vmatprep.subr.mxu0 0.0
          %503 = vmatpush1.msra.mxu0 0.0
          %504 = vmatprep.subr.mxu0 0.0
          %505 = vmatpush1.msra.mxu0 0.0
          %506 = vmatprep.subr.mxu0 0.0
          %507 = vmatpush1.msra.mxu0 0.0
          %508 = vmatprep.subr.mxu0 0.0
          %509 = vmatpush1.msra.mxu0 0.0
          %510 = vmatprep.subr.mxu0 0.0
          %511 = vmatpush1.msra.mxu0 0.0
          %512 = vmatprep.subr.mxu0 0.0
          %513 = vmatpush1.msra.mxu0 0.0
          %514 = vmatprep.subr.mxu0 0.0
          %515 = vmatpush1.msra.mxu0 0.0
          %516 = vmatprep.subr.mxu0 0.0
          %517 = vmatpush1.msra.mxu0 0.0
          %518 = vmatprep.subr.mxu0 0.0
          %519 = vmatpush1.msra.mxu0 0.0
          %520 = vmatprep.subr.mxu0 0.0
          %521 = vmatpush1.msra.mxu0 0.0
          %522 = vmatprep.mubr.f32.mxu0 0.0
          %523 = vmatmul.mubr.f32.gmra.mrb[0].mxu0 %v441
          %v524 = vpop.f32.mrb[0].mxu0
          %v525 = vadd.f32 0.0, %v524
          %v526 = vpop.f32.mrb[0].mxu0
          %527 = vdwg.mxu0
          %v528 = vmax.f32 %v525, 0.0
          %v529 = vld [vmem:[#allocation12] sm:$0x1]
          %v531 = vlaneseq
          %v532 = vshrl.u32 %v531, 7
          %v533 = vsub.s32 0, %v532
          %v534 = vrot.slane %v529, %v533
          %v536 = vmul.f32 %v528, %v534
          %537 = vst [vmem:[#allocation2] sm:$0xff] %v536
          %vm538 = vcmask 7168
          %539 = vst.msk [vmem:[#allocation3] sm:$0xff] %vm538, -inf
          %540 = vst.msk [vmem:[#allocation4] sm:$0xff] %vm538, 0.0
          %541 = vst [vmem:[#allocation5] sm:$0xff] 0.0
        $region64: #{tpu_custom_call.1} parent=39 // pred_fallthru
          _
        %v542 = vld [vmem:[%s377] sm:$0xff]
        %v543 = vld [vmem:[%s377 + $0x8] sm:$0xff]
        %v544 = vld [vmem:[%s377 + $0x10] sm:$0xff]
        %v545 = vld [vmem:[%s377 + $0x18] sm:$0xff]
        %v546 = vld [vmem:[%s377 + $0x20] sm:$0xff]
        %v547 = vld [vmem:[%s377 + $0x28] sm:$0xff]
        %v548 = vld [vmem:[%s377 + $0x30] sm:$0xff]
        %v549 = vld [vmem:[%s377 + $0x38] sm:$0xff]
        %v550 = vld [vmem:[%s377 + $0x40] sm:$0xff]
        %v551 = vld [vmem:[%s377 + $0x48] sm:$0xff]
        %v552 = vld [vmem:[%s377 + $0x50] sm:$0xff]
        %v553 = vld [vmem:[%s377 + $0x58] sm:$0xff]
        %v554 = vld [vmem:[%s377 + $0x60] sm:$0xff]
        %v555 = vld [vmem:[%s377 + $0x68] sm:$0xff]
        %v556 = vld [vmem:[%s377 + $0x70] sm:$0xff]
        %v557 = vld [vmem:[%s377 + $0x78] sm:$0xff]
        %v558 = vld [vmem:[%s377 + $0x80] sm:$0xff]
        %v559 = vld [vmem:[%s377 + $0x88] sm:$0xff]
        %v560 = vld [vmem:[%s377 + $0x90] sm:$0xff]
        %v561 = vld [vmem:[%s377 + $0x98] sm:$0xff]
        %v562 = vld [vmem:[%s377 + $0xa0] sm:$0xff]
        %v563 = vld [vmem:[%s377 + $0xa8] sm:$0xff]
        %v564 = vld [vmem:[%s377 + $0xb0] sm:$0xff]
        %v565 = vld [vmem:[%s377 + $0xb8] sm:$0xff]
        %v566 = vld [vmem:[%s377 + $0xc0] sm:$0xff]
        %v567 = vld [vmem:[%s377 + $0xc8] sm:$0xff]
        %v568 = vld [vmem:[%s377 + $0xd0] sm:$0xff]
        %v569 = vld [vmem:[%s377 + $0xd8] sm:$0xff]
        %v570 = vld [vmem:[%s377 + $0xe0] sm:$0xff]
        %v571 = vld [vmem:[%s377 + $0xe8] sm:$0xff]
        %v572 = vld [vmem:[%s377 + $0xf0] sm:$0xff]
        %v573 = vld [vmem:[%s377 + $0xf8] sm:$0xff]
        %v574 = vld [vmem:[%s377 + $0x100] sm:$0xff]
        %v575 = vld [vmem:[%s377 + $0x108] sm:$0xff]
        %v576 = vld [vmem:[%s377 + $0x110] sm:$0xff]
        %v577 = vld [vmem:[%s377 + $0x118] sm:$0xff]
        %v578 = vld [vmem:[%s377 + $0x120] sm:$0xff]
        %v579 = vld [vmem:[%s377 + $0x128] sm:$0xff]
        %v580 = vld [vmem:[%s377 + $0x130] sm:$0xff]
        %v581 = vld [vmem:[%s377 + $0x138] sm:$0xff]
        %v582 = vld [vmem:[%s377 + $0x140] sm:$0xff]
        %v583 = vld [vmem:[%s377 + $0x148] sm:$0xff]
        %v584 = vld [vmem:[%s377 + $0x150] sm:$0xff]
        %v585 = vld [vmem:[%s377 + $0x158] sm:$0xff]
        %v586 = vld [vmem:[%s377 + $0x160] sm:$0xff]
        %v587 = vld [vmem:[%s377 + $0x168] sm:$0xff]
        %v588 = vld [vmem:[%s377 + $0x170] sm:$0xff]
        %v589 = vld [vmem:[%s377 + $0x178] sm:$0xff]
        %v590 = vld [vmem:[%s377 + $0x180] sm:$0xff]
        %v591 = vld [vmem:[%s377 + $0x188] sm:$0xff]
        %v592 = vld [vmem:[%s377 + $0x190] sm:$0xff]
        %v593 = vld [vmem:[%s377 + $0x198] sm:$0xff]
        %v594 = vld [vmem:[%s377 + $0x1a0] sm:$0xff]
        %v595 = vld [vmem:[%s377 + $0x1a8] sm:$0xff]
        %v596 = vld [vmem:[%s377 + $0x1b0] sm:$0xff]
        %v597 = vld [vmem:[%s377 + $0x1b8] sm:$0xff]
        %v598 = vld [vmem:[%s377 + $0x1c0] sm:$0xff]
        %v599 = vld [vmem:[%s377 + $0x1c8] sm:$0xff]
        %v600 = vld [vmem:[%s377 + $0x1d0] sm:$0xff]
        %v601 = vld [vmem:[%s377 + $0x1d8] sm:$0xff]
        %v602 = vld [vmem:[%s377 + $0x1e0] sm:$0xff]
        %v603 = vld [vmem:[%s377 + $0x1e8] sm:$0xff]
        %v604 = vld [vmem:[%s377 + $0x1f0] sm:$0xff]
        %v605 = vld [vmem:[%s377 + $0x1f8] sm:$0xff]
        %v606 = vld [vmem:[%s377 + $0x200] sm:$0xff]
        %v607 = vld [vmem:[%s377 + $0x208] sm:$0xff]
        %v608 = vld [vmem:[%s377 + $0x210] sm:$0xff]
        %v609 = vld [vmem:[%s377 + $0x218] sm:$0xff]
        %v610 = vld [vmem:[%s377 + $0x220] sm:$0xff]
        %v611 = vld [vmem:[%s377 + $0x228] sm:$0xff]
        %v612 = vld [vmem:[%s377 + $0x230] sm:$0xff]
        %v613 = vld [vmem:[%s377 + $0x238] sm:$0xff]
        %v614 = vld [vmem:[%s377 + $0x240] sm:$0xff]
        %v615 = vld [vmem:[%s377 + $0x248] sm:$0xff]
        %v616 = vld [vmem:[%s377 + $0x250] sm:$0xff]
        %v617 = vld [vmem:[%s377 + $0x258] sm:$0xff]
        %v618 = vld [vmem:[%s377 + $0x260] sm:$0xff]
        %v619 = vld [vmem:[%s377 + $0x268] sm:$0xff]
        %v620 = vld [vmem:[%s377 + $0x270] sm:$0xff]
        %v621 = vld [vmem:[%s377 + $0x278] sm:$0xff]
        %v622 = vld [vmem:[%s377 + $0x280] sm:$0xff]
        %v623 = vld [vmem:[%s377 + $0x288] sm:$0xff]
        %v624 = vld [vmem:[%s377 + $0x290] sm:$0xff]
        %v625 = vld [vmem:[%s377 + $0x298] sm:$0xff]
        %v626 = vld [vmem:[%s377 + $0x2a0] sm:$0xff]
        %v627 = vld [vmem:[%s377 + $0x2a8] sm:$0xff]
        %v628 = vld [vmem:[%s377 + $0x2b0] sm:$0xff]
        %v629 = vld [vmem:[%s377 + $0x2b8] sm:$0xff]
        %v630 = vld [vmem:[%s377 + $0x2c0] sm:$0xff]
        %v631 = vld [vmem:[%s377 + $0x2c8] sm:$0xff]
        %v632 = vld [vmem:[%s377 + $0x2d0] sm:$0xff]
        %v633 = vld [vmem:[%s377 + $0x2d8] sm:$0xff]
        %v634 = vld [vmem:[%s377 + $0x2e0] sm:$0xff]
        %v635 = vld [vmem:[%s377 + $0x2e8] sm:$0xff]
        %v636 = vld [vmem:[%s377 + $0x2f0] sm:$0xff]
        %v637 = vld [vmem:[%s377 + $0x2f8] sm:$0xff]
        %v638 = vld [vmem:[%s377 + $0x300] sm:$0xff]
        %v639 = vld [vmem:[%s377 + $0x308] sm:$0xff]
        %v640 = vld [vmem:[%s377 + $0x310] sm:$0xff]
        %v641 = vld [vmem:[%s377 + $0x318] sm:$0xff]
        %v642 = vld [vmem:[%s377 + $0x320] sm:$0xff]
        %v643 = vld [vmem:[%s377 + $0x328] sm:$0xff]
        %v644 = vld [vmem:[%s377 + $0x330] sm:$0xff]
        %v645 = vld [vmem:[%s377 + $0x338] sm:$0xff]
        %v646 = vld [vmem:[%s377 + $0x340] sm:$0xff]
        %v647 = vld [vmem:[%s377 + $0x348] sm:$0xff]
        %v648 = vld [vmem:[%s377 + $0x350] sm:$0xff]
        %v649 = vld [vmem:[%s377 + $0x358] sm:$0xff]
        %v650 = vld [vmem:[%s377 + $0x360] sm:$0xff]
        %v651 = vld [vmem:[%s377 + $0x368] sm:$0xff]
        %v652 = vld [vmem:[%s377 + $0x370] sm:$0xff]
        %v653 = vld [vmem:[%s377 + $0x378] sm:$0xff]
        %v654 = vld [vmem:[%s377 + $0x380] sm:$0xff]
        %v655 = vld [vmem:[%s377 + $0x388] sm:$0xff]
        %v656 = vld [vmem:[%s377 + $0x390] sm:$0xff]
        %v657 = vld [vmem:[%s377 + $0x398] sm:$0xff]
        %v658 = vld [vmem:[%s377 + $0x3a0] sm:$0xff]
        %v659 = vld [vmem:[%s377 + $0x3a8] sm:$0xff]
        %v660 = vld [vmem:[%s377 + $0x3b0] sm:$0xff]
        %v661 = vld [vmem:[%s377 + $0x3b8] sm:$0xff]
        %v662 = vld [vmem:[%s377 + $0x3c0] sm:$0xff]
        %v663 = vld [vmem:[%s377 + $0x3c8] sm:$0xff]
        %v664 = vld [vmem:[%s377 + $0x3d0] sm:$0xff]
        %v665 = vld [vmem:[%s377 + $0x3d8] sm:$0xff]
        %v666 = vld [vmem:[%s377 + $0x3e0] sm:$0xff]
        %v667 = vld [vmem:[%s377 + $0x3e8] sm:$0xff]
        %v668 = vld [vmem:[%s377 + $0x3f0] sm:$0xff]
        %v669 = vld [vmem:[%s377 + $0x3f8] sm:$0xff]
        %v670 = vld [vmem:[#allocation11] sm:$0xff]
        %v671 = vld [vmem:[#allocation11 + $0x8] sm:$0xff]
        %v672 = vld [vmem:[#allocation11 + $0x10] sm:$0xff]
        %v673 = vld [vmem:[#allocation11 + $0x18] sm:$0xff]
        %v674 = vld [vmem:[#allocation11 + $0x20] sm:$0xff]
        %v675 = vld [vmem:[#allocation11 + $0x28] sm:$0xff]
        %v676 = vld [vmem:[#allocation11 + $0x30] sm:$0xff]
        %v677 = vld [vmem:[#allocation11 + $0x38] sm:$0xff]
        %v678 = vld [vmem:[#allocation11 + $0x40] sm:$0xff]
        %v679 = vld [vmem:[#allocation11 + $0x48] sm:$0xff]
        %v680 = vld [vmem:[#allocation11 + $0x50] sm:$0xff]
        %v681 = vld [vmem:[#allocation11 + $0x58] sm:$0xff]
        %v682 = vld [vmem:[#allocation11 + $0x60] sm:$0xff]
        %v683 = vld [vmem:[#allocation11 + $0x68] sm:$0xff]
        %v684 = vld [vmem:[#allocation11 + $0x70] sm:$0xff]
        %v685 = vld [vmem:[#allocation11 + $0x78] sm:$0xff]
        %686 = vmatprep.subr.mxu0 0.0
        %687 = vmatpush1.msra.mxu0 %v670
        %688 = vmatprep.subr.mxu0 0.0
        %689 = vmatpush1.msra.mxu0 %v671
        %690 = vmatprep.subr.mxu0 0.0
        %691 = vmatpush1.msra.mxu0 %v672
        %692 = vmatprep.subr.mxu0 0.0
        %693 = vmatpush1.msra.mxu0 %v673
        %694 = vmatprep.subr.mxu0 0.0
        %695 = vmatpush1.msra.mxu0 %v674
        %696 = vmatprep.subr.mxu0 0.0
        %697 = vmatpush1.msra.mxu0 %v675
        %698 = vmatprep.subr.mxu0 0.0
        %699 = vmatpush1.msra.mxu0 %v676
        %700 = vmatprep.subr.mxu0 0.0
        %701 = vmatpush1.msra.mxu0 %v677
        %702 = vmatprep.subr.mxu0 0.0
        %703 = vmatpush1.msra.mxu0 %v678
        %704 = vmatprep.subr.mxu0 0.0
        %705 = vmatpush1.msra.mxu0 %v679
        %706 = vmatprep.subr.mxu0 0.0
        %707 = vmatpush1.msra.mxu0 %v680
        %708 = vmatprep.subr.mxu0 0.0
        %709 = vmatpush1.msra.mxu0 %v681
        %710 = vmatprep.subr.mxu0 0.0
        %711 = vmatpush1.msra.mxu0 %v682
        %712 = vmatprep.subr.mxu0 0.0
        %713 = vmatpush1.msra.mxu0 %v683
        %714 = vmatprep.subr.mxu0 0.0
        %715 = vmatpush1.msra.mxu0 %v684
        %716 = vmatprep.subr.mxu0 0.0
        %717 = vmatpush1.msra.mxu0 %v685
        %718 = vmatprep.subr.mxu0 0.0
        %719 = vmatpush1.msra.mxu0 0.0
        %720 = vmatprep.subr.mxu0 0.0
        %721 = vmatpush1.msra.mxu0 0.0
        %722 = vmatprep.subr.mxu0 0.0
        %723 = vmatpush1.msra.mxu0 0.0
        %724 = vmatprep.subr.mxu0 0.0
        %725 = vmatpush1.msra.mxu0 0.0
        %726 = vmatprep.subr.mxu0 0.0
        %727 = vmatpush1.msra.mxu0 0.0
        %728 = vmatprep.subr.mxu0 0.0
        %729 = vmatpush1.msra.mxu0 0.0
        %730 = vmatprep.subr.mxu0 0.0
        %731 = vmatpush1.msra.mxu0 0.0
        %732 = vmatprep.subr.mxu0 0.0
        %733 = vmatpush1.msra.mxu0 0.0
        %734 = vmatprep.subr.mxu0 0.0
        %735 = vmatpush1.msra.mxu0 0.0
        %736 = vmatprep.subr.mxu0 0.0
        %737 = vmatpush1.msra.mxu0 0.0
        %738 = vmatprep.subr.mxu0 0.0
        %739 = vmatpush1.msra.mxu0 0.0
        %740 = vmatprep.subr.mxu0 0.0
        %741 = vmatpush1.msra.mxu0 0.0
        %742 = vmatprep.subr.mxu0 0.0
        %743 = vmatpush1.msra.mxu0 0.0
        %744 = vmatprep.subr.mxu0 0.0
        %745 = vmatpush1.msra.mxu0 0.0
        %746 = vmatprep.subr.mxu0 0.0
        %747 = vmatpush1.msra.mxu0 0.0
        %748 = vmatprep.subr.mxu0 0.0
        %749 = vmatpush1.msra.mxu0 0.0
        %750 = vmatprep.mubr.f32.mxu0 0.0
        %751 = vmatmul.mubr.f32.gmra.mrb[0].mxu0 %v542
        %v752 = vpop.f32.mrb[0].mxu0
        %v753 = vadd.f32 0.0, %v752
        %v754 = vpop.f32.mrb[0].mxu0
        %755 = vmatprep.mubr.f32.mxu0 0.0
        %756 = vmatmul.mubr.f32.gmra.mrb[0].mxu0 %v543
        %v757 = vpop.f32.mrb[0].mxu0
        %v758 = vadd.f32 0.0, %v757
        %v759 = vpop.f32.mrb[0].mxu0
        %760 = vmatprep.mubr.f32.mxu0 0.0
        %761 = vmatmul.mubr.f32.gmra.mrb[0].mxu0 %v544
        %v762 = vpop.f32.mrb[0].mxu0
        %v763 = vadd.f32 0.0, %v762
        %v764 = vpop.f32.mrb[0].mxu0
        %765 = vmatprep.mubr.f32.mxu0 0.0
        %766 = vmatmul.mubr.f32.gmra.mrb[0].mxu0 %v545
        %v767 = vpop.f32.mrb[0].mxu0
        %v768 = vadd.f32 0.0, %v767
        %v769 = vpop.f32.mrb[0].mxu0
        %770 = vmatprep.mubr.f32.mxu0 0.0
        %771 = vmatmul.mubr.f32.gmra.mrb[0].mxu0 %v546
        %v772 = vpop.f32.mrb[0].mxu0
        %v773 = vadd.f32 0.0, %v772
        %v774 = vpop.f32.mrb[0].mxu0
        %775 = vmatprep.mubr.f32.mxu0 0.0
        %776 = vmatmul.mubr.f32.gmra.mrb[0].mxu0 %v547
        %v777 = vpop.f32.mrb[0].mxu0
        %v778 = vadd.f32 0.0, %v777
        %v779 = vpop.f32.mrb[0].mxu0
        %780 = vmatprep.mubr.f32.mxu0 0.0
        %781 = vmatmul.mubr.f32.gmra.mrb[0].mxu0 %v548
        %v782 = vpop.f32.mrb[0].mxu0
        %v783 = vadd.f32 0.0, %v782
        %v784 = vpop.f32.mrb[0].mxu0
        %785 = vmatprep.mubr.f32.mxu0 0.0
        %786 = vmatmul.mubr.f32.gmra.mrb[0].mxu0 %v549
        %v787 = vpop.f32.mrb[0].mxu0
        %v788 = vadd.f32 0.0, %v787
        %v789 = vpop.f32.mrb[0].mxu0
        %790 = vmatprep.mubr.f32.mxu0 0.0
        %791 = vmatmul.mubr.f32.gmra.mrb[0].mxu0 %v550
        %v792 = vpop.f32.mrb[0].mxu0
        %v793 = vadd.f32 0.0, %v792
        %v794 = vpop.f32.mrb[0].mxu0
        %795 = vmatprep.mubr.f32.mxu0 0.0
        %796 = vmatmul.mubr.f32.gmra.mrb[0].mxu0 %v551
        %v797 = vpop.f32.mrb[0].mxu0
        %v798 = vadd.f32 0.0, %v797
        %v799 = vpop.f32.mrb[0].mxu0
        %800 = vmatprep.mubr.f32.mxu0 0.0
        %801 = vmatmul.mubr.f32.gmra.mrb[0].mxu0 %v552
        %v802 = vpop.f32.mrb[0].mxu0
        %v803 = vadd.f32 0.0, %v802
        %v804 = vpop.f32.mrb[0].mxu0
        %805 = vmatprep.mubr.f32.mxu0 0.0
        %806 = vmatmul.mubr.f32.gmra.mrb[0].mxu0 %v553
        %v807 = vpop.f32.mrb[0].mxu0
        %v808 = vadd.f32 0.0, %v807
        %v809 = vpop.f32.mrb[0].mxu0
        %810 = vmatprep.mubr.f32.mxu0 0.0
        %811 = vmatmul.mubr.f32.gmra.mrb[0].mxu0 %v554
        %v812 = vpop.f32.mrb[0].mxu0
        %v813 = vadd.f32 0.0, %v812
        %v814 = vpop.f32.mrb[0].mxu0
        %815 = vmatprep.mubr.f32.mxu0 0.0
        %816 = vmatmul.mubr.f32.gmra.mrb[0].mxu0 %v555
        %v817 = vpop.f32.mrb[0].mxu0
        %v818 = vadd.f32 0.0, %v817
        %v819 = vpop.f32.mrb[0].mxu0
        %820 = vmatprep.mubr.f32.mxu0 0.0
        %821 = vmatmul.mubr.f32.gmra.mrb[0].mxu0 %v556
        %v822 = vpop.f32.mrb[0].mxu0
        %v823 = vadd.f32 0.0, %v822
        %v824 = vpop.f32.mrb[0].mxu0
        %825 = vmatprep.mubr.f32.mxu0 0.0
        %826 = vmatmul.mubr.f32.gmra.mrb[0].mxu0 %v557
        %v827 = vpop.f32.mrb[0].mxu0
        %v828 = vadd.f32 0.0, %v827
        %v829 = vpop.f32.mrb[0].mxu0
        %830 = vmatprep.mubr.f32.mxu0 0.0
        %831 = vmatmul.mubr.f32.gmra.mrb[0].mxu0 %v558
        %v832 = vpop.f32.mrb[0].mxu0
        %v833 = vadd.f32 0.0, %v832
        %v834 = vpop.f32.mrb[0].mxu0
        %835 = vmatprep.mubr.f32.mxu0 0.0
        %836 = vmatmul.mubr.f32.gmra.mrb[0].mxu0 %v559
        %v837 = vpop.f32.mrb[0].mxu0
        %v838 = vadd.f32 0.0, %v837
        %v839 = vpop.f32.mrb[0].mxu0
        %840 = vmatprep.mubr.f32.mxu0 0.0
        %841 = vmatmul.mubr.f32.gmra.mrb[0].mxu0 %v560
        %v842 = vpop.f32.mrb[0].mxu0
        %v843 = vadd.f32 0.0, %v842
        %v844 = vpop.f32.mrb[0].mxu0
        %845 = vmatprep.mubr.f32.mxu0 0.0
        %846 = vmatmul.mubr.f32.gmra.mrb[0].mxu0 %v561
        %v847 = vpop.f32.mrb[0].mxu0
        %v848 = vadd.f32 0.0, %v847
        %v849 = vpop.f32.mrb[0].mxu0
        %850 = vmatprep.mubr.f32.mxu0 0.0
        %851 = vmatmul.mubr.f32.gmra.mrb[0].mxu0 %v562
        %v852 = vpop.f32.mrb[0].mxu0
        %v853 = vadd.f32 0.0, %v852
        %v854 = vpop.f32.mrb[0].mxu0
        %855 = vmatprep.mubr.f32.mxu0 0.0
        %856 = vmatmul.mubr.f32.gmra.mrb[0].mxu0 %v563
        %v857 = vpop.f32.mrb[0].mxu0
        %v858 = vadd.f32 0.0, %v857
        %v859 = vpop.f32.mrb[0].mxu0
        %860 = vmatprep.mubr.f32.mxu0 0.0
        %861 = vmatmul.mubr.f32.gmra.mrb[0].mxu0 %v564
        %v862 = vpop.f32.mrb[0].mxu0
        %v863 = vadd.f32 0.0, %v862
        %v864 = vpop.f32.mrb[0].mxu0
        %865 = vmatprep.mubr.f32.mxu0 0.0
        %866 = vmatmul.mubr.f32.gmra.mrb[0].mxu0 %v565
        %v867 = vpop.f32.mrb[0].mxu0
        %v868 = vadd.f32 0.0, %v867
        %v869 = vpop.f32.mrb[0].mxu0
        %870 = vmatprep.mubr.f32.mxu0 0.0
        %871 = vmatmul.mubr.f32.gmra.mrb[0].mxu0 %v566
        %v872 = vpop.f32.mrb[0].mxu0
        %v873 = vadd.f32 0.0, %v872
        %v874 = vpop.f32.mrb[0].mxu0
        %875 = vmatprep.mubr.f32.mxu0 0.0
        %876 = vmatmul.mubr.f32.gmra.mrb[0].mxu0 %v567
        %v877 = vpop.f32.mrb[0].mxu0
        %v878 = vadd.f32 0.0, %v877
        %v879 = vpop.f32.mrb[0].mxu0
        %880 = vmatprep.mubr.f32.mxu0 0.0
        %881 = vmatmul.mubr.f32.gmra.mrb[0].mxu0 %v568
        %v882 = vpop.f32.mrb[0].mxu0
        %v883 = vadd.f32 0.0, %v882
        %v884 = vpop.f32.mrb[0].mxu0
        %885 = vmatprep.mubr.f32.mxu0 0.0
        %886 = vmatmul.mubr.f32.gmra.mrb[0].mxu0 %v569
        %v887 = vpop.f32.mrb[0].mxu0
        %v888 = vadd.f32 0.0, %v887
        %v889 = vpop.f32.mrb[0].mxu0
        %890 = vmatprep.mubr.f32.mxu0 0.0
        %891 = vmatmul.mubr.f32.gmra.mrb[0].mxu0 %v570
        %v892 = vpop.f32.mrb[0].mxu0
        %v893 = vadd.f32 0.0, %v892
        %v894 = vpop.f32.mrb[0].mxu0
        %895 = vmatprep.mubr.f32.mxu0 0.0
        %896 = vmatmul.mubr.f32.gmra.mrb[0].mxu0 %v571
        %v897 = vpop.f32.mrb[0].mxu0
        %v898 = vadd.f32 0.0, %v897
        %v899 = vpop.f32.mrb[0].mxu0
        %900 = vmatprep.mubr.f32.mxu0 0.0
        %901 = vmatmul.mubr.f32.gmra.mrb[0].mxu0 %v572
        %v902 = vpop.f32.mrb[0].mxu0
        %v903 = vadd.f32 0.0, %v902
        %v904 = vpop.f32.mrb[0].mxu0
        %905 = vmatprep.mubr.f32.mxu0 0.0
        %906 = vmatmul.mubr.f32.gmra.mrb[0].mxu0 %v573
        %v907 = vpop.f32.mrb[0].mxu0
        %v908 = vadd.f32 0.0, %v907
        %v909 = vpop.f32.mrb[0].mxu0
        %910 = vmatprep.mubr.f32.mxu0 0.0
        %911 = vmatmul.mubr.f32.gmra.mrb[0].mxu0 %v574
        %v912 = vpop.f32.mrb[0].mxu0
        %v913 = vadd.f32 0.0, %v912
        %v914 = vpop.f32.mrb[0].mxu0
        %915 = vmatprep.mubr.f32.mxu0 0.0
        %916 = vmatmul.mubr.f32.gmra.mrb[0].mxu0 %v575
        %v917 = vpop.f32.mrb[0].mxu0
        %v918 = vadd.f32 0.0, %v917
        %v919 = vpop.f32.mrb[0].mxu0
        %920 = vmatprep.mubr.f32.mxu0 0.0
        %921 = vmatmul.mubr.f32.gmra.mrb[0].mxu0 %v576
        %v922 = vpop.f32.mrb[0].mxu0
        %v923 = vadd.f32 0.0, %v922
        %v924 = vpop.f32.mrb[0].mxu0
        %925 = vmatprep.mubr.f32.mxu0 0.0
        %926 = vmatmul.mubr.f32.gmra.mrb[0].mxu0 %v577
        %v927 = vpop.f32.mrb[0].mxu0
        %v928 = vadd.f32 0.0, %v927
        %v929 = vpop.f32.mrb[0].mxu0
        %930 = vmatprep.mubr.f32.mxu0 0.0
        %931 = vmatmul.mubr.f32.gmra.mrb[0].mxu0 %v578
        %v932 = vpop.f32.mrb[0].mxu0
        %v933 = vadd.f32 0.0, %v932
        %v934 = vpop.f32.mrb[0].mxu0
        %935 = vmatprep.mubr.f32.mxu0 0.0
        %936 = vmatmul.mubr.f32.gmra.mrb[0].mxu0 %v579
        %v937 = vpop.f32.mrb[0].mxu0
        %v938 = vadd.f32 0.0, %v937
        %v939 = vpop.f32.mrb[0].mxu0
        %940 = vmatprep.mubr.f32.mxu0 0.0
        %941 = vmatmul.mubr.f32.gmra.mrb[0].mxu0 %v580
        %v942 = vpop.f32.mrb[0].mxu0
        %v943 = vadd.f32 0.0, %v942
        %v944 = vpop.f32.mrb[0].mxu0
        %945 = vmatprep.mubr.f32.mxu0 0.0
        %946 = vmatmul.mubr.f32.gmra.mrb[0].mxu0 %v581
        %v947 = vpop.f32.mrb[0].mxu0
        %v948 = vadd.f32 0.0, %v947
        %v949 = vpop.f32.mrb[0].mxu0
        %950 = vmatprep.mubr.f32.mxu0 0.0
        %951 = vmatmul.mubr.f32.gmra.mrb[0].mxu0 %v582
        %v952 = vpop.f32.mrb[0].mxu0
        %v953 = vadd.f32 0.0, %v952
        %v954 = vpop.f32.mrb[0].mxu0
        %955 = vmatprep.mubr.f32.mxu0 0.0
        %956 = vmatmul.mubr.f32.gmra.mrb[0].mxu0 %v583
        %v957 = vpop.f32.mrb[0].mxu0
        %v958 = vadd.f32 0.0, %v957
        %v959 = vpop.f32.mrb[0].mxu0
        %960 = vmatprep.mubr.f32.mxu0 0.0
        %961 = vmatmul.mubr.f32.gmra.mrb[0].mxu0 %v584
        %v962 = vpop.f32.mrb[0].mxu0
        %v963 = vadd.f32 0.0, %v962
        %v964 = vpop.f32.mrb[0].mxu0
        %965 = vmatprep.mubr.f32.mxu0 0.0
        %966 = vmatmul.mubr.f32.gmra.mrb[0].mxu0 %v585
        %v967 = vpop.f32.mrb[0].mxu0
        %v968 = vadd.f32 0.0, %v967
        %v969 = vpop.f32.mrb[0].mxu0
        %970 = vmatprep.mubr.f32.mxu0 0.0
        %971 = vmatmul.mubr.f32.gmra.mrb[0].mxu0 %v586
        %v972 = vpop.f32.mrb[0].mxu0
        %v973 = vadd.f32 0.0, %v972
        %v974 = vpop.f32.mrb[0].mxu0
        %975 = vmatprep.mubr.f32.mxu0 0.0
        %976 = vmatmul.mubr.f32.gmra.mrb[0].mxu0 %v587
        %v977 = vpop.f32.mrb[0].mxu0
        %v978 = vadd.f32 0.0, %v977
        %v979 = vpop.f32.mrb[0].mxu0
        %980 = vmatprep.mubr.f32.mxu0 0.0
        %981 = vmatmul.mubr.f32.gmra.mrb[0].mxu0 %v588
        %v982 = vpop.f32.mrb[0].mxu0
        %v983 = vadd.f32 0.0, %v982
        %v984 = vpop.f32.mrb[0].mxu0
        %985 = vmatprep.mubr.f32.mxu0 0.0
        %986 = vmatmul.mubr.f32.gmra.mrb[0].mxu0 %v589
        %v987 = vpop.f32.mrb[0].mxu0
        %v988 = vadd.f32 0.0, %v987
        %v989 = vpop.f32.mrb[0].mxu0
        %990 = vmatprep.mubr.f32.mxu0 0.0
        %991 = vmatmul.mubr.f32.gmra.mrb[0].mxu0 %v590
        %v992 = vpop.f32.mrb[0].mxu0
        %v993 = vadd.f32 0.0, %v992
        %v994 = vpop.f32.mrb[0].mxu0
        %995 = vmatprep.mubr.f32.mxu0 0.0
        %996 = vmatmul.mubr.f32.gmra.mrb[0].mxu0 %v591
        %v997 = vpop.f32.mrb[0].mxu0
        %v998 = vadd.f32 0.0, %v997
        %v999 = vpop.f32.mrb[0].mxu0
        %1000 = vmatprep.mubr.f32.mxu0 0.0
        %1001 = vmatmul.mubr.f32.gmra.mrb[0].mxu0 %v592
        %v1002 = vpop.f32.mrb[0].mxu0
        %v1003 = vadd.f32 0.0, %v1002
        %v1004 = vpop.f32.mrb[0].mxu0
        %1005 = vmatprep.mubr.f32.mxu0 0.0
        %1006 = vmatmul.mubr.f32.gmra.mrb[0].mxu0 %v593
        %v1007 = vpop.f32.mrb[0].mxu0
        %v1008 = vadd.f32 0.0, %v1007
        %v1009 = vpop.f32.mrb[0].mxu0
        %1010 = vmatprep.mubr.f32.mxu0 0.0
        %1011 = vmatmul.mubr.f32.gmra.mrb[0].mxu0 %v594
        %v1012 = vpop.f32.mrb[0].mxu0
        %v1013 = vadd.f32 0.0, %v1012
        %v1014 = vpop.f32.mrb[0].mxu0
        %1015 = vmatprep.mubr.f32.mxu0 0.0
        %1016 = vmatmul.mubr.f32.gmra.mrb[0].mxu0 %v595
        %v1017 = vpop.f32.mrb[0].mxu0
        %v1018 = vadd.f32 0.0, %v1017
        %v1019 = vpop.f32.mrb[0].mxu0
        %1020 = vmatprep.mubr.f32.mxu0 0.0
        %1021 = vmatmul.mubr.f32.gmra.mrb[0].mxu0 %v596
        %v1022 = vpop.f32.mrb[0].mxu0
        %v1023 = vadd.f32 0.0, %v1022
        %v1024 = vpop.f32.mrb[0].mxu0
        %1025 = vmatprep.mubr.f32.mxu0 0.0
        %1026 = vmatmul.mubr.f32.gmra.mrb[0].mxu0 %v597
        %v1027 = vpop.f32.mrb[0].mxu0
        %v1028 = vadd.f32 0.0, %v1027
        %v1029 = vpop.f32.mrb[0].mxu0
        %1030 = vmatprep.mubr.f32.mxu0 0.0
        %1031 = vmatmul.mubr.f32.gmra.mrb[0].mxu0 %v598
        %v1032 = vpop.f32.mrb[0].mxu0
        %v1033 = vadd.f32 0.0, %v1032
        %v1034 = vpop.f32.mrb[0].mxu0
        %1035 = vmatprep.mubr.f32.mxu0 0.0
        %1036 = vmatmul.mubr.f32.gmra.mrb[0].mxu0 %v599
        %v1037 = vpop.f32.mrb[0].mxu0
        %v1038 = vadd.f32 0.0, %v1037
        %v1039 = vpop.f32.mrb[0].mxu0
        %1040 = vmatprep.mubr.f32.mxu0 0.0
        %1041 = vmatmul.mubr.f32.gmra.mrb[0].mxu0 %v600
        %v1042 = vpop.f32.mrb[0].mxu0
        %v1043 = vadd.f32 0.0, %v1042
        %v1044 = vpop.f32.mrb[0].mxu0
        %1045 = vmatprep.mubr.f32.mxu0 0.0
        %1046 = vmatmul.mubr.f32.gmra.mrb[0].mxu0 %v601
        %v1047 = vpop.f32.mrb[0].mxu0
        %v1048 = vadd.f32 0.0, %v1047
        %v1049 = vpop.f32.mrb[0].mxu0
        %1050 = vmatprep.mubr.f32.mxu0 0.0
        %1051 = vmatmul.mubr.f32.gmra.mrb[0].mxu0 %v602
        %v1052 = vpop.f32.mrb[0].mxu0
        %v1053 = vadd.f32 0.0, %v1052
        %v1054 = vpop.f32.mrb[0].mxu0
        %1055 = vmatprep.mubr.f32.mxu0 0.0
        %1056 = vmatmul.mubr.f32.gmra.mrb[0].mxu0 %v603
        %v1057 = vpop.f32.mrb[0].mxu0
        %v1058 = vadd.f32 0.0, %v1057
        %v1059 = vpop.f32.mrb[0].mxu0
        %1060 = vmatprep.mubr.f32.mxu0 0.0
        %1061 = vmatmul.mubr.f32.gmra.mrb[0].mxu0 %v604
        %v1062 = vpop.f32.mrb[0].mxu0
        %v1063 = vadd.f32 0.0, %v1062
        %v1064 = vpop.f32.mrb[0].mxu0
        %1065 = vmatprep.mubr.f32.mxu0 0.0
        %1066 = vmatmul.mubr.f32.gmra.mrb[0].mxu0 %v605
        %v1067 = vpop.f32.mrb[0].mxu0
        %v1068 = vadd.f32 0.0, %v1067
        %v1069 = vpop.f32.mrb[0].mxu0
        %1070 = vmatprep.mubr.f32.mxu0 0.0
        %1071 = vmatmul.mubr.f32.gmra.mrb[0].mxu0 %v606
        %v1072 = vpop.f32.mrb[0].mxu0
        %v1073 = vadd.f32 0.0, %v1072
        %v1074 = vpop.f32.mrb[0].mxu0
        %1075 = vmatprep.mubr.f32.mxu0 0.0
        %1076 = vmatmul.mubr.f32.gmra.mrb[0].mxu0 %v607
        %v1077 = vpop.f32.mrb[0].mxu0
        %v1078 = vadd.f32 0.0, %v1077
        %v1079 = vpop.f32.mrb[0].mxu0
        %1080 = vmatprep.mubr.f32.mxu0 0.0
        %1081 = vmatmul.mubr.f32.gmra.mrb[0].mxu0 %v608
        %v1082 = vpop.f32.mrb[0].mxu0
        %v1083 = vadd.f32 0.0, %v1082
        %v1084 = vpop.f32.mrb[0].mxu0
        %1085 = vmatprep.mubr.f32.mxu0 0.0
        %1086 = vmatmul.mubr.f32.gmra.mrb[0].mxu0 %v609
        %v1087 = vpop.f32.mrb[0].mxu0
        %v1088 = vadd.f32 0.0, %v1087
        %v1089 = vpop.f32.mrb[0].mxu0
        %1090 = vmatprep.mubr.f32.mxu0 0.0
        %1091 = vmatmul.mubr.f32.gmra.mrb[0].mxu0 %v610
        %v1092 = vpop.f32.mrb[0].mxu0
        %v1093 = vadd.f32 0.0, %v1092
        %v1094 = vpop.f32.mrb[0].mxu0
        %1095 = vmatprep.mubr.f32.mxu0 0.0
        %1096 = vmatmul.mubr.f32.gmra.mrb[0].mxu0 %v611
        %v1097 = vpop.f32.mrb[0].mxu0
        %v1098 = vadd.f32 0.0, %v1097
        %v1099 = vpop.f32.mrb[0].mxu0
        %1100 = vmatprep.mubr.f32.mxu0 0.0
        %1101 = vmatmul.mubr.f32.gmra.mrb[0].mxu0 %v612
        %v1102 = vpop.f32.mrb[0].mxu0
        %v1103 = vadd.f32 0.0, %v1102
        %v1104 = vpop.f32.mrb[0].mxu0
        %1105 = vmatprep.mubr.f32.mxu0 0.0
        %1106 = vmatmul.mubr.f32.gmra.mrb[0].mxu0 %v613
        %v1107 = vpop.f32.mrb[0].mxu0
        %v1108 = vadd.f32 0.0, %v1107
        %v1109 = vpop.f32.mrb[0].mxu0
        %1110 = vmatprep.mubr.f32.mxu0 0.0
        %1111 = vmatmul.mubr.f32.gmra.mrb[0].mxu0 %v614
        %v1112 = vpop.f32.mrb[0].mxu0
        %v1113 = vadd.f32 0.0, %v1112
        %v1114 = vpop.f32.mrb[0].mxu0
        %1115 = vmatprep.mubr.f32.mxu0 0.0
        %1116 = vmatmul.mubr.f32.gmra.mrb[0].mxu0 %v615
        %v1117 = vpop.f32.mrb[0].mxu0
        %v1118 = vadd.f32 0.0, %v1117
        %v1119 = vpop.f32.mrb[0].mxu0
        %1120 = vmatprep.mubr.f32.mxu0 0.0
        %1121 = vmatmul.mubr.f32.gmra.mrb[0].mxu0 %v616
        %v1122 = vpop.f32.mrb[0].mxu0
        %v1123 = vadd.f32 0.0, %v1122
        %v1124 = vpop.f32.mrb[0].mxu0
        %1125 = vmatprep.mubr.f32.mxu0 0.0
        %1126 = vmatmul.mubr.f32.gmra.mrb[0].mxu0 %v617
        %v1127 = vpop.f32.mrb[0].mxu0
        %v1128 = vadd.f32 0.0, %v1127
        %v1129 = vpop.f32.mrb[0].mxu0
        %1130 = vmatprep.mubr.f32.mxu0 0.0
        %1131 = vmatmul.mubr.f32.gmra.mrb[0].mxu0 %v618
        %v1132 = vpop.f32.mrb[0].mxu0
        %v1133 = vadd.f32 0.0, %v1132
        %v1134 = vpop.f32.mrb[0].mxu0
        %1135 = vmatprep.mubr.f32.mxu0 0.0
        %1136 = vmatmul.mubr.f32.gmra.mrb[0].mxu0 %v619
        %v1137 = vpop.f32.mrb[0].mxu0
        %v1138 = vadd.f32 0.0, %v1137
        %v1139 = vpop.f32.mrb[0].mxu0
        %1140 = vmatprep.mubr.f32.mxu0 0.0
        %1141 = vmatmul.mubr.f32.gmra.mrb[0].mxu0 %v620
        %v1142 = vpop.f32.mrb[0].mxu0
        %v1143 = vadd.f32 0.0, %v1142
        %v1144 = vpop.f32.mrb[0].mxu0
        %1145 = vmatprep.mubr.f32.mxu0 0.0
        %1146 = vmatmul.mubr.f32.gmra.mrb[0].mxu0 %v621
        %v1147 = vpop.f32.mrb[0].mxu0
        %v1148 = vadd.f32 0.0, %v1147
        %v1149 = vpop.f32.mrb[0].mxu0
        %1150 = vmatprep.mubr.f32.mxu0 0.0
        %1151 = vmatmul.mubr.f32.gmra.mrb[0].mxu0 %v622
        %v1152 = vpop.f32.mrb[0].mxu0
        %v1153 = vadd.f32 0.0, %v1152
        %v1154 = vpop.f32.mrb[0].mxu0
        %1155 = vmatprep.mubr.f32.mxu0 0.0
        %1156 = vmatmul.mubr.f32.gmra.mrb[0].mxu0 %v623
        %v1157 = vpop.f32.mrb[0].mxu0
        %v1158 = vadd.f32 0.0, %v1157
        %v1159 = vpop.f32.mrb[0].mxu0
        %1160 = vmatprep.mubr.f32.mxu0 0.0
        %1161 = vmatmul.mubr.f32.gmra.mrb[0].mxu0 %v624
        %v1162 = vpop.f32.mrb[0].mxu0
        %v1163 = vadd.f32 0.0, %v1162
        %v1164 = vpop.f32.mrb[0].mxu0
        %1165 = vmatprep.mubr.f32.mxu0 0.0
        %1166 = vmatmul.mubr.f32.gmra.mrb[0].mxu0 %v625
        %v1167 = vpop.f32.mrb[0].mxu0
        %v1168 = vadd.f32 0.0, %v1167
        %v1169 = vpop.f32.mrb[0].mxu0
        %1170 = vmatprep.mubr.f32.mxu0 0.0
        %1171 = vmatmul.mubr.f32.gmra.mrb[0].mxu0 %v626
        %v1172 = vpop.f32.mrb[0].mxu0
        %v1173 = vadd.f32 0.0, %v1172
        %v1174 = vpop.f32.mrb[0].mxu0
        %1175 = vmatprep.mubr.f32.mxu0 0.0
        %1176 = vmatmul.mubr.f32.gmra.mrb[0].mxu0 %v627
        %v1177 = vpop.f32.mrb[0].mxu0
        %v1178 = vadd.f32 0.0, %v1177
        %v1179 = vpop.f32.mrb[0].mxu0
        %1180 = vmatprep.mubr.f32.mxu0 0.0
        %1181 = vmatmul.mubr.f32.gmra.mrb[0].mxu0 %v628
        %v1182 = vpop.f32.mrb[0].mxu0
        %v1183 = vadd.f32 0.0, %v1182
        %v1184 = vpop.f32.mrb[0].mxu0
        %1185 = vmatprep.mubr.f32.mxu0 0.0
        %1186 = vmatmul.mubr.f32.gmra.mrb[0].mxu0 %v629
        %v1187 = vpop.f32.mrb[0].mxu0
        %v1188 = vadd.f32 0.0, %v1187
        %v1189 = vpop.f32.mrb[0].mxu0
        %1190 = vmatprep.mubr.f32.mxu0 0.0
        %1191 = vmatmul.mubr.f32.gmra.mrb[0].mxu0 %v630
        %v1192 = vpop.f32.mrb[0].mxu0
        %v1193 = vadd.f32 0.0, %v1192
        %v1194 = vpop.f32.mrb[0].mxu0
        %1195 = vmatprep.mubr.f32.mxu0 0.0
        %1196 = vmatmul.mubr.f32.gmra.mrb[0].mxu0 %v631
        %v1197 = vpop.f32.mrb[0].mxu0
        %v1198 = vadd.f32 0.0, %v1197
        %v1199 = vpop.f32.mrb[0].mxu0
        %1200 = vmatprep.mubr.f32.mxu0 0.0
        %1201 = vmatmul.mubr.f32.gmra.mrb[0].mxu0 %v632
        %v1202 = vpop.f32.mrb[0].mxu0
        %v1203 = vadd.f32 0.0, %v1202
        %v1204 = vpop.f32.mrb[0].mxu0
        %1205 = vmatprep.mubr.f32.mxu0 0.0
        %1206 = vmatmul.mubr.f32.gmra.mrb[0].mxu0 %v633
        %v1207 = vpop.f32.mrb[0].mxu0
        %v1208 = vadd.f32 0.0, %v1207
        %v1209 = vpop.f32.mrb[0].mxu0
        %1210 = vmatprep.mubr.f32.mxu0 0.0
        %1211 = vmatmul.mubr.f32.gmra.mrb[0].mxu0 %v634
        %v1212 = vpop.f32.mrb[0].mxu0
        %v1213 = vadd.f32 0.0, %v1212
        %v1214 = vpop.f32.mrb[0].mxu0
        %1215 = vmatprep.mubr.f32.mxu0 0.0
        %1216 = vmatmul.mubr.f32.gmra.mrb[0].mxu0 %v635
        %v1217 = vpop.f32.mrb[0].mxu0
        %v1218 = vadd.f32 0.0, %v1217
        %v1219 = vpop.f32.mrb[0].mxu0
        %1220 = vmatprep.mubr.f32.mxu0 0.0
        %1221 = vmatmul.mubr.f32.gmra.mrb[0].mxu0 %v636
        %v1222 = vpop.f32.mrb[0].mxu0
        %v1223 = vadd.f32 0.0, %v1222
        %v1224 = vpop.f32.mrb[0].mxu0
        %1225 = vmatprep.mubr.f32.mxu0 0.0
        %1226 = vmatmul.mubr.f32.gmra.mrb[0].mxu0 %v637
        %v1227 = vpop.f32.mrb[0].mxu0
        %v1228 = vadd.f32 0.0, %v1227
        %v1229 = vpop.f32.mrb[0].mxu0
        %1230 = vmatprep.mubr.f32.mxu0 0.0
        %1231 = vmatmul.mubr.f32.gmra.mrb[0].mxu0 %v638
        %v1232 = vpop.f32.mrb[0].mxu0
        %v1233 = vadd.f32 0.0, %v1232
        %v1234 = vpop.f32.mrb[0].mxu0
        %1235 = vmatprep.mubr.f32.mxu0 0.0
        %1236 = vmatmul.mubr.f32.gmra.mrb[0].mxu0 %v639
        %v1237 = vpop.f32.mrb[0].mxu0
        %v1238 = vadd.f32 0.0, %v1237
        %v1239 = vpop.f32.mrb[0].mxu0
        %1240 = vmatprep.mubr.f32.mxu0 0.0
        %1241 = vmatmul.mubr.f32.gmra.mrb[0].mxu0 %v640
        %v1242 = vpop.f32.mrb[0].mxu0
        %v1243 = vadd.f32 0.0, %v1242
        %v1244 = vpop.f32.mrb[0].mxu0
        %1245 = vmatprep.mubr.f32.mxu0 0.0
        %1246 = vmatmul.mubr.f32.gmra.mrb[0].mxu0 %v641
        %v1247 = vpop.f32.mrb[0].mxu0
        %v1248 = vadd.f32 0.0, %v1247
        %v1249 = vpop.f32.mrb[0].mxu0
        %1250 = vmatprep.mubr.f32.mxu0 0.0
        %1251 = vmatmul.mubr.f32.gmra.mrb[0].mxu0 %v642
        %v1252 = vpop.f32.mrb[0].mxu0
        %v1253 = vadd.f32 0.0, %v1252
        %v1254 = vpop.f32.mrb[0].mxu0
        %1255 = vmatprep.mubr.f32.mxu0 0.0
        %1256 = vmatmul.mubr.f32.gmra.mrb[0].mxu0 %v643
        %v1257 = vpop.f32.mrb[0].mxu0
        %v1258 = vadd.f32 0.0, %v1257
        %v1259 = vpop.f32.mrb[0].mxu0
        %1260 = vmatprep.mubr.f32.mxu0 0.0
        %1261 = vmatmul.mubr.f32.gmra.mrb[0].mxu0 %v644
        %v1262 = vpop.f32.mrb[0].mxu0
        %v1263 = vadd.f32 0.0, %v1262
        %v1264 = vpop.f32.mrb[0].mxu0
        %1265 = vmatprep.mubr.f32.mxu0 0.0
        %1266 = vmatmul.mubr.f32.gmra.mrb[0].mxu0 %v645
        %v1267 = vpop.f32.mrb[0].mxu0
        %v1268 = vadd.f32 0.0, %v1267
        %v1269 = vpop.f32.mrb[0].mxu0
        %1270 = vmatprep.mubr.f32.mxu0 0.0
        %1271 = vmatmul.mubr.f32.gmra.mrb[0].mxu0 %v646
        %v1272 = vpop.f32.mrb[0].mxu0
        %v1273 = vadd.f32 0.0, %v1272
        %v1274 = vpop.f32.mrb[0].mxu0
        %1275 = vmatprep.mubr.f32.mxu0 0.0
        %1276 = vmatmul.mubr.f32.gmra.mrb[0].mxu0 %v647
        %v1277 = vpop.f32.mrb[0].mxu0
        %v1278 = vadd.f32 0.0, %v1277
        %v1279 = vpop.f32.mrb[0].mxu0
        %1280 = vmatprep.mubr.f32.mxu0 0.0
        %1281 = vmatmul.mubr.f32.gmra.mrb[0].mxu0 %v648
        %v1282 = vpop.f32.mrb[0].mxu0
        %v1283 = vadd.f32 0.0, %v1282
        %v1284 = vpop.f32.mrb[0].mxu0
        %1285 = vmatprep.mubr.f32.mxu0 0.0
        %1286 = vmatmul.mubr.f32.gmra.mrb[0].mxu0 %v649
        %v1287 = vpop.f32.mrb[0].mxu0
        %v1288 = vadd.f32 0.0, %v1287
        %v1289 = vpop.f32.mrb[0].mxu0
        %1290 = vmatprep.mubr.f32.mxu0 0.0
        %1291 = vmatmul.mubr.f32.gmra.mrb[0].mxu0 %v650
        %v1292 = vpop.f32.mrb[0].mxu0
        %v1293 = vadd.f32 0.0, %v1292
        %v1294 = vpop.f32.mrb[0].mxu0
        %1295 = vmatprep.mubr.f32.mxu0 0.0
        %1296 = vmatmul.mubr.f32.gmra.mrb[0].mxu0 %v651
        %v1297 = vpop.f32.mrb[0].mxu0
        %v1298 = vadd.f32 0.0, %v1297
        %v1299 = vpop.f32.mrb[0].mxu0
        %1300 = vmatprep.mubr.f32.mxu0 0.0
        %1301 = vmatmul.mubr.f32.gmra.mrb[0].mxu0 %v652
        %v1302 = vpop.f32.mrb[0].mxu0
        %v1303 = vadd.f32 0.0, %v1302
        %v1304 = vpop.f32.mrb[0].mxu0
        %1305 = vmatprep.mubr.f32.mxu0 0.0
        %1306 = vmatmul.mubr.f32.gmra.mrb[0].mxu0 %v653
        %v1307 = vpop.f32.mrb[0].mxu0
        %v1308 = vadd.f32 0.0, %v1307
        %v1309 = vpop.f32.mrb[0].mxu0
        %1310 = vmatprep.mubr.f32.mxu0 0.0
        %1311 = vmatmul.mubr.f32.gmra.mrb[0].mxu0 %v654
        %v1312 = vpop.f32.mrb[0].mxu0
        %v1313 = vadd.f32 0.0, %v1312
        %v1314 = vpop.f32.mrb[0].mxu0
        %1315 = vmatprep.mubr.f32.mxu0 0.0
        %1316 = vmatmul.mubr.f32.gmra.mrb[0].mxu0 %v655
        %v1317 = vpop.f32.mrb[0].mxu0
        %v1318 = vadd.f32 0.0, %v1317
        %v1319 = vpop.f32.mrb[0].mxu0
        %1320 = vmatprep.mubr.f32.mxu0 0.0
        %1321 = vmatmul.mubr.f32.gmra.mrb[0].mxu0 %v656
        %v1322 = vpop.f32.mrb[0].mxu0
        %v1323 = vadd.f32 0.0, %v1322
        %v1324 = vpop.f32.mrb[0].mxu0
        %1325 = vmatprep.mubr.f32.mxu0 0.0
        %1326 = vmatmul.mubr.f32.gmra.mrb[0].mxu0 %v657
        %v1327 = vpop.f32.mrb[0].mxu0
        %v1328 = vadd.f32 0.0, %v1327
        %v1329 = vpop.f32.mrb[0].mxu0
        %1330 = vmatprep.mubr.f32.mxu0 0.0
        %1331 = vmatmul.mubr.f32.gmra.mrb[0].mxu0 %v658
        %v1332 = vpop.f32.mrb[0].mxu0
        %v1333 = vadd.f32 0.0, %v1332
        %v1334 = vpop.f32.mrb[0].mxu0
        %1335 = vmatprep.mubr.f32.mxu0 0.0
        %1336 = vmatmul.mubr.f32.gmra.mrb[0].mxu0 %v659
        %v1337 = vpop.f32.mrb[0].mxu0
        %v1338 = vadd.f32 0.0, %v1337
        %v1339 = vpop.f32.mrb[0].mxu0
        %1340 = vmatprep.mubr.f32.mxu0 0.0
        %1341 = vmatmul.mubr.f32.gmra.mrb[0].mxu0 %v660
        %v1342 = vpop.f32.mrb[0].mxu0
        %v1343 = vadd.f32 0.0, %v1342
        %v1344 = vpop.f32.mrb[0].mxu0
        %1345 = vmatprep.mubr.f32.mxu0 0.0
        %1346 = vmatmul.mubr.f32.gmra.mrb[0].mxu0 %v661
        %v1347 = vpop.f32.mrb[0].mxu0
        %v1348 = vadd.f32 0.0, %v1347
        %v1349 = vpop.f32.mrb[0].mxu0
        %1350 = vmatprep.mubr.f32.mxu0 0.0
        %1351 = vmatmul.mubr.f32.gmra.mrb[0].mxu0 %v662
        %v1352 = vpop.f32.mrb[0].mxu0
        %v1353 = vadd.f32 0.0, %v1352
        %v1354 = vpop.f32.mrb[0].mxu0
        %1355 = vmatprep.mubr.f32.mxu0 0.0
        %1356 = vmatmul.mubr.f32.gmra.mrb[0].mxu0 %v663
        %v1357 = vpop.f32.mrb[0].mxu0
        %v1358 = vadd.f32 0.0, %v1357
        %v1359 = vpop.f32.mrb[0].mxu0
        %1360 = vmatprep.mubr.f32.mxu0 0.0
        %1361 = vmatmul.mubr.f32.gmra.mrb[0].mxu0 %v664
        %v1362 = vpop.f32.mrb[0].mxu0
        %v1363 = vadd.f32 0.0, %v1362
        %v1364 = vpop.f32.mrb[0].mxu0
        %1365 = vmatprep.mubr.f32.mxu0 0.0
        %1366 = vmatmul.mubr.f32.gmra.mrb[0].mxu0 %v665
        %v1367 = vpop.f32.mrb[0].mxu0
        %v1368 = vadd.f32 0.0, %v1367
        %v1369 = vpop.f32.mrb[0].mxu0
        %1370 = vmatprep.mubr.f32.mxu0 0.0
        %1371 = vmatmul.mubr.f32.gmra.mrb[0].mxu0 %v666
        %v1372 = vpop.f32.mrb[0].mxu0
        %v1373 = vadd.f32 0.0, %v1372
        %v1374 = vpop.f32.mrb[0].mxu0
        %1375 = vmatprep.mubr.f32.mxu0 0.0
        %1376 = vmatmul.mubr.f32.gmra.mrb[0].mxu0 %v667
        %v1377 = vpop.f32.mrb[0].mxu0
        %v1378 = vadd.f32 0.0, %v1377
        %v1379 = vpop.f32.mrb[0].mxu0
        %1380 = vmatprep.mubr.f32.mxu0 0.0
        %1381 = vmatmul.mubr.f32.gmra.mrb[0].mxu0 %v668
        %v1382 = vpop.f32.mrb[0].mxu0
        %v1383 = vadd.f32 0.0, %v1382
        %v1384 = vpop.f32.mrb[0].mxu0
        %1385 = vmatprep.mubr.f32.mxu0 0.0
        %1386 = vmatmul.mubr.f32.gmra.mrb[0].mxu0 %v669
        %v1387 = vpop.f32.mrb[0].mxu0
        %v1388 = vadd.f32 0.0, %v1387
        %v1389 = vpop.f32.mrb[0].mxu0
        %1390 = vdwg.mxu0
        %v1391 = vmax.f32 %v753, 0.0
        %v1392 = vmax.f32 %v758, 0.0
        %v1393 = vmax.f32 %v763, 0.0
        %v1394 = vmax.f32 %v768, 0.0
        %v1395 = vmax.f32 %v773, 0.0
        %v1396 = vmax.f32 %v778, 0.0
        %v1397 = vmax.f32 %v783, 0.0
        %v1398 = vmax.f32 %v788, 0.0
        %v1399 = vmax.f32 %v793, 0.0
        %v1400 = vmax.f32 %v798, 0.0
        %v1401 = vmax.f32 %v803, 0.0
        %v1402 = vmax.f32 %v808, 0.0
        %v1403 = vmax.f32 %v813, 0.0
        %v1404 = vmax.f32 %v818, 0.0
        %v1405 = vmax.f32 %v823, 0.0
        %v1406 = vmax.f32 %v828, 0.0
        %v1407 = vmax.f32 %v833, 0.0
        %v1408 = vmax.f32 %v838, 0.0
        %v1409 = vmax.f32 %v843, 0.0
        %v1410 = vmax.f32 %v848, 0.0
        %v1411 = vmax.f32 %v853, 0.0
        %v1412 = vmax.f32 %v858, 0.0
        %v1413 = vmax.f32 %v863, 0.0
        %v1414 = vmax.f32 %v868, 0.0
        %v1415 = vmax.f32 %v873, 0.0
        %v1416 = vmax.f32 %v878, 0.0
        %v1417 = vmax.f32 %v883, 0.0
        %v1418 = vmax.f32 %v888, 0.0
        %v1419 = vmax.f32 %v893, 0.0
        %v1420 = vmax.f32 %v898, 0.0
        %v1421 = vmax.f32 %v903, 0.0
        %v1422 = vmax.f32 %v908, 0.0
        %v1423 = vmax.f32 %v913, 0.0
        %v1424 = vmax.f32 %v918, 0.0
        %v1425 = vmax.f32 %v923, 0.0
        %v1426 = vmax.f32 %v928, 0.0
        %v1427 = vmax.f32 %v933, 0.0
        %v1428 = vmax.f32 %v938, 0.0
        %v1429 = vmax.f32 %v943, 0.0
        %v1430 = vmax.f32 %v948, 0.0
        %v1431 = vmax.f32 %v953, 0.0
        %v1432 = vmax.f32 %v958, 0.0
        %v1433 = vmax.f32 %v963, 0.0
        %v1434 = vmax.f32 %v968, 0.0
        %v1435 = vmax.f32 %v973, 0.0
        %v1436 = vmax.f32 %v978, 0.0
        %v1437 = vmax.f32 %v983, 0.0
        %v1438 = vmax.f32 %v988, 0.0
        %v1439 = vmax.f32 %v993, 0.0
        %v1440 = vmax.f32 %v998, 0.0
        %v1441 = vmax.f32 %v1003, 0.0
        %v1442 = vmax.f32 %v1008, 0.0
        %v1443 = vmax.f32 %v1013, 0.0
        %v1444 = vmax.f32 %v1018, 0.0
        %v1445 = vmax.f32 %v1023, 0.0
        %v1446 = vmax.f32 %v1028, 0.0
        %v1447 = vmax.f32 %v1033, 0.0
        %v1448 = vmax.f32 %v1038, 0.0
        %v1449 = vmax.f32 %v1043, 0.0
        %v1450 = vmax.f32 %v1048, 0.0
        %v1451 = vmax.f32 %v1053, 0.0
        %v1452 = vmax.f32 %v1058, 0.0
        %v1453 = vmax.f32 %v1063, 0.0
        %v1454 = vmax.f32 %v1068, 0.0
        %v1455 = vmax.f32 %v1073, 0.0
        %v1456 = vmax.f32 %v1078, 0.0
        %v1457 = vmax.f32 %v1083, 0.0
        %v1458 = vmax.f32 %v1088, 0.0
        %v1459 = vmax.f32 %v1093, 0.0
        %v1460 = vmax.f32 %v1098, 0.0
        %v1461 = vmax.f32 %v1103, 0.0
        %v1462 = vmax.f32 %v1108, 0.0
        %v1463 = vmax.f32 %v1113, 0.0
        %v1464 = vmax.f32 %v1118, 0.0
        %v1465 = vmax.f32 %v1123, 0.0
        %v1466 = vmax.f32 %v1128, 0.0
        %v1467 = vmax.f32 %v1133, 0.0
        %v1468 = vmax.f32 %v1138, 0.0
        %v1469 = vmax.f32 %v1143, 0.0
        %v1470 = vmax.f32 %v1148, 0.0
        %v1471 = vmax.f32 %v1153, 0.0
        %v1472 = vmax.f32 %v1158, 0.0
        %v1473 = vmax.f32 %v1163, 0.0
        %v1474 = vmax.f32 %v1168, 0.0
        %v1475 = vmax.f32 %v1173, 0.0
        %v1476 = vmax.f32 %v1178, 0.0
        %v1477 = vmax.f32 %v1183, 0.0
        %v1478 = vmax.f32 %v1188, 0.0
        %v1479 = vmax.f32 %v1193, 0.0
        %v1480 = vmax.f32 %v1198, 0.0
        %v1481 = vmax.f32 %v1203, 0.0
        %v1482 = vmax.f32 %v1208, 0.0
        %v1483 = vmax.f32 %v1213, 0.0
        %v1484 = vmax.f32 %v1218, 0.0
        %v1485 = vmax.f32 %v1223, 0.0
        %v1486 = vmax.f32 %v1228, 0.0
        %v1487 = vmax.f32 %v1233, 0.0
        %v1488 = vmax.f32 %v1238, 0.0
        %v1489 = vmax.f32 %v1243, 0.0
        %v1490 = vmax.f32 %v1248, 0.0
        %v1491 = vmax.f32 %v1253, 0.0
        %v1492 = vmax.f32 %v1258, 0.0
        %v1493 = vmax.f32 %v1263, 0.0
        %v1494 = vmax.f32 %v1268, 0.0
        %v1495 = vmax.f32 %v1273, 0.0
        %v1496 = vmax.f32 %v1278, 0.0
        %v1497 = vmax.f32 %v1283, 0.0
        %v1498 = vmax.f32 %v1288, 0.0
        %v1499 = vmax.f32 %v1293, 0.0
        %v1500 = vmax.f32 %v1298, 0.0
        %v1501 = vmax.f32 %v1303, 0.0
        %v1502 = vmax.f32 %v1308, 0.0
        %v1503 = vmax.f32 %v1313, 0.0
        %v1504 = vmax.f32 %v1318, 0.0
        %v1505 = vmax.f32 %v1323, 0.0
        %v1506 = vmax.f32 %v1328, 0.0
        %v1507 = vmax.f32 %v1333, 0.0
        %v1508 = vmax.f32 %v1338, 0.0
        %v1509 = vmax.f32 %v1343, 0.0
        %v1510 = vmax.f32 %v1348, 0.0
        %v1511 = vmax.f32 %v1353, 0.0
        %v1512 = vmax.f32 %v1358, 0.0
        %v1513 = vmax.f32 %v1363, 0.0
        %v1514 = vmax.f32 %v1368, 0.0
        %v1515 = vmax.f32 %v1373, 0.0
        %v1516 = vmax.f32 %v1378, 0.0
        %v1517 = vmax.f32 %v1383, 0.0
        %v1518 = vmax.f32 %v1388, 0.0
        %v1519 = vld [vmem:[#allocation2] sm:$0xff]
        %v1521 = vcombine.high %v1519, %v1519
        %v1523 = vunpack.c.l.s4 1966171168
        %v1524 = vunpack.c.0.s8 %v1523
        %v1525 = vlaneseq
        %v1526 = vshrl.u32 %v1525, 7
        %v1527 = vsub.s32 %v1524, %v1526
        %v1528 = vrot.slane %v1519, %v1527
        %v1530 = vunpack.c.l.s4 1966171168
        %v1531 = vunpack.c.0.s8 %v1530
        %v1532 = vlaneseq
        %v1533 = vshrl.u32 %v1532, 7
        %v1534 = vsub.s32 %v1531, %v1533
        %v1535 = vrot.slane %v1521, %v1534
        %v1536 = vcombine.high %v1528, %v1528
        %v1537 = vcombine.high %v1535, %v1535
        %v1539 = vunpack.c.l.s4 1966171168
        %v1540 = vunpack.c.0.s8 %v1539
        %v1541 = vlaneseq
        %v1542 = vshrl.u32 %v1541, 7
        %v1543 = vsub.s32 %v1540, %v1542
        %v1544 = vrot.slane %v1528, %v1543
        %v1546 = vunpack.c.l.s4 1966171168
        %v1547 = vunpack.c.0.s8 %v1546
        %v1548 = vlaneseq
        %v1549 = vshrl.u32 %v1548, 7
        %v1550 = vsub.s32 %v1547, %v1549
        %v1551 = vrot.slane %v1535, %v1550
        %v1553 = vunpack.c.l.s4 1966171168
        %v1554 = vunpack.c.0.s8 %v1553
        %v1555 = vlaneseq
        %v1556 = vshrl.u32 %v1555, 7
        %v1557 = vsub.s32 %v1554, %v1556
        %v1558 = vrot.slane %v1536, %v1557
        %v1560 = vunpack.c.l.s4 1966171168
        %v1561 = vunpack.c.0.s8 %v1560
        %v1562 = vlaneseq
        %v1563 = vshrl.u32 %v1562, 7
        %v1564 = vsub.s32 %v1561, %v1563
        %v1565 = vrot.slane %v1537, %v1564
        %v1566 = vcombine.high %v1544, %v1544
        %v1567 = vcombine.high %v1551, %v1551
        %v1568 = vcombine.high %v1558, %v1558
        %v1569 = vcombine.high %v1565, %v1565
        %1578 = vmatprep.subr.mxu0 0.0
        %1579 = vmatpush1.xpose.msra.mxu0 %v1391
        %1580 = vmatprep.subr.mxu0 0.0
        %1581 = vmatpush1.xpose.msra.mxu0 %v1392
        %1582 = vmatprep.subr.mxu0 0.0
        %1583 = vmatpush1.xpose.msra.mxu0 %v1393
        %1584 = vmatprep.subr.mxu0 0.0
        %1585 = vmatpush1.xpose.msra.mxu0 %v1394
        %1586 = vmatprep.subr.mxu0 0.0
        %1587 = vmatpush1.xpose.msra.mxu0 %v1395
        %1588 = vmatprep.subr.mxu0 0.0
        %1589 = vmatpush1.xpose.msra.mxu0 %v1396
        %1590 = vmatprep.subr.mxu0 0.0
        %1591 = vmatpush1.xpose.msra.mxu0 %v1397
        %1592 = vmatprep.subr.mxu0 0.0
        %1593 = vmatpush1.xpose.msra.mxu0 %v1398
        %1594 = vmatprep.subr.mxu0 0.0
        %1595 = vmatpush1.xpose.msra.mxu0 %v1399
        %1596 = vmatprep.subr.mxu0 0.0
        %1597 = vmatpush1.xpose.msra.mxu0 %v1400
        %1598 = vmatprep.subr.mxu0 0.0
        %1599 = vmatpush1.xpose.msra.mxu0 %v1401
        %1600 = vmatprep.subr.mxu0 0.0
        %1601 = vmatpush1.xpose.msra.mxu0 %v1402
        %1602 = vmatprep.subr.mxu0 0.0
        %1603 = vmatpush1.xpose.msra.mxu0 %v1403
        %1604 = vmatprep.subr.mxu0 0.0
        %1605 = vmatpush1.xpose.msra.mxu0 %v1404
        %1606 = vmatprep.subr.mxu0 0.0
        %1607 = vmatpush1.xpose.msra.mxu0 %v1405
        %1608 = vmatprep.subr.mxu0 0.0
        %1609 = vmatpush1.xpose.msra.mxu0 %v1406
        %1610 = vmatprep.subr.mxu0 0.0
        %1611 = vmatpush1.xpose.msra.mxu0 0.0
        %1612 = vmatprep.subr.mxu0 0.0
        %1613 = vmatpush1.xpose.msra.mxu0 0.0
        %1614 = vmatprep.subr.mxu0 0.0
        %1615 = vmatpush1.xpose.msra.mxu0 0.0
        %1616 = vmatprep.subr.mxu0 0.0
        %1617 = vmatpush1.xpose.msra.mxu0 0.0
        %1618 = vmatprep.subr.mxu0 0.0
        %1619 = vmatpush1.xpose.msra.mxu0 0.0
        %1620 = vmatprep.subr.mxu0 0.0
        %1621 = vmatpush1.xpose.msra.mxu0 0.0
        %1622 = vmatprep.subr.mxu0 0.0
        %1623 = vmatpush1.xpose.msra.mxu0 0.0
        %1624 = vmatprep.subr.mxu0 0.0
        %1625 = vmatpush1.xpose.msra.mxu0 0.0
        %1626 = vmatprep.subr.mxu0 0.0
        %1627 = vmatpush1.xpose.msra.mxu0 0.0
        %1628 = vmatprep.subr.mxu0 0.0
        %1629 = vmatpush1.xpose.msra.mxu0 0.0
        %1630 = vmatprep.subr.mxu0 0.0
        %1631 = vmatpush1.xpose.msra.mxu0 0.0
        %1632 = vmatprep.subr.mxu0 0.0
        %1633 = vmatpush1.xpose.msra.mxu0 0.0
        %1634 = vmatprep.subr.mxu0 0.0
        %1635 = vmatpush1.xpose.msra.mxu0 0.0
        %1636 = vmatprep.subr.mxu0 0.0
        %1637 = vmatpush1.xpose.msra.mxu0 0.0
        %1638 = vmatprep.subr.mxu0 0.0
        %1639 = vmatpush1.xpose.msra.mxu0 0.0
        %1640 = vmatprep.subr.mxu0 0.0
        %1641 = vmatpush1.xpose.msra.mxu0 0.0
        %1642 = vmatprep.mubr.f32.mxu0 0.0
        %1643 = vmatmul.mubr.f32.gmra.mrb[0].mxu0 %v1544
        %v1644 = vpop.f32.mrb[0].mxu0
        %v1645 = vadd.f32 0.0, %v1644
        %v1646 = vpop.f32.mrb[0].mxu0
        %1647 = vdwg.mxu0
        %1648 = vmatprep.subr.mxu0 0.0
        %1649 = vmatpush1.xpose.msra.mxu0 %v1407
        %1650 = vmatprep.subr.mxu0 0.0
        %1651 = vmatpush1.xpose.msra.mxu0 %v1408
        %1652 = vmatprep.subr.mxu0 0.0
        %1653 = vmatpush1.xpose.msra.mxu0 %v1409
        %1654 = vmatprep.subr.mxu0 0.0
        %1655 = vmatpush1.xpose.msra.mxu0 %v1410
        %1656 = vmatprep.subr.mxu0 0.0
        %1657 = vmatpush1.xpose.msra.mxu0 %v1411
        %1658 = vmatprep.subr.mxu0 0.0
        %1659 = vmatpush1.xpose.msra.mxu0 %v1412
        %1660 = vmatprep.subr.mxu0 0.0
        %1661 = vmatpush1.xpose.msra.mxu0 %v1413
        %1662 = vmatprep.subr.mxu0 0.0
        %1663 = vmatpush1.xpose.msra.mxu0 %v1414
        %1664 = vmatprep.subr.mxu0 0.0
        %1665 = vmatpush1.xpose.msra.mxu0 %v1415
        %1666 = vmatprep.subr.mxu0 0.0
        %1667 = vmatpush1.xpose.msra.mxu0 %v1416
        %1668 = vmatprep.subr.mxu0 0.0
        %1669 = vmatpush1.xpose.msra.mxu0 %v1417
        %1670 = vmatprep.subr.mxu0 0.0
        %1671 = vmatpush1.xpose.msra.mxu0 %v1418
        %1672 = vmatprep.subr.mxu0 0.0
        %1673 = vmatpush1.xpose.msra.mxu0 %v1419
        %1674 = vmatprep.subr.mxu0 0.0
        %1675 = vmatpush1.xpose.msra.mxu0 %v1420
        %1676 = vmatprep.subr.mxu0 0.0
        %1677 = vmatpush1.xpose.msra.mxu0 %v1421
        %1678 = vmatprep.subr.mxu0 0.0
        %1679 = vmatpush1.xpose.msra.mxu0 %v1422
        %1680 = vmatprep.subr.mxu0 0.0
        %1681 = vmatpush1.xpose.msra.mxu0 0.0
        %1682 = vmatprep.subr.mxu0 0.0
        %1683 = vmatpush1.xpose.msra.mxu0 0.0
        %1684 = vmatprep.subr.mxu0 0.0
        %1685 = vmatpush1.xpose.msra.mxu0 0.0
        %1686 = vmatprep.subr.mxu0 0.0
        %1687 = vmatpush1.xpose.msra.mxu0 0.0
        %1688 = vmatprep.subr.mxu0 0.0
        %1689 = vmatpush1.xpose.msra.mxu0 0.0
        %1690 = vmatprep.subr.mxu0 0.0
        %1691 = vmatpush1.xpose.msra.mxu0 0.0
        %1692 = vmatprep.subr.mxu0 0.0
        %1693 = vmatpush1.xpose.msra.mxu0 0.0
        %1694 = vmatprep.subr.mxu0 0.0
        %1695 = vmatpush1.xpose.msra.mxu0 0.0
        %1696 = vmatprep.subr.mxu0 0.0
        %1697 = vmatpush1.xpose.msra.mxu0 0.0
        %1698 = vmatprep.subr.mxu0 0.0
        %1699 = vmatpush1.xpose.msra.mxu0 0.0
        %1700 = vmatprep.subr.mxu0 0.0
        %1701 = vmatpush1.xpose.msra.mxu0 0.0
        %1702 = vmatprep.subr.mxu0 0.0
        %1703 = vmatpush1.xpose.msra.mxu0 0.0
        %1704 = vmatprep.subr.mxu0 0.0
        %1705 = vmatpush1.xpose.msra.mxu0 0.0
        %1706 = vmatprep.subr.mxu0 0.0
        %1707 = vmatpush1.xpose.msra.mxu0 0.0
        %1708 = vmatprep.subr.mxu0 0.0
        %1709 = vmatpush1.xpose.msra.mxu0 0.0
        %1710 = vmatprep.subr.mxu0 0.0
        %1711 = vmatpush1.xpose.msra.mxu0 0.0
        %1712 = vmatprep.mubr.f32.mxu0 0.0
        %1713 = vmatmul.mubr.f32.gmra.mrb[0].mxu0 %v1558
        %v1714 = vpop.f32.mrb[0].mxu0
        %v1715 = vadd.f32 0.0, %v1714
        %v1716 = vpop.f32.mrb[0].mxu0
        %1717 = vdwg.mxu0
        %1718 = vmatprep.subr.mxu0 0.0
        %1719 = vmatpush1.xpose.msra.mxu0 %v1423
        %1720 = vmatprep.subr.mxu0 0.0
        %1721 = vmatpush1.xpose.msra.mxu0 %v1424
        %1722 = vmatprep.subr.mxu0 0.0
        %1723 = vmatpush1.xpose.msra.mxu0 %v1425
        %1724 = vmatprep.subr.mxu0 0.0
        %1725 = vmatpush1.xpose.msra.mxu0 %v1426
        %1726 = vmatprep.subr.mxu0 0.0
        %1727 = vmatpush1.xpose.msra.mxu0 %v1427
        %1728 = vmatprep.subr.mxu0 0.0
        %1729 = vmatpush1.xpose.msra.mxu0 %v1428
        %1730 = vmatprep.subr.mxu0 0.0
        %1731 = vmatpush1.xpose.msra.mxu0 %v1429
        %1732 = vmatprep.subr.mxu0 0.0
        %1733 = vmatpush1.xpose.msra.mxu0 %v1430
        %1734 = vmatprep.subr.mxu0 0.0
        %1735 = vmatpush1.xpose.msra.mxu0 %v1431
        %1736 = vmatprep.subr.mxu0 0.0
        %1737 = vmatpush1.xpose.msra.mxu0 %v1432
        %1738 = vmatprep.subr.mxu0 0.0
        %1739 = vmatpush1.xpose.msra.mxu0 %v1433
        %1740 = vmatprep.subr.mxu0 0.0
        %1741 = vmatpush1.xpose.msra.mxu0 %v1434
        %1742 = vmatprep.subr.mxu0 0.0
        %1743 = vmatpush1.xpose.msra.mxu0 %v1435
        %1744 = vmatprep.subr.mxu0 0.0
        %1745 = vmatpush1.xpose.msra.mxu0 %v1436
        %1746 = vmatprep.subr.mxu0 0.0
        %1747 = vmatpush1.xpose.msra.mxu0 %v1437
        %1748 = vmatprep.subr.mxu0 0.0
        %1749 = vmatpush1.xpose.msra.mxu0 %v1438
        %1750 = vmatprep.subr.mxu0 0.0
        %1751 = vmatpush1.xpose.msra.mxu0 0.0
        %1752 = vmatprep.subr.mxu0 0.0
        %1753 = vmatpush1.xpose.msra.mxu0 0.0
        %1754 = vmatprep.subr.mxu0 0.0
        %1755 = vmatpush1.xpose.msra.mxu0 0.0
        %1756 = vmatprep.subr.mxu0 0.0
        %1757 = vmatpush1.xpose.msra.mxu0 0.0
        %1758 = vmatprep.subr.mxu0 0.0
        %1759 = vmatpush1.xpose.msra.mxu0 0.0
        %1760 = vmatprep.subr.mxu0 0.0
        %1761 = vmatpush1.xpose.msra.mxu0 0.0
        %1762 = vmatprep.subr.mxu0 0.0
        %1763 = vmatpush1.xpose.msra.mxu0 0.0
        %1764 = vmatprep.subr.mxu0 0.0
        %1765 = vmatpush1.xpose.msra.mxu0 0.0
        %1766 = vmatprep.subr.mxu0 0.0
        %1767 = vmatpush1.xpose.msra.mxu0 0.0
        %1768 = vmatprep.subr.mxu0 0.0
        %1769 = vmatpush1.xpose.msra.mxu0 0.0
        %1770 = vmatprep.subr.mxu0 0.0
        %1771 = vmatpush1.xpose.msra.mxu0 0.0
        %1772 = vmatprep.subr.mxu0 0.0
        %1773 = vmatpush1.xpose.msra.mxu0 0.0
        %1774 = vmatprep.subr.mxu0 0.0
        %1775 = vmatpush1.xpose.msra.mxu0 0.0
        %1776 = vmatprep.subr.mxu0 0.0
        %1777 = vmatpush1.xpose.msra.mxu0 0.0
        %1778 = vmatprep.subr.mxu0 0.0
        %1779 = vmatpush1.xpose.msra.mxu0 0.0
        %1780 = vmatprep.subr.mxu0 0.0
        %1781 = vmatpush1.xpose.msra.mxu0 0.0
        %1782 = vmatprep.mubr.f32.mxu0 0.0
        %1783 = vmatmul.mubr.f32.gmra.mrb[0].mxu0 %v1566
        %v1784 = vpop.f32.mrb[0].mxu0
        %v1785 = vadd.f32 0.0, %v1784
        %v1786 = vpop.f32.mrb[0].mxu0
        %1787 = vdwg.mxu0
        %1788 = vmatprep.subr.mxu0 0.0
        %1789 = vmatpush1.xpose.msra.mxu0 %v1439
        %1790 = vmatprep.subr.mxu0 0.0
        %1791 = vmatpush1.xpose.msra.mxu0 %v1440
        %1792 = vmatprep.subr.mxu0 0.0
        %1793 = vmatpush1.xpose.msra.mxu0 %v1441
        %1794 = vmatprep.subr.mxu0 0.0
        %1795 = vmatpush1.xpose.msra.mxu0 %v1442
        %1796 = vmatprep.subr.mxu0 0.0
        %1797 = vmatpush1.xpose.msra.mxu0 %v1443
        %1798 = vmatprep.subr.mxu0 0.0
        %1799 = vmatpush1.xpose.msra.mxu0 %v1444
        %1800 = vmatprep.subr.mxu0 0.0
        %1801 = vmatpush1.xpose.msra.mxu0 %v1445
        %1802 = vmatprep.subr.mxu0 0.0
        %1803 = vmatpush1.xpose.msra.mxu0 %v1446
        %1804 = vmatprep.subr.mxu0 0.0
        %1805 = vmatpush1.xpose.msra.mxu0 %v1447
        %1806 = vmatprep.subr.mxu0 0.0
        %1807 = vmatpush1.xpose.msra.mxu0 %v1448
        %1808 = vmatprep.subr.mxu0 0.0
        %1809 = vmatpush1.xpose.msra.mxu0 %v1449
        %1810 = vmatprep.subr.mxu0 0.0
        %1811 = vmatpush1.xpose.msra.mxu0 %v1450
        %1812 = vmatprep.subr.mxu0 0.0
        %1813 = vmatpush1.xpose.msra.mxu0 %v1451
        %1814 = vmatprep.subr.mxu0 0.0
        %1815 = vmatpush1.xpose.msra.mxu0 %v1452
        %1816 = vmatprep.subr.mxu0 0.0
        %1817 = vmatpush1.xpose.msra.mxu0 %v1453
        %1818 = vmatprep.subr.mxu0 0.0
        %1819 = vmatpush1.xpose.msra.mxu0 %v1454
        %1820 = vmatprep.subr.mxu0 0.0
        %1821 = vmatpush1.xpose.msra.mxu0 0.0
        %1822 = vmatprep.subr.mxu0 0.0
        %1823 = vmatpush1.xpose.msra.mxu0 0.0
        %1824 = vmatprep.subr.mxu0 0.0
        %1825 = vmatpush1.xpose.msra.mxu0 0.0
        %1826 = vmatprep.subr.mxu0 0.0
        %1827 = vmatpush1.xpose.msra.mxu0 0.0
        %1828 = vmatprep.subr.mxu0 0.0
        %1829 = vmatpush1.xpose.msra.mxu0 0.0
        %1830 = vmatprep.subr.mxu0 0.0
        %1831 = vmatpush1.xpose.msra.mxu0 0.0
        %1832 = vmatprep.subr.mxu0 0.0
        %1833 = vmatpush1.xpose.msra.mxu0 0.0
        %1834 = vmatprep.subr.mxu0 0.0
        %1835 = vmatpush1.xpose.msra.mxu0 0.0
        %1836 = vmatprep.subr.mxu0 0.0
        %1837 = vmatpush1.xpose.msra.mxu0 0.0
        %1838 = vmatprep.subr.mxu0 0.0
        %1839 = vmatpush1.xpose.msra.mxu0 0.0
        %1840 = vmatprep.subr.mxu0 0.0
        %1841 = vmatpush1.xpose.msra.mxu0 0.0
        %1842 = vmatprep.subr.mxu0 0.0
        %1843 = vmatpush1.xpose.msra.mxu0 0.0
        %1844 = vmatprep.subr.mxu0 0.0
        %1845 = vmatpush1.xpose.msra.mxu0 0.0
        %1846 = vmatprep.subr.mxu0 0.0
        %1847 = vmatpush1.xpose.msra.mxu0 0.0
        %1848 = vmatprep.subr.mxu0 0.0
        %1849 = vmatpush1.xpose.msra.mxu0 0.0
        %1850 = vmatprep.subr.mxu0 0.0
        %1851 = vmatpush1.xpose.msra.mxu0 0.0
        %1852 = vmatprep.mubr.f32.mxu0 0.0
        %1853 = vmatmul.mubr.f32.gmra.mrb[0].mxu0 %v1568
        %v1854 = vpop.f32.mrb[0].mxu0
        %v1855 = vadd.f32 0.0, %v1854
        %v1856 = vpop.f32.mrb[0].mxu0
        %1857 = vdwg.mxu0
        %1858 = vmatprep.subr.mxu0 0.0
        %1859 = vmatpush1.xpose.msra.mxu0 %v1455
        %1860 = vmatprep.subr.mxu0 0.0
        %1861 = vmatpush1.xpose.msra.mxu0 %v1456
        %1862 = vmatprep.subr.mxu0 0.0
        %1863 = vmatpush1.xpose.msra.mxu0 %v1457
        %1864 = vmatprep.subr.mxu0 0.0
        %1865 = vmatpush1.xpose.msra.mxu0 %v1458
        %1866 = vmatprep.subr.mxu0 0.0
        %1867 = vmatpush1.xpose.msra.mxu0 %v1459
        %1868 = vmatprep.subr.mxu0 0.0
        %1869 = vmatpush1.xpose.msra.mxu0 %v1460
        %1870 = vmatprep.subr.mxu0 0.0
        %1871 = vmatpush1.xpose.msra.mxu0 %v1461
        %1872 = vmatprep.subr.mxu0 0.0
        %1873 = vmatpush1.xpose.msra.mxu0 %v1462
        %1874 = vmatprep.subr.mxu0 0.0
        %1875 = vmatpush1.xpose.msra.mxu0 %v1463
        %1876 = vmatprep.subr.mxu0 0.0
        %1877 = vmatpush1.xpose.msra.mxu0 %v1464
        %1878 = vmatprep.subr.mxu0 0.0
        %1879 = vmatpush1.xpose.msra.mxu0 %v1465
        %1880 = vmatprep.subr.mxu0 0.0
        %1881 = vmatpush1.xpose.msra.mxu0 %v1466
        %1882 = vmatprep.subr.mxu0 0.0
        %1883 = vmatpush1.xpose.msra.mxu0 %v1467
        %1884 = vmatprep.subr.mxu0 0.0
        %1885 = vmatpush1.xpose.msra.mxu0 %v1468
        %1886 = vmatprep.subr.mxu0 0.0
        %1887 = vmatpush1.xpose.msra.mxu0 %v1469
        %1888 = vmatprep.subr.mxu0 0.0
        %1889 = vmatpush1.xpose.msra.mxu0 %v1470
        %1890 = vmatprep.subr.mxu0 0.0
        %1891 = vmatpush1.xpose.msra.mxu0 0.0
        %1892 = vmatprep.subr.mxu0 0.0
        %1893 = vmatpush1.xpose.msra.mxu0 0.0
        %1894 = vmatprep.subr.mxu0 0.0
        %1895 = vmatpush1.xpose.msra.mxu0 0.0
        %1896 = vmatprep.subr.mxu0 0.0
        %1897 = vmatpush1.xpose.msra.mxu0 0.0
        %1898 = vmatprep.subr.mxu0 0.0
        %1899 = vmatpush1.xpose.msra.mxu0 0.0
        %1900 = vmatprep.subr.mxu0 0.0
        %1901 = vmatpush1.xpose.msra.mxu0 0.0
        %1902 = vmatprep.subr.mxu0 0.0
        %1903 = vmatpush1.xpose.msra.mxu0 0.0
        %1904 = vmatprep.subr.mxu0 0.0
        %1905 = vmatpush1.xpose.msra.mxu0 0.0
        %1906 = vmatprep.subr.mxu0 0.0
        %1907 = vmatpush1.xpose.msra.mxu0 0.0
        %1908 = vmatprep.subr.mxu0 0.0
        %1909 = vmatpush1.xpose.msra.mxu0 0.0
        %1910 = vmatprep.subr.mxu0 0.0
        %1911 = vmatpush1.xpose.msra.mxu0 0.0
        %1912 = vmatprep.subr.mxu0 0.0
        %1913 = vmatpush1.xpose.msra.mxu0 0.0
        %1914 = vmatprep.subr.mxu0 0.0
        %1915 = vmatpush1.xpose.msra.mxu0 0.0
        %1916 = vmatprep.subr.mxu0 0.0
        %1917 = vmatpush1.xpose.msra.mxu0 0.0
        %1918 = vmatprep.subr.mxu0 0.0
        %1919 = vmatpush1.xpose.msra.mxu0 0.0
        %1920 = vmatprep.subr.mxu0 0.0
        %1921 = vmatpush1.xpose.msra.mxu0 0.0
        %1922 = vmatprep.mubr.f32.mxu0 0.0
        %1923 = vmatmul.mubr.f32.gmra.mrb[0].mxu0 %v1551
        %v1924 = vpop.f32.mrb[0].mxu0
        %v1925 = vadd.f32 0.0, %v1924
        %v1926 = vpop.f32.mrb[0].mxu0
        %1927 = vdwg.mxu0
        %1928 = vmatprep.subr.mxu0 0.0
        %1929 = vmatpush1.xpose.msra.mxu0 %v1471
        %1930 = vmatprep.subr.mxu0 0.0
        %1931 = vmatpush1.xpose.msra.mxu0 %v1472
        %1932 = vmatprep.subr.mxu0 0.0
        %1933 = vmatpush1.xpose.msra.mxu0 %v1473
        %1934 = vmatprep.subr.mxu0 0.0
        %1935 = vmatpush1.xpose.msra.mxu0 %v1474
        %1936 = vmatprep.subr.mxu0 0.0
        %1937 = vmatpush1.xpose.msra.mxu0 %v1475
        %1938 = vmatprep.subr.mxu0 0.0
        %1939 = vmatpush1.xpose.msra.mxu0 %v1476
        %1940 = vmatprep.subr.mxu0 0.0
        %1941 = vmatpush1.xpose.msra.mxu0 %v1477
        %1942 = vmatprep.subr.mxu0 0.0
        %1943 = vmatpush1.xpose.msra.mxu0 %v1478
        %1944 = vmatprep.subr.mxu0 0.0
        %1945 = vmatpush1.xpose.msra.mxu0 %v1479
        %1946 = vmatprep.subr.mxu0 0.0
        %1947 = vmatpush1.xpose.msra.mxu0 %v1480
        %1948 = vmatprep.subr.mxu0 0.0
        %1949 = vmatpush1.xpose.msra.mxu0 %v1481
        %1950 = vmatprep.subr.mxu0 0.0
        %1951 = vmatpush1.xpose.msra.mxu0 %v1482
        %1952 = vmatprep.subr.mxu0 0.0
        %1953 = vmatpush1.xpose.msra.mxu0 %v1483
        %1954 = vmatprep.subr.mxu0 0.0
        %1955 = vmatpush1.xpose.msra.mxu0 %v1484
        %1956 = vmatprep.subr.mxu0 0.0
        %1957 = vmatpush1.xpose.msra.mxu0 %v1485
        %1958 = vmatprep.subr.mxu0 0.0
        %1959 = vmatpush1.xpose.msra.mxu0 %v1486
        %1960 = vmatprep.subr.mxu0 0.0
        %1961 = vmatpush1.xpose.msra.mxu0 0.0
        %1962 = vmatprep.subr.mxu0 0.0
        %1963 = vmatpush1.xpose.msra.mxu0 0.0
        %1964 = vmatprep.subr.mxu0 0.0
        %1965 = vmatpush1.xpose.msra.mxu0 0.0
        %1966 = vmatprep.subr.mxu0 0.0
        %1967 = vmatpush1.xpose.msra.mxu0 0.0
        %1968 = vmatprep.subr.mxu0 0.0
        %1969 = vmatpush1.xpose.msra.mxu0 0.0
        %1970 = vmatprep.subr.mxu0 0.0
        %1971 = vmatpush1.xpose.msra.mxu0 0.0
        %1972 = vmatprep.subr.mxu0 0.0
        %1973 = vmatpush1.xpose.msra.mxu0 0.0
        %1974 = vmatprep.subr.mxu0 0.0
        %1975 = vmatpush1.xpose.msra.mxu0 0.0
        %1976 = vmatprep.subr.mxu0 0.0
        %1977 = vmatpush1.xpose.msra.mxu0 0.0
        %1978 = vmatprep.subr.mxu0 0.0
        %1979 = vmatpush1.xpose.msra.mxu0 0.0
        %1980 = vmatprep.subr.mxu0 0.0
        %1981 = vmatpush1.xpose.msra.mxu0 0.0
        %1982 = vmatprep.subr.mxu0 0.0
        %1983 = vmatpush1.xpose.msra.mxu0 0.0
        %1984 = vmatprep.subr.mxu0 0.0
        %1985 = vmatpush1.xpose.msra.mxu0 0.0
        %1986 = vmatprep.subr.mxu0 0.0
        %1987 = vmatpush1.xpose.msra.mxu0 0.0
        %1988 = vmatprep.subr.mxu0 0.0
        %1989 = vmatpush1.xpose.msra.mxu0 0.0
        %1990 = vmatprep.subr.mxu0 0.0
        %1991 = vmatpush1.xpose.msra.mxu0 0.0
        %1992 = vmatprep.mubr.f32.mxu0 0.0
        %1993 = vmatmul.mubr.f32.gmra.mrb[0].mxu0 %v1565
        %v1994 = vpop.f32.mrb[0].mxu0
        %v1995 = vadd.f32 0.0, %v1994
        %v1996 = vpop.f32.mrb[0].mxu0
        %1997 = vdwg.mxu0
        %1998 = vmatprep.subr.mxu0 0.0
        %1999 = vmatpush1.xpose.msra.mxu0 %v1487
        %2000 = vmatprep.subr.mxu0 0.0
        %2001 = vmatpush1.xpose.msra.mxu0 %v1488
        %2002 = vmatprep.subr.mxu0 0.0
        %2003 = vmatpush1.xpose.msra.mxu0 %v1489
        %2004 = vmatprep.subr.mxu0 0.0
        %2005 = vmatpush1.xpose.msra.mxu0 %v1490
        %2006 = vmatprep.subr.mxu0 0.0
        %2007 = vmatpush1.xpose.msra.mxu0 %v1491
        %2008 = vmatprep.subr.mxu0 0.0
        %2009 = vmatpush1.xpose.msra.mxu0 %v1492
        %2010 = vmatprep.subr.mxu0 0.0
        %2011 = vmatpush1.xpose.msra.mxu0 %v1493
        %2012 = vmatprep.subr.mxu0 0.0
        %2013 = vmatpush1.xpose.msra.mxu0 %v1494
        %2014 = vmatprep.subr.mxu0 0.0
        %2015 = vmatpush1.xpose.msra.mxu0 %v1495
        %2016 = vmatprep.subr.mxu0 0.0
        %2017 = vmatpush1.xpose.msra.mxu0 %v1496
        %2018 = vmatprep.subr.mxu0 0.0
        %2019 = vmatpush1.xpose.msra.mxu0 %v1497
        %2020 = vmatprep.subr.mxu0 0.0
        %2021 = vmatpush1.xpose.msra.mxu0 %v1498
        %2022 = vmatprep.subr.mxu0 0.0
        %2023 = vmatpush1.xpose.msra.mxu0 %v1499
        %2024 = vmatprep.subr.mxu0 0.0
        %2025 = vmatpush1.xpose.msra.mxu0 %v1500
        %2026 = vmatprep.subr.mxu0 0.0
        %2027 = vmatpush1.xpose.msra.mxu0 %v1501
        %2028 = vmatprep.subr.mxu0 0.0
        %2029 = vmatpush1.xpose.msra.mxu0 %v1502
        %2030 = vmatprep.subr.mxu0 0.0
        %2031 = vmatpush1.xpose.msra.mxu0 0.0
        %2032 = vmatprep.subr.mxu0 0.0
        %2033 = vmatpush1.xpose.msra.mxu0 0.0
        %2034 = vmatprep.subr.mxu0 0.0
        %2035 = vmatpush1.xpose.msra.mxu0 0.0
        %2036 = vmatprep.subr.mxu0 0.0
        %2037 = vmatpush1.xpose.msra.mxu0 0.0
        %2038 = vmatprep.subr.mxu0 0.0
        %2039 = vmatpush1.xpose.msra.mxu0 0.0
        %2040 = vmatprep.subr.mxu0 0.0
        %2041 = vmatpush1.xpose.msra.mxu0 0.0
        %2042 = vmatprep.subr.mxu0 0.0
        %2043 = vmatpush1.xpose.msra.mxu0 0.0
        %2044 = vmatprep.subr.mxu0 0.0
        %2045 = vmatpush1.xpose.msra.mxu0 0.0
        %2046 = vmatprep.subr.mxu0 0.0
        %2047 = vmatpush1.xpose.msra.mxu0 0.0
        %2048 = vmatprep.subr.mxu0 0.0
        %2049 = vmatpush1.xpose.msra.mxu0 0.0
        %2050 = vmatprep.subr.mxu0 0.0
        %2051 = vmatpush1.xpose.msra.mxu0 0.0
        %2052 = vmatprep.subr.mxu0 0.0
        %2053 = vmatpush1.xpose.msra.mxu0 0.0
        %2054 = vmatprep.subr.mxu0 0.0
        %2055 = vmatpush1.xpose.msra.mxu0 0.0
        %2056 = vmatprep.subr.mxu0 0.0
        %2057 = vmatpush1.xpose.msra.mxu0 0.0
        %2058 = vmatprep.subr.mxu0 0.0
        %2059 = vmatpush1.xpose.msra.mxu0 0.0
        %2060 = vmatprep.subr.mxu0 0.0
        %2061 = vmatpush1.xpose.msra.mxu0 0.0
        %2062 = vmatprep.mubr.f32.mxu0 0.0
        %2063 = vmatmul.mubr.f32.gmra.mrb[0].mxu0 %v1567
        %v2064 = vpop.f32.mrb[0].mxu0
        %v2065 = vadd.f32 0.0, %v2064
        %v2066 = vpop.f32.mrb[0].mxu0
        %2067 = vdwg.mxu0
        %2068 = vmatprep.subr.mxu0 0.0
        %2069 = vmatpush1.xpose.msra.mxu0 %v1503
        %2070 = vmatprep.subr.mxu0 0.0
        %2071 = vmatpush1.xpose.msra.mxu0 %v1504
        %2072 = vmatprep.subr.mxu0 0.0
        %2073 = vmatpush1.xpose.msra.mxu0 %v1505
        %2074 = vmatprep.subr.mxu0 0.0
        %2075 = vmatpush1.xpose.msra.mxu0 %v1506
        %2076 = vmatprep.subr.mxu0 0.0
        %2077 = vmatpush1.xpose.msra.mxu0 %v1507
        %2078 = vmatprep.subr.mxu0 0.0
        %2079 = vmatpush1.xpose.msra.mxu0 %v1508
        %2080 = vmatprep.subr.mxu0 0.0
        %2081 = vmatpush1.xpose.msra.mxu0 %v1509
        %2082 = vmatprep.subr.mxu0 0.0
        %2083 = vmatpush1.xpose.msra.mxu0 %v1510
        %2084 = vmatprep.subr.mxu0 0.0
        %2085 = vmatpush1.xpose.msra.mxu0 %v1511
        %2086 = vmatprep.subr.mxu0 0.0
        %2087 = vmatpush1.xpose.msra.mxu0 %v1512
        %2088 = vmatprep.subr.mxu0 0.0
        %2089 = vmatpush1.xpose.msra.mxu0 %v1513
        %2090 = vmatprep.subr.mxu0 0.0
        %2091 = vmatpush1.xpose.msra.mxu0 %v1514
        %2092 = vmatprep.subr.mxu0 0.0
        %2093 = vmatpush1.xpose.msra.mxu0 %v1515
        %2094 = vmatprep.subr.mxu0 0.0
        %2095 = vmatpush1.xpose.msra.mxu0 %v1516
        %2096 = vmatprep.subr.mxu0 0.0
        %2097 = vmatpush1.xpose.msra.mxu0 %v1517
        %2098 = vmatprep.subr.mxu0 0.0
        %2099 = vmatpush1.xpose.msra.mxu0 %v1518
        %2100 = vmatprep.subr.mxu0 0.0
        %2101 = vmatpush1.xpose.msra.mxu0 0.0
        %2102 = vmatprep.subr.mxu0 0.0
        %2103 = vmatpush1.xpose.msra.mxu0 0.0
        %2104 = vmatprep.subr.mxu0 0.0
        %2105 = vmatpush1.xpose.msra.mxu0 0.0
        %2106 = vmatprep.subr.mxu0 0.0
        %2107 = vmatpush1.xpose.msra.mxu0 0.0
        %2108 = vmatprep.subr.mxu0 0.0
        %2109 = vmatpush1.xpose.msra.mxu0 0.0
        %2110 = vmatprep.subr.mxu0 0.0
        %2111 = vmatpush1.xpose.msra.mxu0 0.0
        %2112 = vmatprep.subr.mxu0 0.0
        %2113 = vmatpush1.xpose.msra.mxu0 0.0
        %2114 = vmatprep.subr.mxu0 0.0
        %2115 = vmatpush1.xpose.msra.mxu0 0.0
        %2116 = vmatprep.subr.mxu0 0.0
        %2117 = vmatpush1.xpose.msra.mxu0 0.0
        %2118 = vmatprep.subr.mxu0 0.0
        %2119 = vmatpush1.xpose.msra.mxu0 0.0
        %2120 = vmatprep.subr.mxu0 0.0
        %2121 = vmatpush1.xpose.msra.mxu0 0.0
        %2122 = vmatprep.subr.mxu0 0.0
        %2123 = vmatpush1.xpose.msra.mxu0 0.0
        %2124 = vmatprep.subr.mxu0 0.0
        %2125 = vmatpush1.xpose.msra.mxu0 0.0
        %2126 = vmatprep.subr.mxu0 0.0
        %2127 = vmatpush1.xpose.msra.mxu0 0.0
        %2128 = vmatprep.subr.mxu0 0.0
        %2129 = vmatpush1.xpose.msra.mxu0 0.0
        %2130 = vmatprep.subr.mxu0 0.0
        %2131 = vmatpush1.xpose.msra.mxu0 0.0
        %2132 = vmatprep.mubr.f32.mxu0 0.0
        %2133 = vmatmul.mubr.f32.gmra.mrb[0].mxu0 %v1569
        %v2134 = vpop.f32.mrb[0].mxu0
        %v2135 = vadd.f32 0.0, %v2134
        %v2136 = vpop.f32.mrb[0].mxu0
        %2137 = vdwg.mxu0
        %s2138 = smul.u32 %s37, 128
        %v2147 = vrot.slane %v1715, 7
        %vm2148 = vcmask 1041409
        %v2149 = vsel %vm2148, %v2147, %v1645
        %v2150 = vrot.slane %v1785, 6
        %vm2151 = vcmask 1042434
        %v2152 = vsel %vm2151, %v2150, %v2149
        %v2153 = vrot.slane %v1855, 5
        %vm2154 = vcmask 1043459
        %v2155 = vsel %vm2154, %v2153, %v2152
        %v2156 = vrot.slane %v1925, 4
        %vm2157 = vcmask 1044484
        %v2158 = vsel %vm2157, %v2156, %v2155
        %v2159 = vrot.slane %v1995, 3
        %vm2160 = vcmask 1045509
        %v2161 = vsel %vm2160, %v2159, %v2158
        %v2162 = vrot.slane %v2065, 2
        %vm2163 = vcmask 1046534
        %v2164 = vsel %vm2163, %v2162, %v2161
        %v2165 = vrot.slane %v2135, 1
        %vm2166 = vcmask 1047559
        %v2167 = vsel %vm2166, %v2165, %v2164
        %s2169 = sshra.s32 %s2138, 7
        %s2170 = sand.u32 %s2138, 127
        %s2171 = smul.addr %s2169, 8
        %s2172 = scalar_lea.vmem %s434, %s2171 [#allocation18]
        %2173 = vst [vmem:[%s2172] sm:$0xff] %v2167
        %v2174 = vld [vmem:[#allocation3] sm:$0xff]
        %2175 = vmax.xlane.f32.xlu0 %v2167
        %v2176 = vpop.xlane.xlu0 %2175
        %v2177 = vmax.f32 %v2174, %v2176
        %v2178 = vsub.f32 %v2174, %v2177
        %v2179 = vmul.f32 %v2178, 1.442695
        %v2180 = vpow.pop %v2179
        %2182 = vset.pattern.permute.xlu0 0
        %2183 = vperm.xlu0 %2182, %v2177
        %v2184 = vpop.permute.xlu0 %2183
        %v2185 = vrot.slane %v2184, 1
        %v2186 = vrot.slane %v2184, 2
        %v2187 = vrot.slane %v2184, 3
        %v2188 = vrot.slane %v2184, 4
        %v2189 = vrot.slane %v2184, 5
        %v2190 = vrot.slane %v2184, 6
        %v2191 = vrot.slane %v2184, 7
        %v2200 = vsub.f32 %v1645, %v2184
        %v2201 = vsub.f32 %v1715, %v2185
        %v2202 = vsub.f32 %v1785, %v2186
        %v2203 = vsub.f32 %v1855, %v2187
        %v2204 = vsub.f32 %v1925, %v2188
        %v2205 = vsub.f32 %v1995, %v2189
        %v2206 = vsub.f32 %v2065, %v2190
        %v2207 = vsub.f32 %v2135, %v2191
        %v2208 = vmul.f32 %v2200, 1.442695
        %v2209 = vpow.pop %v2208
        %v2210 = vmul.f32 %v2201, 1.442695
        %v2211 = vpow.pop %v2210
        %v2212 = vmul.f32 %v2202, 1.442695
        %v2213 = vpow.pop %v2212
        %v2214 = vmul.f32 %v2203, 1.442695
        %v2215 = vpow.pop %v2214
        %v2216 = vmul.f32 %v2204, 1.442695
        %v2217 = vpow.pop %v2216
        %v2218 = vmul.f32 %v2205, 1.442695
        %v2219 = vpow.pop %v2218
        %v2220 = vmul.f32 %v2206, 1.442695
        %v2221 = vpow.pop %v2220
        %v2222 = vmul.f32 %v2207, 1.442695
        %v2223 = vpow.pop %v2222
        %v2224 = vld [vmem:[#allocation4] sm:$0xff]
        %v2225 = vmul.f32 %v2180, %v2224
        %v2234 = vrot.slane %v2211, 7
        %v2235 = vsel %vm2148, %v2234, %v2209
        %v2236 = vrot.slane %v2213, 6
        %v2237 = vsel %vm2151, %v2236, %v2235
        %v2238 = vrot.slane %v2215, 5
        %v2239 = vsel %vm2154, %v2238, %v2237
        %v2240 = vrot.slane %v2217, 4
        %v2241 = vsel %vm2157, %v2240, %v2239
        %v2242 = vrot.slane %v2219, 3
        %v2243 = vsel %vm2160, %v2242, %v2241
        %v2244 = vrot.slane %v2221, 2
        %v2245 = vsel %vm2163, %v2244, %v2243
        %v2246 = vrot.slane %v2223, 1
        %v2247 = vsel %vm2166, %v2246, %v2245
        %2249 = vadd.xlane.f32.xlu0 %v2247
        %v2250 = vpop.xlane.xlu0 %2249
        %v2251 = vadd.f32 %v2225, %v2250
        %vm2252 = vcmask 7168
        %2253 = vst.msk [vmem:[#allocation4] sm:$0xff] %vm2252, %v2251
        %2254 = vmatprep.subr.mxu0 0.0
        %2255 = vmatpush1.msra.mxu0 %v542
        %2256 = vmatprep.subr.mxu0 0.0
        %2257 = vmatpush1.msra.mxu0 %v543
        %2258 = vmatprep.subr.mxu0 0.0
        %2259 = vmatpush1.msra.mxu0 %v544
        %2260 = vmatprep.subr.mxu0 0.0
        %2261 = vmatpush1.msra.mxu0 %v545
        %2262 = vmatprep.subr.mxu0 0.0
        %2263 = vmatpush1.msra.mxu0 %v546
        %2264 = vmatprep.subr.mxu0 0.0
        %2265 = vmatpush1.msra.mxu0 %v547
        %2266 = vmatprep.subr.mxu0 0.0
        %2267 = vmatpush1.msra.mxu0 %v548
        %2268 = vmatprep.subr.mxu0 0.0
        %2269 = vmatpush1.msra.mxu0 %v549
        %2270 = vmatprep.subr.mxu0 0.0
        %2271 = vmatpush1.msra.mxu0 %v550
        %2272 = vmatprep.subr.mxu0 0.0
        %2273 = vmatpush1.msra.mxu0 %v551
        %2274 = vmatprep.subr.mxu0 0.0
        %2275 = vmatpush1.msra.mxu0 %v552
        %2276 = vmatprep.subr.mxu0 0.0
        %2277 = vmatpush1.msra.mxu0 %v553
        %2278 = vmatprep.subr.mxu0 0.0
        %2279 = vmatpush1.msra.mxu0 %v554
        %2280 = vmatprep.subr.mxu0 0.0
        %2281 = vmatpush1.msra.mxu0 %v555
        %2282 = vmatprep.subr.mxu0 0.0
        %2283 = vmatpush1.msra.mxu0 %v556
        %2284 = vmatprep.subr.mxu0 0.0
        %2285 = vmatpush1.msra.mxu0 %v557
        %2286 = vmatprep.subr.mxu0 0.0
        %2287 = vmatpush1.msra.mxu0 0.0
        %2288 = vmatprep.subr.mxu0 0.0
        %2289 = vmatpush1.msra.mxu0 0.0
        %2290 = vmatprep.subr.mxu0 0.0
        %2291 = vmatpush1.msra.mxu0 0.0
        %2292 = vmatprep.subr.mxu0 0.0
        %2293 = vmatpush1.msra.mxu0 0.0
        %2294 = vmatprep.subr.mxu0 0.0
        %2295 = vmatpush1.msra.mxu0 0.0
        %2296 = vmatprep.subr.mxu0 0.0
        %2297 = vmatpush1.msra.mxu0 0.0
        %2298 = vmatprep.subr.mxu0 0.0
        %2299 = vmatpush1.msra.mxu0 0.0
        %2300 = vmatprep.subr.mxu0 0.0
        %2301 = vmatpush1.msra.mxu0 0.0
        %2302 = vmatprep.subr.mxu0 0.0
        %2303 = vmatpush1.msra.mxu0 0.0
        %2304 = vmatprep.subr.mxu0 0.0
        %2305 = vmatpush1.msra.mxu0 0.0
        %2306 = vmatprep.subr.mxu0 0.0
        %2307 = vmatpush1.msra.mxu0 0.0
        %2308 = vmatprep.subr.mxu0 0.0
        %2309 = vmatpush1.msra.mxu0 0.0
        %2310 = vmatprep.subr.mxu0 0.0
        %2311 = vmatpush1.msra.mxu0 0.0
        %2312 = vmatprep.subr.mxu0 0.0
        %2313 = vmatpush1.msra.mxu0 0.0
        %2314 = vmatprep.subr.mxu0 0.0
        %2315 = vmatpush1.msra.mxu0 0.0
        %2316 = vmatprep.subr.mxu0 0.0
        %2317 = vmatpush1.msra.mxu0 0.0
        %2318 = vmatprep.mubr.f32.mxu0 0.0
        %2319 = vmatmul.mubr.f32.gmra.mrb[0].mxu0 %v2209
        %v2320 = vpop.f32.mrb[0].mxu0
        %v2321 = vadd.f32 0.0, %v2320
        %v2322 = vpop.f32.mrb[0].mxu0
        %2323 = vdwg.mxu0
        %2324 = vmatprep.subr.mxu0 0.0
        %2325 = vmatpush1.msra.mxu0 %v558
        %2326 = vmatprep.subr.mxu0 0.0
        %2327 = vmatpush1.msra.mxu0 %v559
        %2328 = vmatprep.subr.mxu0 0.0
        %2329 = vmatpush1.msra.mxu0 %v560
        %2330 = vmatprep.subr.mxu0 0.0
        %2331 = vmatpush1.msra.mxu0 %v561
        %2332 = vmatprep.subr.mxu0 0.0
        %2333 = vmatpush1.msra.mxu0 %v562
        %2334 = vmatprep.subr.mxu0 0.0
        %2335 = vmatpush1.msra.mxu0 %v563
        %2336 = vmatprep.subr.mxu0 0.0
        %2337 = vmatpush1.msra.mxu0 %v564
        %2338 = vmatprep.subr.mxu0 0.0
        %2339 = vmatpush1.msra.mxu0 %v565
        %2340 = vmatprep.subr.mxu0 0.0
        %2341 = vmatpush1.msra.mxu0 %v566
        %2342 = vmatprep.subr.mxu0 0.0
        %2343 = vmatpush1.msra.mxu0 %v567
        %2344 = vmatprep.subr.mxu0 0.0
        %2345 = vmatpush1.msra.mxu0 %v568
        %2346 = vmatprep.subr.mxu0 0.0
        %2347 = vmatpush1.msra.mxu0 %v569
        %2348 = vmatprep.subr.mxu0 0.0
        %2349 = vmatpush1.msra.mxu0 %v570
        %2350 = vmatprep.subr.mxu0 0.0
        %2351 = vmatpush1.msra.mxu0 %v571
        %2352 = vmatprep.subr.mxu0 0.0
        %2353 = vmatpush1.msra.mxu0 %v572
        %2354 = vmatprep.subr.mxu0 0.0
        %2355 = vmatpush1.msra.mxu0 %v573
        %2356 = vmatprep.subr.mxu0 0.0
        %2357 = vmatpush1.msra.mxu0 0.0
        %2358 = vmatprep.subr.mxu0 0.0
        %2359 = vmatpush1.msra.mxu0 0.0
        %2360 = vmatprep.subr.mxu0 0.0
        %2361 = vmatpush1.msra.mxu0 0.0
        %2362 = vmatprep.subr.mxu0 0.0
        %2363 = vmatpush1.msra.mxu0 0.0
        %2364 = vmatprep.subr.mxu0 0.0
        %2365 = vmatpush1.msra.mxu0 0.0
        %2366 = vmatprep.subr.mxu0 0.0
        %2367 = vmatpush1.msra.mxu0 0.0
        %2368 = vmatprep.subr.mxu0 0.0
        %2369 = vmatpush1.msra.mxu0 0.0
        %2370 = vmatprep.subr.mxu0 0.0
        %2371 = vmatpush1.msra.mxu0 0.0
        %2372 = vmatprep.subr.mxu0 0.0
        %2373 = vmatpush1.msra.mxu0 0.0
        %2374 = vmatprep.subr.mxu0 0.0
        %2375 = vmatpush1.msra.mxu0 0.0
        %2376 = vmatprep.subr.mxu0 0.0
        %2377 = vmatpush1.msra.mxu0 0.0
        %2378 = vmatprep.subr.mxu0 0.0
        %2379 = vmatpush1.msra.mxu0 0.0
        %2380 = vmatprep.subr.mxu0 0.0
        %2381 = vmatpush1.msra.mxu0 0.0
        %2382 = vmatprep.subr.mxu0 0.0
        %2383 = vmatpush1.msra.mxu0 0.0
        %2384 = vmatprep.subr.mxu0 0.0
        %2385 = vmatpush1.msra.mxu0 0.0
        %2386 = vmatprep.subr.mxu0 0.0
        %2387 = vmatpush1.msra.mxu0 0.0
        %2388 = vmatprep.mubr.f32.mxu0 0.0
        %2389 = vmatmul.mubr.f32.gmra.mrb[0].mxu0 %v2211
        %v2390 = vpop.f32.mrb[0].mxu0
        %v2391 = vadd.f32 0.0, %v2390
        %v2392 = vpop.f32.mrb[0].mxu0
        %2393 = vdwg.mxu0
        %2394 = vmatprep.subr.mxu0 0.0
        %2395 = vmatpush1.msra.mxu0 %v574
        %2396 = vmatprep.subr.mxu0 0.0
        %2397 = vmatpush1.msra.mxu0 %v575
        %2398 = vmatprep.subr.mxu0 0.0
        %2399 = vmatpush1.msra.mxu0 %v576
        %2400 = vmatprep.subr.mxu0 0.0
        %2401 = vmatpush1.msra.mxu0 %v577
        %2402 = vmatprep.subr.mxu0 0.0
        %2403 = vmatpush1.msra.mxu0 %v578
        %2404 = vmatprep.subr.mxu0 0.0
        %2405 = vmatpush1.msra.mxu0 %v579
        %2406 = vmatprep.subr.mxu0 0.0
        %2407 = vmatpush1.msra.mxu0 %v580
        %2408 = vmatprep.subr.mxu0 0.0
        %2409 = vmatpush1.msra.mxu0 %v581
        %2410 = vmatprep.subr.mxu0 0.0
        %2411 = vmatpush1.msra.mxu0 %v582
        %2412 = vmatprep.subr.mxu0 0.0
        %2413 = vmatpush1.msra.mxu0 %v583
        %2414 = vmatprep.subr.mxu0 0.0
        %2415 = vmatpush1.msra.mxu0 %v584
        %2416 = vmatprep.subr.mxu0 0.0
        %2417 = vmatpush1.msra.mxu0 %v585
        %2418 = vmatprep.subr.mxu0 0.0
        %2419 = vmatpush1.msra.mxu0 %v586
        %2420 = vmatprep.subr.mxu0 0.0
        %2421 = vmatpush1.msra.mxu0 %v587
        %2422 = vmatprep.subr.mxu0 0.0
        %2423 = vmatpush1.msra.mxu0 %v588
        %2424 = vmatprep.subr.mxu0 0.0
        %2425 = vmatpush1.msra.mxu0 %v589
        %2426 = vmatprep.subr.mxu0 0.0
        %2427 = vmatpush1.msra.mxu0 0.0
        %2428 = vmatprep.subr.mxu0 0.0
        %2429 = vmatpush1.msra.mxu0 0.0
        %2430 = vmatprep.subr.mxu0 0.0
        %2431 = vmatpush1.msra.mxu0 0.0
        %2432 = vmatprep.subr.mxu0 0.0
        %2433 = vmatpush1.msra.mxu0 0.0
        %2434 = vmatprep.subr.mxu0 0.0
        %2435 = vmatpush1.msra.mxu0 0.0
        %2436 = vmatprep.subr.mxu0 0.0
        %2437 = vmatpush1.msra.mxu0 0.0
        %2438 = vmatprep.subr.mxu0 0.0
        %2439 = vmatpush1.msra.mxu0 0.0
        %2440 = vmatprep.subr.mxu0 0.0
        %2441 = vmatpush1.msra.mxu0 0.0
        %2442 = vmatprep.subr.mxu0 0.0
        %2443 = vmatpush1.msra.mxu0 0.0
        %2444 = vmatprep.subr.mxu0 0.0
        %2445 = vmatpush1.msra.mxu0 0.0
        %2446 = vmatprep.subr.mxu0 0.0
        %2447 = vmatpush1.msra.mxu0 0.0
        %2448 = vmatprep.subr.mxu0 0.0
        %2449 = vmatpush1.msra.mxu0 0.0
        %2450 = vmatprep.subr.mxu0 0.0
        %2451 = vmatpush1.msra.mxu0 0.0
        %2452 = vmatprep.subr.mxu0 0.0
        %2453 = vmatpush1.msra.mxu0 0.0
        %2454 = vmatprep.subr.mxu0 0.0
        %2455 = vmatpush1.msra.mxu0 0.0
        %2456 = vmatprep.subr.mxu0 0.0
        %2457 = vmatpush1.msra.mxu0 0.0
        %2458 = vmatprep.mubr.f32.mxu0 0.0
        %2459 = vmatmul.mubr.f32.gmra.mrb[0].mxu0 %v2213
        %v2460 = vpop.f32.mrb[0].mxu0
        %v2461 = vadd.f32 0.0, %v2460
        %v2462 = vpop.f32.mrb[0].mxu0
        %2463 = vdwg.mxu0
        %2464 = vmatprep.subr.mxu0 0.0
        %2465 = vmatpush1.msra.mxu0 %v590
        %2466 = vmatprep.subr.mxu0 0.0
        %2467 = vmatpush1.msra.mxu0 %v591
        %2468 = vmatprep.subr.mxu0 0.0
        %2469 = vmatpush1.msra.mxu0 %v592
        %2470 = vmatprep.subr.mxu0 0.0
        %2471 = vmatpush1.msra.mxu0 %v593
        %2472 = vmatprep.subr.mxu0 0.0
        %2473 = vmatpush1.msra.mxu0 %v594
        %2474 = vmatprep.subr.mxu0 0.0
        %2475 = vmatpush1.msra.mxu0 %v595
        %2476 = vmatprep.subr.mxu0 0.0
        %2477 = vmatpush1.msra.mxu0 %v596
        %2478 = vmatprep.subr.mxu0 0.0
        %2479 = vmatpush1.msra.mxu0 %v597
        %2480 = vmatprep.subr.mxu0 0.0
        %2481 = vmatpush1.msra.mxu0 %v598
        %2482 = vmatprep.subr.mxu0 0.0
        %2483 = vmatpush1.msra.mxu0 %v599
        %2484 = vmatprep.subr.mxu0 0.0
        %2485 = vmatpush1.msra.mxu0 %v600
        %2486 = vmatprep.subr.mxu0 0.0
        %2487 = vmatpush1.msra.mxu0 %v601
        %2488 = vmatprep.subr.mxu0 0.0
        %2489 = vmatpush1.msra.mxu0 %v602
        %2490 = vmatprep.subr.mxu0 0.0
        %2491 = vmatpush1.msra.mxu0 %v603
        %2492 = vmatprep.subr.mxu0 0.0
        %2493 = vmatpush1.msra.mxu0 %v604
        %2494 = vmatprep.subr.mxu0 0.0
        %2495 = vmatpush1.msra.mxu0 %v605
        %2496 = vmatprep.subr.mxu0 0.0
        %2497 = vmatpush1.msra.mxu0 0.0
        %2498 = vmatprep.subr.mxu0 0.0
        %2499 = vmatpush1.msra.mxu0 0.0
        %2500 = vmatprep.subr.mxu0 0.0
        %2501 = vmatpush1.msra.mxu0 0.0
        %2502 = vmatprep.subr.mxu0 0.0
        %2503 = vmatpush1.msra.mxu0 0.0
        %2504 = vmatprep.subr.mxu0 0.0
        %2505 = vmatpush1.msra.mxu0 0.0
        %2506 = vmatprep.subr.mxu0 0.0
        %2507 = vmatpush1.msra.mxu0 0.0
        %2508 = vmatprep.subr.mxu0 0.0
        %2509 = vmatpush1.msra.mxu0 0.0
        %2510 = vmatprep.subr.mxu0 0.0
        %2511 = vmatpush1.msra.mxu0 0.0
        %2512 = vmatprep.subr.mxu0 0.0
        %2513 = vmatpush1.msra.mxu0 0.0
        %2514 = vmatprep.subr.mxu0 0.0
        %2515 = vmatpush1.msra.mxu0 0.0
        %2516 = vmatprep.subr.mxu0 0.0
        %2517 = vmatpush1.msra.mxu0 0.0
        %2518 = vmatprep.subr.mxu0 0.0
        %2519 = vmatpush1.msra.mxu0 0.0
        %2520 = vmatprep.subr.mxu0 0.0
        %2521 = vmatpush1.msra.mxu0 0.0
        %2522 = vmatprep.subr.mxu0 0.0
        %2523 = vmatpush1.msra.mxu0 0.0
        %2524 = vmatprep.subr.mxu0 0.0
        %2525 = vmatpush1.msra.mxu0 0.0
        %2526 = vmatprep.subr.mxu0 0.0
        %2527 = vmatpush1.msra.mxu0 0.0
        %2528 = vmatprep.mubr.f32.mxu0 0.0
        %2529 = vmatmul.mubr.f32.gmra.mrb[0].mxu0 %v2215
        %v2530 = vpop.f32.mrb[0].mxu0
        %v2531 = vadd.f32 0.0, %v2530
        %v2532 = vpop.f32.mrb[0].mxu0
        %2533 = vdwg.mxu0
        %2534 = vmatprep.subr.mxu0 0.0
        %2535 = vmatpush1.msra.mxu0 %v606
        %2536 = vmatprep.subr.mxu0 0.0
        %2537 = vmatpush1.msra.mxu0 %v607
        %2538 = vmatprep.subr.mxu0 0.0
        %2539 = vmatpush1.msra.mxu0 %v608
        %2540 = vmatprep.subr.mxu0 0.0
        %2541 = vmatpush1.msra.mxu0 %v609
        %2542 = vmatprep.subr.mxu0 0.0
        %2543 = vmatpush1.msra.mxu0 %v610
        %2544 = vmatprep.subr.mxu0 0.0
        %2545 = vmatpush1.msra.mxu0 %v611
        %2546 = vmatprep.subr.mxu0 0.0
        %2547 = vmatpush1.msra.mxu0 %v612
        %2548 = vmatprep.subr.mxu0 0.0
        %2549 = vmatpush1.msra.mxu0 %v613
        %2550 = vmatprep.subr.mxu0 0.0
        %2551 = vmatpush1.msra.mxu0 %v614
        %2552 = vmatprep.subr.mxu0 0.0
        %2553 = vmatpush1.msra.mxu0 %v615
        %2554 = vmatprep.subr.mxu0 0.0
        %2555 = vmatpush1.msra.mxu0 %v616
        %2556 = vmatprep.subr.mxu0 0.0
        %2557 = vmatpush1.msra.mxu0 %v617
        %2558 = vmatprep.subr.mxu0 0.0
        %2559 = vmatpush1.msra.mxu0 %v618
        %2560 = vmatprep.subr.mxu0 0.0
        %2561 = vmatpush1.msra.mxu0 %v619
        %2562 = vmatprep.subr.mxu0 0.0
        %2563 = vmatpush1.msra.mxu0 %v620
        %2564 = vmatprep.subr.mxu0 0.0
        %2565 = vmatpush1.msra.mxu0 %v621
        %2566 = vmatprep.subr.mxu0 0.0
        %2567 = vmatpush1.msra.mxu0 0.0
        %2568 = vmatprep.subr.mxu0 0.0
        %2569 = vmatpush1.msra.mxu0 0.0
        %2570 = vmatprep.subr.mxu0 0.0
        %2571 = vmatpush1.msra.mxu0 0.0
        %2572 = vmatprep.subr.mxu0 0.0
        %2573 = vmatpush1.msra.mxu0 0.0
        %2574 = vmatprep.subr.mxu0 0.0
        %2575 = vmatpush1.msra.mxu0 0.0
        %2576 = vmatprep.subr.mxu0 0.0
        %2577 = vmatpush1.msra.mxu0 0.0
        %2578 = vmatprep.subr.mxu0 0.0
        %2579 = vmatpush1.msra.mxu0 0.0
        %2580 = vmatprep.subr.mxu0 0.0
        %2581 = vmatpush1.msra.mxu0 0.0
        %2582 = vmatprep.subr.mxu0 0.0
        %2583 = vmatpush1.msra.mxu0 0.0
        %2584 = vmatprep.subr.mxu0 0.0
        %2585 = vmatpush1.msra.mxu0 0.0
        %2586 = vmatprep.subr.mxu0 0.0
        %2587 = vmatpush1.msra.mxu0 0.0
        %2588 = vmatprep.subr.mxu0 0.0
        %2589 = vmatpush1.msra.mxu0 0.0
        %2590 = vmatprep.subr.mxu0 0.0
        %2591 = vmatpush1.msra.mxu0 0.0
        %2592 = vmatprep.subr.mxu0 0.0
        %2593 = vmatpush1.msra.mxu0 0.0
        %2594 = vmatprep.subr.mxu0 0.0
        %2595 = vmatpush1.msra.mxu0 0.0
        %2596 = vmatprep.subr.mxu0 0.0
        %2597 = vmatpush1.msra.mxu0 0.0
        %2598 = vmatprep.mubr.f32.mxu0 0.0
        %2599 = vmatmul.mubr.f32.gmra.mrb[0].mxu0 %v2217
        %v2600 = vpop.f32.mrb[0].mxu0
        %v2601 = vadd.f32 0.0, %v2600
        %v2602 = vpop.f32.mrb[0].mxu0
        %2603 = vdwg.mxu0
        %2604 = vmatprep.subr.mxu0 0.0
        %2605 = vmatpush1.msra.mxu0 %v622
        %2606 = vmatprep.subr.mxu0 0.0
        %2607 = vmatpush1.msra.mxu0 %v623
        %2608 = vmatprep.subr.mxu0 0.0
        %2609 = vmatpush1.msra.mxu0 %v624
        %2610 = vmatprep.subr.mxu0 0.0
        %2611 = vmatpush1.msra.mxu0 %v625
        %2612 = vmatprep.subr.mxu0 0.0
        %2613 = vmatpush1.msra.mxu0 %v626
        %2614 = vmatprep.subr.mxu0 0.0
        %2615 = vmatpush1.msra.mxu0 %v627
        %2616 = vmatprep.subr.mxu0 0.0
        %2617 = vmatpush1.msra.mxu0 %v628
        %2618 = vmatprep.subr.mxu0 0.0
        %2619 = vmatpush1.msra.mxu0 %v629
        %2620 = vmatprep.subr.mxu0 0.0
        %2621 = vmatpush1.msra.mxu0 %v630
        %2622 = vmatprep.subr.mxu0 0.0
        %2623 = vmatpush1.msra.mxu0 %v631
        %2624 = vmatprep.subr.mxu0 0.0
        %2625 = vmatpush1.msra.mxu0 %v632
        %2626 = vmatprep.subr.mxu0 0.0
        %2627 = vmatpush1.msra.mxu0 %v633
        %2628 = vmatprep.subr.mxu0 0.0
        %2629 = vmatpush1.msra.mxu0 %v634
        %2630 = vmatprep.subr.mxu0 0.0
        %2631 = vmatpush1.msra.mxu0 %v635
        %2632 = vmatprep.subr.mxu0 0.0
        %2633 = vmatpush1.msra.mxu0 %v636
        %2634 = vmatprep.subr.mxu0 0.0
        %2635 = vmatpush1.msra.mxu0 %v637
        %2636 = vmatprep.subr.mxu0 0.0
        %2637 = vmatpush1.msra.mxu0 0.0
        %2638 = vmatprep.subr.mxu0 0.0
        %2639 = vmatpush1.msra.mxu0 0.0
        %2640 = vmatprep.subr.mxu0 0.0
        %2641 = vmatpush1.msra.mxu0 0.0
        %2642 = vmatprep.subr.mxu0 0.0
        %2643 = vmatpush1.msra.mxu0 0.0
        %2644 = vmatprep.subr.mxu0 0.0
        %2645 = vmatpush1.msra.mxu0 0.0
        %2646 = vmatprep.subr.mxu0 0.0
        %2647 = vmatpush1.msra.mxu0 0.0
        %2648 = vmatprep.subr.mxu0 0.0
        %2649 = vmatpush1.msra.mxu0 0.0
        %2650 = vmatprep.subr.mxu0 0.0
        %2651 = vmatpush1.msra.mxu0 0.0
        %2652 = vmatprep.subr.mxu0 0.0
        %2653 = vmatpush1.msra.mxu0 0.0
        %2654 = vmatprep.subr.mxu0 0.0
        %2655 = vmatpush1.msra.mxu0 0.0
        %2656 = vmatprep.subr.mxu0 0.0
        %2657 = vmatpush1.msra.mxu0 0.0
        %2658 = vmatprep.subr.mxu0 0.0
        %2659 = vmatpush1.msra.mxu0 0.0
        %2660 = vmatprep.subr.mxu0 0.0
        %2661 = vmatpush1.msra.mxu0 0.0
        %2662 = vmatprep.subr.mxu0 0.0
        %2663 = vmatpush1.msra.mxu0 0.0
        %2664 = vmatprep.subr.mxu0 0.0
        %2665 = vmatpush1.msra.mxu0 0.0
        %2666 = vmatprep.subr.mxu0 0.0
        %2667 = vmatpush1.msra.mxu0 0.0
        %2668 = vmatprep.mubr.f32.mxu0 0.0
        %2669 = vmatmul.mubr.f32.gmra.mrb[0].mxu0 %v2219
        %v2670 = vpop.f32.mrb[0].mxu0
        %v2671 = vadd.f32 0.0, %v2670
        %v2672 = vpop.f32.mrb[0].mxu0
        %2673 = vdwg.mxu0
        %2674 = vmatprep.subr.mxu0 0.0
        %2675 = vmatpush1.msra.mxu0 %v638
        %2676 = vmatprep.subr.mxu0 0.0
        %2677 = vmatpush1.msra.mxu0 %v639
        %2678 = vmatprep.subr.mxu0 0.0
        %2679 = vmatpush1.msra.mxu0 %v640
        %2680 = vmatprep.subr.mxu0 0.0
        %2681 = vmatpush1.msra.mxu0 %v641
        %2682 = vmatprep.subr.mxu0 0.0
        %2683 = vmatpush1.msra.mxu0 %v642
        %2684 = vmatprep.subr.mxu0 0.0
        %2685 = vmatpush1.msra.mxu0 %v643
        %2686 = vmatprep.subr.mxu0 0.0
        %2687 = vmatpush1.msra.mxu0 %v644
        %2688 = vmatprep.subr.mxu0 0.0
        %2689 = vmatpush1.msra.mxu0 %v645
        %2690 = vmatprep.subr.mxu0 0.0
        %2691 = vmatpush1.msra.mxu0 %v646
        %2692 = vmatprep.subr.mxu0 0.0
        %2693 = vmatpush1.msra.mxu0 %v647
        %2694 = vmatprep.subr.mxu0 0.0
        %2695 = vmatpush1.msra.mxu0 %v648
        %2696 = vmatprep.subr.mxu0 0.0
        %2697 = vmatpush1.msra.mxu0 %v649
        %2698 = vmatprep.subr.mxu0 0.0
        %2699 = vmatpush1.msra.mxu0 %v650
        %2700 = vmatprep.subr.mxu0 0.0
        %2701 = vmatpush1.msra.mxu0 %v651
        %2702 = vmatprep.subr.mxu0 0.0
        %2703 = vmatpush1.msra.mxu0 %v652
        %2704 = vmatprep.subr.mxu0 0.0
        %2705 = vmatpush1.msra.mxu0 %v653
        %2706 = vmatprep.subr.mxu0 0.0
        %2707 = vmatpush1.msra.mxu0 0.0
        %2708 = vmatprep.subr.mxu0 0.0
        %2709 = vmatpush1.msra.mxu0 0.0
        %2710 = vmatprep.subr.mxu0 0.0
        %2711 = vmatpush1.msra.mxu0 0.0
        %2712 = vmatprep.subr.mxu0 0.0
        %2713 = vmatpush1.msra.mxu0 0.0
        %2714 = vmatprep.subr.mxu0 0.0
        %2715 = vmatpush1.msra.mxu0 0.0
        %2716 = vmatprep.subr.mxu0 0.0
        %2717 = vmatpush1.msra.mxu0 0.0
        %2718 = vmatprep.subr.mxu0 0.0
        %2719 = vmatpush1.msra.mxu0 0.0
        %2720 = vmatprep.subr.mxu0 0.0
        %2721 = vmatpush1.msra.mxu0 0.0
        %2722 = vmatprep.subr.mxu0 0.0
        %2723 = vmatpush1.msra.mxu0 0.0
        %2724 = vmatprep.subr.mxu0 0.0
        %2725 = vmatpush1.msra.mxu0 0.0
        %2726 = vmatprep.subr.mxu0 0.0
        %2727 = vmatpush1.msra.mxu0 0.0
        %2728 = vmatprep.subr.mxu0 0.0
        %2729 = vmatpush1.msra.mxu0 0.0
        %2730 = vmatprep.subr.mxu0 0.0
        %2731 = vmatpush1.msra.mxu0 0.0
        %2732 = vmatprep.subr.mxu0 0.0
        %2733 = vmatpush1.msra.mxu0 0.0
        %2734 = vmatprep.subr.mxu0 0.0
        %2735 = vmatpush1.msra.mxu0 0.0
        %2736 = vmatprep.subr.mxu0 0.0
        %2737 = vmatpush1.msra.mxu0 0.0
        %2738 = vmatprep.mubr.f32.mxu0 0.0
        %2739 = vmatmul.mubr.f32.gmra.mrb[0].mxu0 %v2221
        %v2740 = vpop.f32.mrb[0].mxu0
        %v2741 = vadd.f32 0.0, %v2740
        %v2742 = vpop.f32.mrb[0].mxu0
        %2743 = vdwg.mxu0
        %2744 = vmatprep.subr.mxu0 0.0
        %2745 = vmatpush1.msra.mxu0 %v654
        %2746 = vmatprep.subr.mxu0 0.0
        %2747 = vmatpush1.msra.mxu0 %v655
        %2748 = vmatprep.subr.mxu0 0.0
        %2749 = vmatpush1.msra.mxu0 %v656
        %2750 = vmatprep.subr.mxu0 0.0
        %2751 = vmatpush1.msra.mxu0 %v657
        %2752 = vmatprep.subr.mxu0 0.0
        %2753 = vmatpush1.msra.mxu0 %v658
        %2754 = vmatprep.subr.mxu0 0.0
        %2755 = vmatpush1.msra.mxu0 %v659
        %2756 = vmatprep.subr.mxu0 0.0
        %2757 = vmatpush1.msra.mxu0 %v660
        %2758 = vmatprep.subr.mxu0 0.0
        %2759 = vmatpush1.msra.mxu0 %v661
        %2760 = vmatprep.subr.mxu0 0.0
        %2761 = vmatpush1.msra.mxu0 %v662
        %2762 = vmatprep.subr.mxu0 0.0
        %2763 = vmatpush1.msra.mxu0 %v663
        %2764 = vmatprep.subr.mxu0 0.0
        %2765 = vmatpush1.msra.mxu0 %v664
        %2766 = vmatprep.subr.mxu0 0.0
        %2767 = vmatpush1.msra.mxu0 %v665
        %2768 = vmatprep.subr.mxu0 0.0
        %2769 = vmatpush1.msra.mxu0 %v666
        %2770 = vmatprep.subr.mxu0 0.0
        %2771 = vmatpush1.msra.mxu0 %v667
        %2772 = vmatprep.subr.mxu0 0.0
        %2773 = vmatpush1.msra.mxu0 %v668
        %2774 = vmatprep.subr.mxu0 0.0
        %2775 = vmatpush1.msra.mxu0 %v669
        %2776 = vmatprep.subr.mxu0 0.0
        %2777 = vmatpush1.msra.mxu0 0.0
        %2778 = vmatprep.subr.mxu0 0.0
        %2779 = vmatpush1.msra.mxu0 0.0
        %2780 = vmatprep.subr.mxu0 0.0
        %2781 = vmatpush1.msra.mxu0 0.0
        %2782 = vmatprep.subr.mxu0 0.0
        %2783 = vmatpush1.msra.mxu0 0.0
        %2784 = vmatprep.subr.mxu0 0.0
        %2785 = vmatpush1.msra.mxu0 0.0
        %2786 = vmatprep.subr.mxu0 0.0
        %2787 = vmatpush1.msra.mxu0 0.0
        %2788 = vmatprep.subr.mxu0 0.0
        %2789 = vmatpush1.msra.mxu0 0.0
        %2790 = vmatprep.subr.mxu0 0.0
        %2791 = vmatpush1.msra.mxu0 0.0
        %2792 = vmatprep.subr.mxu0 0.0
        %2793 = vmatpush1.msra.mxu0 0.0
        %2794 = vmatprep.subr.mxu0 0.0
        %2795 = vmatpush1.msra.mxu0 0.0
        %2796 = vmatprep.subr.mxu0 0.0
        %2797 = vmatpush1.msra.mxu0 0.0
        %2798 = vmatprep.subr.mxu0 0.0
        %2799 = vmatpush1.msra.mxu0 0.0
        %2800 = vmatprep.subr.mxu0 0.0
        %2801 = vmatpush1.msra.mxu0 0.0
        %2802 = vmatprep.subr.mxu0 0.0
        %2803 = vmatpush1.msra.mxu0 0.0
        %2804 = vmatprep.subr.mxu0 0.0
        %2805 = vmatpush1.msra.mxu0 0.0
        %2806 = vmatprep.subr.mxu0 0.0
        %2807 = vmatpush1.msra.mxu0 0.0
        %2808 = vmatprep.mubr.f32.mxu0 0.0
        %2809 = vmatmul.mubr.f32.gmra.mrb[0].mxu0 %v2223
        %v2810 = vpop.f32.mrb[0].mxu0
        %v2811 = vadd.f32 0.0, %v2810
        %v2812 = vpop.f32.mrb[0].mxu0
        %2813 = vdwg.mxu0
        %v2814 = vld [vmem:[#allocation5] sm:$0xff]
        %2816 = vset.pattern.permute.xlu0 0
        %2817 = vperm.xlu0 %2816, %v2180
        %v2818 = vpop.permute.xlu0 %2817
        %v2820 = vmul.f32 %v2818, %v2814
        %v2829 = vrot.slane %v2391, 7
        %v2830 = vsel %vm2148, %v2829, %v2321
        %v2831 = vrot.slane %v2461, 6
        %v2832 = vsel %vm2151, %v2831, %v2830
        %v2833 = vrot.slane %v2531, 5
        %v2834 = vsel %vm2154, %v2833, %v2832
        %v2835 = vrot.slane %v2601, 4
        %v2836 = vsel %vm2157, %v2835, %v2834
        %v2837 = vrot.slane %v2671, 3
        %v2838 = vsel %vm2160, %v2837, %v2836
        %v2839 = vrot.slane %v2741, 2
        %v2840 = vsel %vm2163, %v2839, %v2838
        %v2841 = vrot.slane %v2811, 1
        %v2842 = vsel %vm2166, %v2841, %v2840
        %v2844 = vadd.f32 %v2820, %v2842
        %2845 = vst [vmem:[#allocation5] sm:$0xff] %v2844
        %2846 = vst.msk [vmem:[#allocation3] sm:$0xff] %vm2252, %v2177
        %p2847 = scmp.eq.s32.totalorder %s37, 1
        // Predicated region
        $region65: #{tpu_custom_call.1} parent=39 // pred_check
          %p2848 = pneg %p2847
        $region66: #{tpu_custom_call.1} parent=39 // pred_check_branch
          %2850 = sbr.rel (%p2848) target = $region68
        $region67: #{tpu_custom_call.1} parent=39 // pred_region
          %v2851 = vld [vmem:[#allocation4] sm:$0xff]
          %v2852 = vrcp.pop %v2851
          %v2853 = vmul.f32 1.0, %v2852
          %v2854 = vld [vmem:[%s434] sm:$0xff]
          %v2855 = vld [vmem:[%s434 + $0x8] sm:$0xff]
          %v2856 = vld [vmem:[#allocation3] sm:$0xff]
          %2858 = vset.pattern.permute.xlu0 0
          %2859 = vperm.xlu0 %2858, %v2856
          %v2860 = vpop.permute.xlu0 %2859
          %v2862 = vsub.f32 %v2854, %v2860
          %v2863 = vsub.f32 %v2855, %v2860
          %v2864 = vmul.f32 %v2862, 1.442695
          %v2865 = vpow.pop %v2864
          %v2866 = vmul.f32 %v2863, 1.442695
          %v2867 = vpow.pop %v2866
          %2869 = vset.pattern.permute.xlu0 0
          %2870 = vperm.xlu0 %2869, %v2853
          %v2871 = vpop.permute.xlu0 %2870
          %v2873 = vmul.f32 %v2865, %v2871
          %v2874 = vmul.f32 %v2867, %v2871
          %2875 = vst [vmem:[%s434] sm:$0xff] %v2873
          %2876 = vst [vmem:[%s434 + $0x8] sm:$0xff] %v2874
          %v2877 = vld [vmem:[#allocation5] sm:$0xff]
          %v2878 = vmul.f32 %v2877, %v2871
          %2879 = vst [vmem:[%s427] sm:$0xff] %v2878
          %v2880 = vld [vmem:[%s368] sm:$0xff]
          %v2881 = vld [vmem:[#allocation14] sm:$0xff]
          %v2882 = vld [vmem:[#allocation14 + $0x8] sm:$0xff]
          %v2883 = vld [vmem:[#allocation14 + $0x10] sm:$0xff]
          %v2884 = vld [vmem:[#allocation14 + $0x18] sm:$0xff]
          %v2885 = vld [vmem:[#allocation14 + $0x20] sm:$0xff]
          %v2886 = vld [vmem:[#allocation14 + $0x28] sm:$0xff]
          %v2887 = vld [vmem:[#allocation14 + $0x30] sm:$0xff]
          %v2888 = vld [vmem:[#allocation14 + $0x38] sm:$0xff]
          %v2889 = vld [vmem:[#allocation14 + $0x40] sm:$0xff]
          %v2890 = vld [vmem:[#allocation14 + $0x48] sm:$0xff]
          %v2891 = vld [vmem:[#allocation14 + $0x50] sm:$0xff]
          %v2892 = vld [vmem:[#allocation14 + $0x58] sm:$0xff]
          %v2893 = vld [vmem:[#allocation14 + $0x60] sm:$0xff]
          %v2894 = vld [vmem:[#allocation14 + $0x68] sm:$0xff]
          %v2895 = vld [vmem:[#allocation14 + $0x70] sm:$0xff]
          %v2896 = vld [vmem:[#allocation14 + $0x78] sm:$0xff]
          %v2897 = vld [vmem:[#allocation14 + $0x80] sm:$0xff]
          %v2898 = vld [vmem:[#allocation14 + $0x88] sm:$0xff]
          %v2899 = vld [vmem:[#allocation14 + $0x90] sm:$0xff]
          %v2900 = vld [vmem:[#allocation14 + $0x98] sm:$0xff]
          %v2901 = vld [vmem:[#allocation14 + $0xa0] sm:$0xff]
          %v2902 = vld [vmem:[#allocation14 + $0xa8] sm:$0xff]
          %v2903 = vld [vmem:[#allocation14 + $0xb0] sm:$0xff]
          %v2904 = vld [vmem:[#allocation14 + $0xb8] sm:$0xff]
          %v2905 = vld [vmem:[#allocation14 + $0xc0] sm:$0xff]
          %v2906 = vld [vmem:[#allocation14 + $0xc8] sm:$0xff]
          %v2907 = vld [vmem:[#allocation14 + $0xd0] sm:$0xff]
          %v2908 = vld [vmem:[#allocation14 + $0xd8] sm:$0xff]
          %v2909 = vld [vmem:[#allocation14 + $0xe0] sm:$0xff]
          %v2910 = vld [vmem:[#allocation14 + $0xe8] sm:$0xff]
          %v2911 = vld [vmem:[#allocation14 + $0xf0] sm:$0xff]
          %v2912 = vld [vmem:[#allocation14 + $0xf8] sm:$0xff]
          %2913 = vmatprep.subr.mxu0 0.0
          %2914 = vmatpush1.msra.mxu0 %v2881
          %2915 = vmatprep.subr.mxu0 0.0
          %2916 = vmatpush1.msra.mxu0 %v2882
          %2917 = vmatprep.subr.mxu0 0.0
          %2918 = vmatpush1.msra.mxu0 %v2883
          %2919 = vmatprep.subr.mxu0 0.0
          %2920 = vmatpush1.msra.mxu0 %v2884
          %2921 = vmatprep.subr.mxu0 0.0
          %2922 = vmatpush1.msra.mxu0 %v2885
          %2923 = vmatprep.subr.mxu0 0.0
          %2924 = vmatpush1.msra.mxu0 %v2886
          %2925 = vmatprep.subr.mxu0 0.0
          %2926 = vmatpush1.msra.mxu0 %v2887
          %2927 = vmatprep.subr.mxu0 0.0
          %2928 = vmatpush1.msra.mxu0 %v2888
          %2929 = vmatprep.subr.mxu0 0.0
          %2930 = vmatpush1.msra.mxu0 %v2889
          %2931 = vmatprep.subr.mxu0 0.0
          %2932 = vmatpush1.msra.mxu0 %v2890
          %2933 = vmatprep.subr.mxu0 0.0
          %2934 = vmatpush1.msra.mxu0 %v2891
          %2935 = vmatprep.subr.mxu0 0.0
          %2936 = vmatpush1.msra.mxu0 %v2892
          %2937 = vmatprep.subr.mxu0 0.0
          %2938 = vmatpush1.msra.mxu0 %v2893
          %2939 = vmatprep.subr.mxu0 0.0
          %2940 = vmatpush1.msra.mxu0 %v2894
          %2941 = vmatprep.subr.mxu0 0.0
          %2942 = vmatpush1.msra.mxu0 %v2895
          %2943 = vmatprep.subr.mxu0 0.0
          %2944 = vmatpush1.msra.mxu0 %v2896
          %2945 = vmatprep.subr.mxu0 0.0
          %2946 = vmatpush1.msra.mxu0 %v2897
          %2947 = vmatprep.subr.mxu0 0.0
          %2948 = vmatpush1.msra.mxu0 %v2898
          %2949 = vmatprep.subr.mxu0 0.0
          %2950 = vmatpush1.msra.mxu0 %v2899
          %2951 = vmatprep.subr.mxu0 0.0
          %2952 = vmatpush1.msra.mxu0 %v2900
          %2953 = vmatprep.subr.mxu0 0.0
          %2954 = vmatpush1.msra.mxu0 %v2901
          %2955 = vmatprep.subr.mxu0 0.0
          %2956 = vmatpush1.msra.mxu0 %v2902
          %2957 = vmatprep.subr.mxu0 0.0
          %2958 = vmatpush1.msra.mxu0 %v2903
          %2959 = vmatprep.subr.mxu0 0.0
          %2960 = vmatpush1.msra.mxu0 %v2904
          %2961 = vmatprep.subr.mxu0 0.0
          %2962 = vmatpush1.msra.mxu0 %v2905
          %2963 = vmatprep.subr.mxu0 0.0
          %2964 = vmatpush1.msra.mxu0 %v2906
          %2965 = vmatprep.subr.mxu0 0.0
          %2966 = vmatpush1.msra.mxu0 %v2907
          %2967 = vmatprep.subr.mxu0 0.0
          %2968 = vmatpush1.msra.mxu0 %v2908
          %2969 = vmatprep.subr.mxu0 0.0
          %2970 = vmatpush1.msra.mxu0 %v2909
          %2971 = vmatprep.subr.mxu0 0.0
          %2972 = vmatpush1.msra.mxu0 %v2910
          %2973 = vmatprep.subr.mxu0 0.0
          %2974 = vmatpush1.msra.mxu0 %v2911
          %2975 = vmatprep.subr.mxu0 0.0
          %2976 = vmatpush1.msra.mxu0 %v2912
          %2977 = vmatprep.mubr.f32.mxu0 %v2880
          %2978 = vmatmul.mubr.f32.gmra.mrb[0].mxu0 %v2878
          %v2979 = vpop.f32.mrb[0].mxu0
          %v2980 = vadd.f32 0.0, %v2979
          %v2981 = vpop.f32.mrb[0].mxu0
          %2982 = vdwg.mxu0
          %v2983 = vtanh.pop %v2980
          %2984 = vst [vmem:[%s420] sm:$0xff] %v2983
        $region68: #{tpu_custom_call.1} parent=39 // pred_fallthru
          _
        %s2985 = sand.u32 %s169, 1
        %s2986 = scalar_lea.sflag [#allocation8], %s2985
        %s2987 = sand.u32 %s169, 1
        %s2988 = smul.addr %s2987, 8
        %s2989 = scalar_lea.vmem [#allocation15], %s2988
        %s2990 = sand.u32 %s32, 1
        %s2991 = scalar_lea.sflag [#allocation17], %s2990
        %s2992 = sand.u32 %s195, 1
        %s2993 = smul.addr %s2992, 8
        %s2994 = scalar_lea.vmem [#allocation16], %s2993
        %s2995 = sand.u32 %s32, 1
        %s2996 = scalar_lea.sflag [#allocation17], %s2995
        %s2997 = sand.u32 %s221, 1
        %s2998 = smul.addr %s2997, 16
        %s2999 = scalar_lea.vmem [#allocation18], %s2998
        // Predicated region
        $region69: #{tpu_custom_call.1} parent=39 // pred_check
          %p3000 = pneg %p179
        $region70: #{tpu_custom_call.1} parent=39 // pred_check_branch
          %3002 = sbr.rel (%p3000) target = $region72
        $region71: #{tpu_custom_call.1} parent=39 // pred_region
          %s3004 = ssub.s32 128, 128
          %3005 = vsyncadd %s2986, %s3004
          %s3006 = smul.addr %s36, 128
          %s3007 = scalar_lea.hbm %s5, %s3006
          %s3009 = sshll.u32 %s2989, 4
          %s3010 = int_to_ptr.vmem [resolvable:$true] %s3009
          %3012 = dma.vmem_to_hbm [thread:$0]  %s3010, 128, %s3007, %s2986
        $region72: #{tpu_custom_call.1} parent=39 // pred_fallthru
          _
        // Predicated region
        $region73: #{tpu_custom_call.1} parent=39 // pred_check
          %p3013 = pneg %p205
        $region74: #{tpu_custom_call.1} parent=39 // pred_check_branch
          %3015 = sbr.rel (%p3013) target = $region76
        $region75: #{tpu_custom_call.1} parent=39 // pred_region
          %s3017 = ssub.s32 128, 128
          %3018 = vsyncadd %s2991, %s3017
          %s3019 = smul.addr %s36, 128
          %s3020 = scalar_lea.hbm %s6, %s3019
          %s3022 = sshll.u32 %s2994, 4
          %s3023 = int_to_ptr.vmem [resolvable:$true] %s3022
          %3025 = dma.vmem_to_hbm [thread:$0]  %s3023, 128, %s3020, %s2991
        $region76: #{tpu_custom_call.1} parent=39 // pred_fallthru
          _
        // Predicated region
        $region77: #{tpu_custom_call.1} parent=39 // pred_check
          %p3026 = pneg %p231
        $region78: #{tpu_custom_call.1} parent=39 // pred_check_branch
          %3028 = sbr.rel (%p3026) target = $region80
        $region79: #{tpu_custom_call.1} parent=39 // pred_region
          %s3030 = ssub.s32 256, 256
          %3031 = vsyncadd %s2996, %s3030
          %s3032 = smul.addr %s36, 2
          %s3033 = smul.addr %s3032, 128
          %s3034 = scalar_lea.hbm %s7, %s3033
          %s3036 = sshll.u32 %s2999, 4
          %s3037 = int_to_ptr.vmem [resolvable:$true] %s3036
          %3039 = dma.vmem_to_hbm [thread:$0]  %s3037, 256, %s3034, %s2996
        $region80: #{tpu_custom_call.1} parent=39 // pred_fallthru
          _
      $region40: #{tpu_custom_call.1} parent=5 // pred_fallthru
        _
      %p3040 = scmp.le.s32.totalorder 2, %s27
      // Predicated region
      $region81: #{tpu_custom_call.1} parent=5 // pred_check
        %p3041 = pneg %p3040
      $region82: #{tpu_custom_call.1} parent=5 // pred_check_branch
        %3043 = sbr.rel (%p3041) target = $region84
      $region83: #{tpu_custom_call.1} parent=5 // pred_region
        %s3044 = ssub.s32 %s27, 2
        // Predicated region
        $region85: #{tpu_custom_call.1} parent=83 // pred_check
          %p3045 = pneg %p185
        $region86: #{tpu_custom_call.1} parent=83 // pred_check_branch
          %3047 = sbr.rel (%p3045) target = $region88
        $region87: #{tpu_custom_call.1} parent=83 // pred_region
          %s3048 = sand.u32 %s170, 1
          %s3049 = scalar_lea.sflag [#allocation8], %s3048
          %s3050 = sand.u32 %s170, 1
          %s3051 = smul.addr %s3050, 8
          %s3052 = scalar_lea.vmem [#allocation15], %s3051
          %3053 = dma.done %s3049, 128
        $region88: #{tpu_custom_call.1} parent=83 // pred_fallthru
          _
        // Predicated region
        $region89: #{tpu_custom_call.1} parent=83 // pred_check
          %p3054 = pneg %p211
        $region90: #{tpu_custom_call.1} parent=83 // pred_check_branch
          %3056 = sbr.rel (%p3054) target = $region92
        $region91: #{tpu_custom_call.1} parent=83 // pred_region
          %s3057 = sand.u32 %s33, 1
          %s3058 = scalar_lea.sflag [#allocation17], %s3057
          %s3059 = sand.u32 %s196, 1
          %s3060 = smul.addr %s3059, 8
          %s3061 = scalar_lea.vmem [#allocation16], %s3060
          %3062 = dma.done %s3058, 128
        $region92: #{tpu_custom_call.1} parent=83 // pred_fallthru
          _
        // Predicated region
        $region93: #{tpu_custom_call.1} parent=83 // pred_check
          %p3063 = pneg %p237
        $region94: #{tpu_custom_call.1} parent=83 // pred_check_branch
          %3065 = sbr.rel (%p3063) target = $region96
        $region95: #{tpu_custom_call.1} parent=83 // pred_region
          %s3066 = sand.u32 %s33, 1
          %s3067 = scalar_lea.sflag [#allocation17], %s3066
          %s3068 = sand.u32 %s222, 1
          %s3069 = smul.addr %s3068, 16
          %s3070 = scalar_lea.vmem [#allocation18], %s3069
          %3071 = dma.done %s3067, 256
        $region96: #{tpu_custom_call.1} parent=83 // pred_fallthru
          _
      $region84: #{tpu_custom_call.1} parent=5 // pred_fallthru
        _
    $region6: #{tpu_custom_call.1} parent=1 // loop_footer
      %s31 = sadd.s32 1, %s27
    $region7: #{tpu_custom_call.1} parent=1 // loop_footer_branch
      %26 = sbr.rel target = $region3
    $region8: #{tpu_custom_call.1} parent=1 // loop_exit
      _
    %3072 = vsyncpa [#allocation7], 1
    %s3073 = scalar_lea.sflag [#allocation7], 1
    %3074 = vsyncpa %s3073, 1
    %3075 = vsyncpa [#allocation10], 1
    %s3076 = scalar_lea.sflag [#allocation10], 1
    %3077 = vsyncpa %s3076, 1
    %3078 = vsyncpa [#allocation13], 1
    %3079 = vsyncpa [#allocation8], 1
    %s3080 = scalar_lea.sflag [#allocation8], 1
    %3081 = vsyncpa %s3080, 1
    %3082 = vsyncpa [#allocation17], 1
    %s3083 = scalar_lea.sflag [#allocation17], 1
    %3084 = vsyncpa %s3083, 1

</llo_original>
